<compile_context>
chip_gen: v7x
topology: tpu7x:2x2x1
jax: 0.10.0
libtpu: 0.0.40
codegen_flags: <defaults>
</compile_context>

<pallas_src>
import math
import functools

import jax
import jax.numpy as jnp
from jax.experimental import pallas as pl
from jax.experimental.pallas import tpu as pltpu


# --------------------------------------------------------------------------
# hardware-aware sizing helpers
# --------------------------------------------------------------------------

def _vmem_capacity_bytes():
    try:
        return int(pltpu.get_tpu_info().vmem_capacity_bytes)
    except Exception:
        return 128 * 1024 * 1024


_VMEM_CAP = _vmem_capacity_bytes()
# v5e/v6e: 128 MiB VMEM -> bigger row tiles get closer to the HBM roofline.
# v7x: 64 MiB -> keep 256-row tiles.
_ROW_TILE_TARGET = 512 if _VMEM_CAP >= 100 * 1024 * 1024 else 256
_VMEM_LIMIT = min(64 * 1024 * 1024, int(0.75 * _VMEM_CAP))


def _row_tile(m, target=None):
    """Largest row tile <= target that divides m and is a multiple of 8."""
    target = _ROW_TILE_TARGET if target is None else target
    if m <= target:
        return m
    for t in range(target, 7, -1):
        if m % t == 0 and t % 8 == 0:
            return t
    return m  # awkward M: single full-extent tile (valid BlockSpec)


def _col_chunk(n, target=512):
    """Largest multiple-of-128 divisor of n that is <= target, else n."""
    if n <= target:
        return n
    for t in range(target, 127, -1):
        if n % t == 0 and t % 128 == 0:
            return t
    return n


def _cparams(dims):
    return pltpu.CompilerParams(dimension_semantics=dims,
                                vmem_limit_bytes=_VMEM_LIMIT)


def _resident_spec(block_shape, buffered):
    """BlockSpec for a grid-invariant weight/bias operand.

    With buffered=True the block is single-buffered (pl.Buffered(1)) so
    resident weights do not pay for a useless second DMA buffer.
    """
    nd = len(block_shape)
    index_map = lambda *_: (0,) * nd
    if buffered:
        return pl.BlockSpec(block_shape, index_map,
                            pipeline_mode=pl.Buffered(1))
    return pl.BlockSpec(block_shape, index_map)


# --------------------------------------------------------------------------
# kernel 1: fused QKV projection  (x -> q, k, v in bf16, q pre-scaled)
# --------------------------------------------------------------------------

def _qkv_proj_kernel(x_ref, w_ref, b_ref, q_ref, k_ref, v_ref, *, d_model, scale):
    # x: (TM, E) f32, w: (E, 3E) bf16, b: (1, 3E) f32 -> q/k/v: (TM, E) bf16
    x = x_ref[...].astype(jnp.bfloat16)
    y = jnp.dot(x, w_ref[...], preferred_element_type=jnp.float32) + b_ref[...]
    e = d_model
    # 1/sqrt(Dh) folded into q here (cheaper than scaling the (S, S) scores).
    q_ref[...] = (y[:, :e] * scale).astype(jnp.bfloat16)
    k_ref[...] = y[:, e:2 * e].astype(jnp.bfloat16)
    v_ref[...] = y[:, 2 * e:].astype(jnp.bfloat16)


def qkv_proj(x_flat, w_qkv, b_qkv, scale, buffered=True):
    m, e = x_flat.shape
    n3 = w_qkv.shape[1]
    tm = _row_tile(m)
    kern = functools.partial(_qkv_proj_kernel, d_model=e, scale=scale)
    row_spec = pl.BlockSpec((tm, e), lambda i: (i, 0))
    out = jax.ShapeDtypeStruct((m, e), jnp.bfloat16)
    return pl.pallas_call(
        kern,
        out_shape=(out, out, out),
        grid=(m // tm,),
        in_specs=[
            pl.BlockSpec((tm, e), lambda i: (i, 0)),
            _resident_spec((e, n3), buffered),
            _resident_spec((1, n3), buffered),
        ],
        out_specs=(row_spec, row_spec, row_spec),
        compiler_params=_cparams(("parallel",)),
    )(x_flat, w_qkv, b_qkv.reshape(1, n3))


# --------------------------------------------------------------------------
# kernel 2: attention (all heads, batched) + out_proj + residual + LayerNorm
# --------------------------------------------------------------------------

def _attn_proj_ln_kernel(x_ref, q_ref, k_ref, v_ref, wo_ref, bo_ref, g_ref,
                         beta_ref, o_ref, *, eps):
    # One batch element per grid step; all heads handled by batched matmuls.
    q = q_ref[0]                     # (H, S, Dh) bf16, already scaled
    k = k_ref[0]
    v = v_ref[0]

    # scores / softmax in f32
    s = jnp.einsum("hqd,hkd->hqk", q, k, preferred_element_type=jnp.float32)
    s = s - jnp.max(s, axis=-1, keepdims=True)
    p = jnp.exp(s)
    p = p * pl.reciprocal(jnp.sum(p, axis=-1, keepdims=True), approx=True)

    ctx = jnp.einsum("hqk,hkd->hqd", p.astype(jnp.bfloat16), v,
                     preferred_element_type=jnp.float32)       # (H, S, Dh)

    # fused out_proj: per-head (Dh, E) slabs of W_o, summed over heads.
    proj = jnp.einsum("hqd,hde->hqe", ctx.astype(jnp.bfloat16), wo_ref[...],
                      preferred_element_type=jnp.float32)      # (H, S, E)
    proj = jnp.sum(proj, axis=0) + bo_ref[...]                 # (S, E)

    # residual + LayerNorm (dropout = identity), all in f32.
    z = x_ref[...] + proj
    mu = jnp.mean(z, axis=-1, keepdims=True)
    var = jnp.mean((z - mu) * (z - mu), axis=-1, keepdims=True)
    o_ref[...] = (z - mu) * jax.lax.rsqrt(var + eps) * g_ref[...] + beta_ref[...]


def attn_proj_ln(x_flat, q, k, v, w_o3, b_o, gamma, beta, eps=1e-5, buffered=True):
    b_sz, n_heads, s, dh = q.shape
    m, e = x_flat.shape
    assert s % 8 == 0 or b_sz == 1, "sequence length must be a multiple of 8"
    kern = functools.partial(_attn_proj_ln_kernel, eps=eps)
    qkv_spec = pl.BlockSpec((1, n_heads, s, dh), lambda b: (b, 0, 0, 0))
    row_spec = pl.BlockSpec((s, e), lambda b: (b, 0))
    return pl.pallas_call(
        kern,
        out_shape=jax.ShapeDtypeStruct((m, e), jnp.float32),
        grid=(b_sz,),
        in_specs=[
            row_spec,                                   # residual x
            qkv_spec, qkv_spec, qkv_spec,               # q, k, v (bf16)
            _resident_spec((n_heads, dh, e), buffered),  # W_o as (H, Dh, E)
            _resident_spec((1, e), buffered),
            _resident_spec((1, e), buffered),
            _resident_spec((1, e), buffered),
        ],
        out_specs=row_spec,
        compiler_params=_cparams(("parallel",)),
    )(x_flat, q, k, v, w_o3, b_o.reshape(1, e), gamma.reshape(1, e),
      beta.reshape(1, e))


# --------------------------------------------------------------------------
# kernel 3: MLP (hidden dim streamed in chunks) + residual + LayerNorm
# --------------------------------------------------------------------------

def _mlp_add_ln_kernel(x_ref, w1_ref, b1_ref, w2_ref, b2_ref, g_ref, beta_ref,
                       o_ref, acc_ref, *, eps):
    h = pl.program_id(1)

    @pl.when(h == 0)
    def _():
        acc_ref[...] = jnp.zeros_like(acc_ref)

    xb = x_ref[...].astype(jnp.bfloat16)
    hid = jnp.dot(xb, w1_ref[...], preferred_element_type=jnp.float32) + b1_ref[...]
    hid = jnp.maximum(hid, 0.0)
    acc_ref[...] += jnp.dot(hid.astype(jnp.bfloat16), w2_ref[...],
                            preferred_element_type=jnp.float32)

    @pl.when(h == pl.num_programs(1) - 1)
    def _():
        z = x_ref[...] + acc_ref[...] + b2_ref[...]
        mu = jnp.mean(z, axis=-1, keepdims=True)
        var = jnp.mean((z - mu) * (z - mu), axis=-1, keepdims=True)
        o_ref[...] = (z - mu) * jax.lax.rsqrt(var + eps) * g_ref[...] + beta_ref[...]


def mlp_add_ln(x_flat, w1, b1, w2, b2, gamma, beta, eps=1e-5, buffered=True):
    m, e = x_flat.shape
    hdim = w1.shape[1]
    tm = _row_tile(m)
    th = _col_chunk(hdim)
    kern = functools.partial(_mlp_add_ln_kernel, eps=eps)
    return pl.pallas_call(
        kern,
        out_shape=jax.ShapeDtypeStruct((m, e), jnp.float32),
        grid=(m // tm, hdim // th),
        in_specs=[
            pl.BlockSpec((tm, e), lambda i, h: (i, 0)),
            pl.BlockSpec((e, th), lambda i, h: (0, h)),   # stream fc1 weight
            pl.BlockSpec((1, th), lambda i, h: (0, h)),
            pl.BlockSpec((th, e), lambda i, h: (h, 0)),   # stream fc2 weight
            _resident_spec((1, e), buffered),
            _resident_spec((1, e), buffered),
            _resident_spec((1, e), buffered),
        ],
        out_specs=pl.BlockSpec((tm, e), lambda i, h: (i, 0)),
        scratch_shapes=[pltpu.VMEM((tm, e), jnp.float32)],
        compiler_params=_cparams(("parallel", "arbitrary")),
    )(x_flat, w1, b1.reshape(1, hdim), w2, b2.reshape(1, e),
      gamma.reshape(1, e), beta.reshape(1, e))


# --------------------------------------------------------------------------
# EncoderBlock forward (wrapper glue: free reshapes + head-major transpose)
# --------------------------------------------------------------------------

def encoder_block_forward(params, x, n_heads, buffered_weights=True):
    b, s, e = x.shape
    dh = e // n_heads
    m = b * s
    x_flat = x.reshape(m, e)
    scale = 1.0 / math.sqrt(dh)

    # Fused QKV projection -> three bf16 (M, E) tensors, q pre-scaled.
    q, k, v = qkv_proj(x_flat, params["w_qkv"], params["b_qkv"], scale,
                       buffered=buffered_weights)

    # Head-major layout for batched per-head matmuls (layout plumbing done in
    # XLA so the attention kernel needs no in-kernel reshapes / lane slicing).
    def to_heads(t):
        return t.reshape(b, s, n_heads, dh).transpose(0, 2, 1, 3)

    q, k, v = to_heads(q), to_heads(k), to_heads(v)

    # Attention + out_proj + residual + LayerNorm, fused.
    w_o3 = params["w_o"].reshape(n_heads, dh, e)   # free leading-dim split
    x1 = attn_proj_ln(x_flat, q, k, v, w_o3, params["b_o"],
                      params["ln1_g"], params["ln1_b"],
                      buffered=buffered_weights)

    # MLP (hidden dim chunked) + residual + LayerNorm, fused.
    x2 = mlp_add_ln(x1, params["w1"], params["b1"], params["w2"], params["b2"],
                    params["ln2_g"], params["ln2_b"],
                    buffered=buffered_weights)
    return x2.reshape(b, s, e)


def init_params(key, d_model, d_hidden):
    def nrm(k, shape, scale=0.02):
        return (scale * jax.random.normal(k, shape)).astype(jnp.float32)

    ks = jax.random.split(key, 4)
    return {
        # fused QKV weight (E, 3E) == in_proj_weight.T of nn.MultiheadAttention
        "w_qkv": nrm(ks[0], (d_model, 3 * d_model)).astype(jnp.bfloat16),
        "b_qkv": jnp.zeros((3 * d_model,), jnp.float32),
        "w_o":   nrm(ks[1], (d_model, d_model)).astype(jnp.bfloat16),
        "b_o":   jnp.zeros((d_model,), jnp.float32),
        "w1":    nrm(ks[2], (d_model, d_hidden)).astype(jnp.bfloat16),
        "b1":    jnp.zeros((d_hidden,), jnp.float32),
        "w2":    nrm(ks[3], (d_hidden, d_model)).astype(jnp.bfloat16),
        "b2":    jnp.zeros((d_model,), jnp.float32),
        "ln1_g": jnp.ones((d_model,), jnp.float32),
        "ln1_b": jnp.zeros((d_model,), jnp.float32),
        "ln2_g": jnp.ones((d_model,), jnp.float32),
        "ln2_b": jnp.zeros((d_model,), jnp.float32),
    }


# --------------------------------------------------------------------------
# pure-JAX reference (f32 math) for a loose numerical check
# --------------------------------------------------------------------------

def reference_forward(params, x, n_heads):
    b, s, e = x.shape
    dh = e // n_heads
    xf = x.reshape(b * s, e).astype(jnp.float32)
    f32 = lambda name: params[name].astype(jnp.float32)

    qkv = xf @ f32("w_qkv") + f32("b_qkv")
    q, k, v = jnp.split(qkv, 3, axis=-1)

    def heads(t):
        return t.reshape(b, s, n_heads, dh).transpose(0, 2, 1, 3)

    q, k, v = heads(q), heads(k), heads(v)
    scores = jnp.einsum("bhqd,bhkd->bhqk", q, k) / math.sqrt(dh)
    p = jax.nn.softmax(scores, axis=-1)
    ctx = jnp.einsum("bhqk,bhkd->bhqd", p, v)
    ctx = ctx.transpose(0, 2, 1, 3).reshape(b * s, e)
    attn = ctx @ f32("w_o") + f32("b_o")

    def layer_norm(z, g, bb):
        mu = z.mean(-1, keepdims=True)
        var = ((z - mu) ** 2).mean(-1, keepdims=True)
        return (z - mu) / jnp.sqrt(var + 1e-5) * g + bb

    x1 = layer_norm(xf + attn, f32("ln1_g"), f32("ln1_b"))
    hdn = jnp.maximum(x1 @ f32("w1") + f32("b1"), 0.0)
    mlp = hdn @ f32("w2") + f32("b2")
    x2 = layer_norm(x1 + mlp, f32("ln2_g"), f32("ln2_b"))
    return x2.reshape(b, s, e)


# --------------------------------------------------------------------------
# main
# --------------------------------------------------------------------------

if __name__ == "__main__":
    d_model, n_heads, d_hidden = 32, 4, 64
    batch, seq = 2, 8

    key = jax.random.PRNGKey(0)
    k_param, k_x = jax.random.split(key)
    params = init_params(k_param, d_model, d_hidden)
    x = jax.random.normal(k_x, (batch, seq, d_model), jnp.float32)

    ref = reference_forward(params, x, n_heads)

    def run(buffered):
        fwd = jax.jit(functools.partial(encoder_block_forward, n_heads=n_heads,
                                        buffered_weights=buffered))
        out = jax.block_until_ready(fwd(params, x))
        assert out.shape == (batch, seq, d_model) and out.dtype == jnp.float32
        err = float(jnp.max(jnp.abs(out - ref)))
        assert err < 1e-1, f"max abs error too large: {err}"
        return out

    try:
        out = run(True)      # single-buffered resident weights (pl.Buffered(1))
    except Exception:
        out = run(False)     # fall back to default double buffering
    print("KERNEL_OK")
</pallas_src>

<mosaic_0001>
module attributes {stable_mosaic.version = 11 : i64} {
  func.func @_qkv_proj_kernel(%arg0: i32, %arg1: memref<16x32xf32, #tpu.memory_space<vmem>>, %arg2: memref<32x96xbf16, #tpu.memory_space<vmem>>, %arg3: memref<1x96xf32, #tpu.memory_space<vmem>>, %arg4: memref<16x32xbf16, #tpu.memory_space<vmem>>, %arg5: memref<16x32xbf16, #tpu.memory_space<vmem>>, %arg6: memref<16x32xbf16, #tpu.memory_space<vmem>>) attributes {dimension_semantics = [#tpu.dimension_semantics<parallel>], iteration_bounds = array<i64: 1>, scalar_prefetch = 0 : i64, scratch_operands = 0 : i64, tpu.core_type = #tpu.core_type<tc>, window_params = [{transform_indices = @transform_0, window_bounds = array<i64: 16, 32>}, {pipeline_mode = #tpu.pipeline_mode<synchronous>, transform_indices = @transform_1, window_bounds = array<i64: 32, 96>}, {pipeline_mode = #tpu.pipeline_mode<synchronous>, transform_indices = @transform_2, window_bounds = array<i64: 1, 96>}, {transform_indices = @transform_3, window_bounds = array<i64: 16, 32>}, {transform_indices = @transform_4, window_bounds = array<i64: 16, 32>}, {transform_indices = @transform_5, window_bounds = array<i64: 16, 32>}]} {
    %c0 = arith.constant 0 : index
    %c0_0 = arith.constant 0 : index
    %0 = vector.load %arg1[%c0, %c0_0] : memref<16x32xf32, #tpu.memory_space<vmem>>, vector<16x32xf32>
    %1 = arith.truncf %0 : vector<16x32xf32> to vector<16x32xbf16>
    %c0_1 = arith.constant 0 : index
    %c0_2 = arith.constant 0 : index
    %2 = vector.load %arg2[%c0_1, %c0_2] : memref<32x96xbf16, #tpu.memory_space<vmem>>, vector<32x96xbf16>
    %cst = arith.constant dense<0.000000e+00> : vector<16x96xf32>
    %3 = tpu.matmul %1, %2, %cst {dimension_numbers = #tpu.dot_dimension_numbers<[1], [0], [0], [1], [0, 0, 1, 1], [], []>} : vector<16x32xbf16>, vector<32x96xbf16>, vector<16x96xf32> -> vector<16x96xf32>
    %c0_3 = arith.constant 0 : index
    %c0_4 = arith.constant 0 : index
    %4 = vector.load %arg3[%c0_3, %c0_4] : memref<1x96xf32, #tpu.memory_space<vmem>>, vector<1x96xf32>
    %5 = vector.broadcast %4 : vector<1x96xf32> to vector<16x96xf32>
    %6 = arith.addf %3, %5 : vector<16x96xf32>
    %7 = vector.extract_strided_slice %6 {offsets = [0, 0], sizes = [16, 32], strides = [1, 1]} : vector<16x96xf32> to vector<16x32xf32>
    %cst_5 = arith.constant 0.353553385 : f32
    %8 = vector.broadcast %cst_5 : f32 to vector<16x32xf32>
    %9 = arith.mulf %7, %8 : vector<16x32xf32>
    %10 = arith.truncf %9 : vector<16x32xf32> to vector<16x32xbf16>
    %c0_6 = arith.constant 0 : index
    %c0_7 = arith.constant 0 : index
    %11 = vector.load %arg4[%c0_6, %c0_7] : memref<16x32xbf16, #tpu.memory_space<vmem>>, vector<16x32xbf16>
    tpu.vector_store %arg4[%c0_6, %c0_7], %10 {strides = array<i32>} : memref<16x32xbf16, #tpu.memory_space<vmem>>, vector<16x32xbf16>,
    %12 = vector.extract_strided_slice %6 {offsets = [0, 32], sizes = [16, 32], strides = [1, 1]} : vector<16x96xf32> to vector<16x32xf32>
    %13 = arith.truncf %12 : vector<16x32xf32> to vector<16x32xbf16>
    %c0_8 = arith.constant 0 : index
    %c0_9 = arith.constant 0 : index
    %14 = vector.load %arg5[%c0_8, %c0_9] : memref<16x32xbf16, #tpu.memory_space<vmem>>, vector<16x32xbf16>
    tpu.vector_store %arg5[%c0_8, %c0_9], %13 {strides = array<i32>} : memref<16x32xbf16, #tpu.memory_space<vmem>>, vector<16x32xbf16>,
    %15 = vector.extract_strided_slice %6 {offsets = [0, 64], sizes = [16, 32], strides = [1, 1]} : vector<16x96xf32> to vector<16x32xf32>
    %16 = arith.truncf %15 : vector<16x32xf32> to vector<16x32xbf16>
    %c0_10 = arith.constant 0 : index
    %c0_11 = arith.constant 0 : index
    %17 = vector.load %arg6[%c0_10, %c0_11] : memref<16x32xbf16, #tpu.memory_space<vmem>>, vector<16x32xbf16>
    tpu.vector_store %arg6[%c0_10, %c0_11], %16 {strides = array<i32>} : memref<16x32xbf16, #tpu.memory_space<vmem>>, vector<16x32xbf16>,
    return
  }
  func.func @transform_0(%arg0: i32) -> (i32, i32) {
    %c0_i32 = arith.constant 0 : i32
    %c0_i32_0 = arith.constant 0 : i32
    return %arg0, %c0_i32 : i32, i32
  }
  func.func @transform_1(%arg0: i32) -> (i32, i32) {
    %c0_i32 = arith.constant 0 : i32
    %c0_i32_0 = arith.constant 0 : i32
    %c0_i32_1 = arith.constant 0 : i32
    return %c0_i32, %c0_i32_0 : i32, i32
  }
  func.func @transform_2(%arg0: i32) -> (i32, i32) {
    %c0_i32 = arith.constant 0 : i32
    %c0_i32_0 = arith.constant 0 : i32
    %c0_i32_1 = arith.constant 0 : i32
    return %c0_i32, %c0_i32_0 : i32, i32
  }
  func.func @transform_3(%arg0: i32) -> (i32, i32) {
    %c0_i32 = arith.constant 0 : i32
    %c0_i32_0 = arith.constant 0 : i32
    return %arg0, %c0_i32 : i32, i32
  }
  func.func @transform_4(%arg0: i32) -> (i32, i32) {
    %c0_i32 = arith.constant 0 : i32
    %c0_i32_0 = arith.constant 0 : i32
    return %arg0, %c0_i32 : i32, i32
  }
  func.func @transform_5(%arg0: i32) -> (i32, i32) {
    %c0_i32 = arith.constant 0 : i32
    %c0_i32_0 = arith.constant 0 : i32
    return %arg0, %c0_i32 : i32, i32
  }
}

module attributes {stable_mosaic.version = 11 : i64} {
  func.func @_mlp_add_ln_kernel(%arg0: i32, %arg1: i32, %arg2: memref<16x32xf32, #tpu.memory_space<vmem>>, %arg3: memref<32x64xbf16, #tpu.memory_space<vmem>>, %arg4: memref<1x64xf32, #tpu.memory_space<vmem>>, %arg5: memref<64x32xbf16, #tpu.memory_space<vmem>>, %arg6: memref<1x32xf32, #tpu.memory_space<vmem>>, %arg7: memref<1x32xf32, #tpu.memory_space<vmem>>, %arg8: memref<1x32xf32, #tpu.memory_space<vmem>>, %arg9: memref<16x32xf32, #tpu.memory_space<vmem>>, %arg10: memref<16x32xf32, #tpu.memory_space<vmem>>) attributes {dimension_semantics = [#tpu.dimension_semantics<parallel>, #tpu.dimension_semantics<arbitrary>], iteration_bounds = array<i64: 1, 1>, scalar_prefetch = 0 : i64, scratch_operands = 1 : i64, tpu.core_type = #tpu.core_type<tc>, window_params = [{transform_indices = @transform_0, window_bounds = array<i64: 16, 32>}, {transform_indices = @transform_1, window_bounds = array<i64: 32, 64>}, {transform_indices = @transform_2, window_bounds = array<i64: 1, 64>}, {transform_indices = @transform_3, window_bounds = array<i64: 64, 32>}, {pipeline_mode = #tpu.pipeline_mode<synchronous>, transform_indices = @transform_4, window_bounds = array<i64: 1, 32>}, {pipeline_mode = #tpu.pipeline_mode<synchronous>, transform_indices = @transform_5, window_bounds = array<i64: 1, 32>}, {pipeline_mode = #tpu.pipeline_mode<synchronous>, transform_indices = @transform_6, window_bounds = array<i64: 1, 32>}, {transform_indices = @transform_7, window_bounds = array<i64: 16, 32>}]} {
    %c0_i32 = arith.constant 0 : i32
    %0 = arith.cmpi eq, %arg1, %c0_i32 : i32
    %1 = arith.extui %0 : i1 to i32
    %c0_i32_0 = arith.constant 0 : i32
    %2 = arith.cmpi ne, %1, %c0_i32_0 : i32
    scf.if %2 {
      %cst_16 = arith.constant 0.000000e+00 : f32
      %21 = vector.broadcast %cst_16 : f32 to vector<16x32xf32>
      %c0_17 = arith.constant 0 : index
      %c0_18 = arith.constant 0 : index
      %22 = vector.load %arg10[%c0_17, %c0_18] : memref<16x32xf32, #tpu.memory_space<vmem>>, vector<16x32xf32>
      tpu.vector_store %arg10[%c0_17, %c0_18], %21 {strides = array<i32>} : memref<16x32xf32, #tpu.memory_space<vmem>>, vector<16x32xf32>,
    } else {
    }
    %c0 = arith.constant 0 : index
    %c0_1 = arith.constant 0 : index
    %3 = vector.load %arg2[%c0, %c0_1] : memref<16x32xf32, #tpu.memory_space<vmem>>, vector<16x32xf32>
    %4 = arith.truncf %3 : vector<16x32xf32> to vector<16x32xbf16>
    %c0_2 = arith.constant 0 : index
    %c0_3 = arith.constant 0 : index
    %5 = vector.load %arg3[%c0_2, %c0_3] : memref<32x64xbf16, #tpu.memory_space<vmem>>, vector<32x64xbf16>
    %cst = arith.constant dense<0.000000e+00> : vector<16x64xf32>
    %6 = tpu.matmul %4, %5, %cst {dimension_numbers = #tpu.dot_dimension_numbers<[1], [0], [0], [1], [0, 0, 1, 1], [], []>} : vector<16x32xbf16>, vector<32x64xbf16>, vector<16x64xf32> -> vector<16x64xf32>
    %c0_4 = arith.constant 0 : index
    %c0_5 = arith.constant 0 : index
    %7 = vector.load %arg4[%c0_4, %c0_5] : memref<1x64xf32, #tpu.memory_space<vmem>>, vector<1x64xf32>
    %8 = vector.broadcast %7 : vector<1x64xf32> to vector<16x64xf32>
    %9 = arith.addf %6, %8 : vector<16x64xf32>
    %cst_6 = arith.constant 0.000000e+00 : f32
    %10 = vector.broadcast %cst_6 : f32 to vector<16x64xf32>
    %11 = arith.maximumf %9, %10 : vector<16x64xf32>
    %c0_7 = arith.constant 0 : index
    %c0_8 = arith.constant 0 : index
    %12 = vector.load %arg10[%c0_7, %c0_8] : memref<16x32xf32, #tpu.memory_space<vmem>>, vector<16x32xf32>
    %13 = arith.truncf %11 : vector<16x64xf32> to vector<16x64xbf16>
    %c0_9 = arith.constant 0 : index
    %c0_10 = arith.constant 0 : index
    %14 = vector.load %arg5[%c0_9, %c0_10] : memref<64x32xbf16, #tpu.memory_space<vmem>>, vector<64x32xbf16>
    %cst_11 = arith.constant dense<0.000000e+00> : vector<16x32xf32>
    %15 = tpu.matmul %13, %14, %cst_11 {dimension_numbers = #tpu.dot_dimension_numbers<[1], [0], [0], [1], [0, 0, 1, 1], [], []>} : vector<16x64xbf16>, vector<64x32xbf16>, vector<16x32xf32> -> vector<16x32xf32>
    %16 = arith.addf %12, %15 : vector<16x32xf32>
    %c0_12 = arith.constant 0 : index
    %c0_13 = arith.constant 0 : index
    %17 = vector.load %arg10[%c0_12, %c0_13] : memref<16x32xf32, #tpu.memory_space<vmem>>, vector<16x32xf32>
    tpu.vector_store %arg10[%c0_12, %c0_13], %16 {strides = array<i32>} : memref<16x32xf32, #tpu.memory_space<vmem>>, vector<16x32xf32>,
    %c0_i32_14 = arith.constant 0 : i32
    %18 = arith.cmpi eq, %arg1, %c0_i32_14 : i32
    %19 = arith.extui %18 : i1 to i32
    %c0_i32_15 = arith.constant 0 : i32
    %20 = arith.cmpi ne, %19, %c0_i32_15 : i32
    scf.if %20 {
      %c0_16 = arith.constant 0 : index
      %c0_17 = arith.constant 0 : index
      %21 = vector.load %arg2[%c0_16, %c0_17] : memref<16x32xf32, #tpu.memory_space<vmem>>, vector<16x32xf32>
      %c0_18 = arith.constant 0 : index
      %c0_19 = arith.constant 0 : index
      %22 = vector.load %arg10[%c0_18, %c0_19] : memref<16x32xf32, #tpu.memory_space<vmem>>, vector<16x32xf32>
      %23 = arith.addf %21, %22 : vector<16x32xf32>
      %c0_20 = arith.constant 0 : index
      %c0_21 = arith.constant 0 : index
      %24 = vector.load %arg6[%c0_20, %c0_21] : memref<1x32xf32, #tpu.memory_space<vmem>>, vector<1x32xf32>
      %25 = vector.broadcast %24 : vector<1x32xf32> to vector<16x32xf32>
      %26 = arith.addf %23, %25 : vector<16x32xf32>
      %cst_22 = arith.constant dense<0.000000e+00> : vector<16xf32>
      %27 = vector.multi_reduction <add>, %26, %cst_22 [1] : vector<16x32xf32> to vector<16xf32>
      %28 = vector.shape_cast %27 : vector<16xf32> to vector<16x1xf32>
      %cst_23 = arith.constant 3.200000e+01 : f32
      %29 = vector.broadcast %cst_23 : f32 to vector<16x1xf32>
      %30 = arith.divf %28, %29 : vector<16x1xf32>
      %31 = vector.broadcast %30 : vector<16x1xf32> to vector<16x32xf32>
      %32 = arith.subf %26, %31 : vector<16x32xf32>
      %33 = vector.broadcast %30 : vector<16x1xf32> to vector<16x32xf32>
      %34 = arith.subf %26, %33 : vector<16x32xf32>
      %35 = arith.mulf %32, %34 : vector<16x32xf32>
      %cst_24 = arith.constant dense<0.000000e+00> : vector<16xf32>
      %36 = vector.multi_reduction <add>, %35, %cst_24 [1] : vector<16x32xf32> to vector<16xf32>
      %37 = vector.shape_cast %36 : vector<16xf32> to vector<16x1xf32>
      %cst_25 = arith.constant 3.200000e+01 : f32
      %38 = vector.broadcast %cst_25 : f32 to vector<16x1xf32>
      %39 = arith.divf %37, %38 : vector<16x1xf32>
      %40 = vector.broadcast %30 : vector<16x1xf32> to vector<16x32xf32>
      %41 = arith.subf %26, %40 : vector<16x32xf32>
      %cst_26 = arith.constant 9.99999974E-6 : f32
      %42 = vector.broadcast %cst_26 : f32 to vector<16x1xf32>
      %43 = arith.addf %39, %42 : vector<16x1xf32>
      %44 = math.rsqrt %43 : vector<16x1xf32>
      %45 = vector.broadcast %44 : vector<16x1xf32> to vector<16x32xf32>
      %46 = arith.mulf %41, %45 : vector<16x32xf32>
      %c0_27 = arith.constant 0 : index
      %c0_28 = arith.constant 0 : index
      %47 = vector.load %arg7[%c0_27, %c0_28] : memref<1x32xf32, #tpu.memory_space<vmem>>, vector<1x32xf32>
      %48 = vector.broadcast %47 : vector<1x32xf32> to vector<16x32xf32>
      %49 = arith.mulf %46, %48 : vector<16x32xf32>
      %c0_29 = arith.constant 0 : index
      %c0_30 = arith.constant 0 : index
      %50 = vector.load %arg8[%c0_29, %c0_30] : memref<1x32xf32, #tpu.memory_space<vmem>>, vector<1x32xf32>
      %51 = vector.broadcast %50 : vector<1x32xf32> to vector<16x32xf32>
      %52 = arith.addf %49, %51 : vector<16x32xf32>
      %c0_31 = arith.constant 0 : index
      %c0_32 = arith.constant 0 : index
      %53 = vector.load %arg9[%c0_31, %c0_32] : memref<16x32xf32, #tpu.memory_space<vmem>>, vector<16x32xf32>
      tpu.vector_store %arg9[%c0_31, %c0_32], %52 {strides = array<i32>} : memref<16x32xf32, #tpu.memory_space<vmem>>, vector<16x32xf32>,
    } else {
    }
    return
  }
  func.func @transform_0(%arg0: i32, %arg1: i32) -> (i32, i32) {
    %c0_i32 = arith.constant 0 : i32
    %c0_i32_0 = arith.constant 0 : i32
    return %arg0, %c0_i32 : i32, i32
  }
  func.func @transform_1(%arg0: i32, %arg1: i32) -> (i32, i32) {
    %c0_i32 = arith.constant 0 : i32
    %c0_i32_0 = arith.constant 0 : i32
    return %c0_i32, %arg1 : i32, i32
  }
  func.func @transform_2(%arg0: i32, %arg1: i32) -> (i32, i32) {
    %c0_i32 = arith.constant 0 : i32
    %c0_i32_0 = arith.constant 0 : i32
    return %c0_i32, %arg1 : i32, i32
  }
  func.func @transform_3(%arg0: i32, %arg1: i32) -> (i32, i32) {
    %c0_i32 = arith.constant 0 : i32
    %c0_i32_0 = arith.constant 0 : i32
    return %arg1, %c0_i32 : i32, i32
  }
  func.func @transform_4(%arg0: i32, %arg1: i32) -> (i32, i32) {
    %c0_i32 = arith.constant 0 : i32
    %c0_i32_0 = arith.constant 0 : i32
    %c0_i32_1 = arith.constant 0 : i32
    return %c0_i32, %c0_i32_0 : i32, i32
  }
  func.func @transform_5(%arg0: i32, %arg1: i32) -> (i32, i32) {
    %c0_i32 = arith.constant 0 : i32
    %c0_i32_0 = arith.constant 0 : i32
    %c0_i32_1 = arith.constant 0 : i32
    return %c0_i32, %c0_i32_0 : i32, i32
  }
  func.func @transform_6(%arg0: i32, %arg1: i32) -> (i32, i32) {
    %c0_i32 = arith.constant 0 : i32
    %c0_i32_0 = arith.constant 0 : i32
    %c0_i32_1 = arith.constant 0 : i32
    return %c0_i32, %c0_i32_0 : i32, i32
  }
  func.func @transform_7(%arg0: i32, %arg1: i32) -> (i32, i32) {
    %c0_i32 = arith.constant 0 : i32
    %c0_i32_0 = arith.constant 0 : i32
    return %arg0, %c0_i32 : i32, i32
  }
}

module attributes {stable_mosaic.version = 11 : i64} {
  func.func @_attn_proj_ln_kernel(%arg0: i32, %arg1: memref<8x32xf32, #tpu.memory_space<vmem>>, %arg2: memref<1x4x8x8xbf16, #tpu.memory_space<vmem>>, %arg3: memref<1x4x8x8xbf16, #tpu.memory_space<vmem>>, %arg4: memref<1x4x8x8xbf16, #tpu.memory_space<vmem>>, %arg5: memref<4x8x32xbf16, #tpu.memory_space<vmem>>, %arg6: memref<1x32xf32, #tpu.memory_space<vmem>>, %arg7: memref<1x32xf32, #tpu.memory_space<vmem>>, %arg8: memref<1x32xf32, #tpu.memory_space<vmem>>, %arg9: memref<8x32xf32, #tpu.memory_space<vmem>>) attributes {dimension_semantics = [#tpu.dimension_semantics<parallel>], iteration_bounds = array<i64: 2>, scalar_prefetch = 0 : i64, scratch_operands = 0 : i64, tpu.core_type = #tpu.core_type<tc>, window_params = [{transform_indices = @transform_0, window_bounds = array<i64: 8, 32>}, {transform_indices = @transform_1, window_bounds = array<i64: 1, 4, 8, 8>}, {transform_indices = @transform_2, window_bounds = array<i64: 1, 4, 8, 8>}, {transform_indices = @transform_3, window_bounds = array<i64: 1, 4, 8, 8>}, {pipeline_mode = #tpu.pipeline_mode<synchronous>, transform_indices = @transform_4, window_bounds = array<i64: 4, 8, 32>}, {pipeline_mode = #tpu.pipeline_mode<synchronous>, transform_indices = @transform_5, window_bounds = array<i64: 1, 32>}, {pipeline_mode = #tpu.pipeline_mode<synchronous>, transform_indices = @transform_6, window_bounds = array<i64: 1, 32>}, {pipeline_mode = #tpu.pipeline_mode<synchronous>, transform_indices = @transform_7, window_bounds = array<i64: 1, 32>}, {transform_indices = @transform_8, window_bounds = array<i64: 8, 32>}]} {
    %c0 = arith.constant 0 : index
    %c0_0 = arith.constant 0 : index
    %c0_1 = arith.constant 0 : index
    %c0_2 = arith.constant 0 : index
    %0 = vector.load %arg2[%c0, %c0_0, %c0_1, %c0_2] : memref<1x4x8x8xbf16, #tpu.memory_space<vmem>>, vector<1x4x8x8xbf16>
    %1 = vector.shape_cast %0 : vector<1x4x8x8xbf16> to vector<4x8x8xbf16>
    %c0_3 = arith.constant 0 : index
    %c0_4 = arith.constant 0 : index
    %c0_5 = arith.constant 0 : index
    %c0_6 = arith.constant 0 : index
    %2 = vector.load %arg3[%c0_3, %c0_4, %c0_5, %c0_6] : memref<1x4x8x8xbf16, #tpu.memory_space<vmem>>, vector<1x4x8x8xbf16>
    %3 = vector.shape_cast %2 : vector<1x4x8x8xbf16> to vector<4x8x8xbf16>
    %c0_7 = arith.constant 0 : index
    %c0_8 = arith.constant 0 : index
    %c0_9 = arith.constant 0 : index
    %c0_10 = arith.constant 0 : index
    %4 = vector.load %arg4[%c0_7, %c0_8, %c0_9, %c0_10] : memref<1x4x8x8xbf16, #tpu.memory_space<vmem>>, vector<1x4x8x8xbf16>
    %5 = vector.shape_cast %4 : vector<1x4x8x8xbf16> to vector<4x8x8xbf16>
    "tpu.trace_start"() <{level = 10 : i32, message = "hqd,hkd->hqk"}> : () -> ()
    %cst = arith.constant dense<0.000000e+00> : vector<4x8x8xf32>
    %6 = tpu.matmul %1, %3, %cst {dimension_numbers = #tpu.dot_dimension_numbers<[2], [2], [1], [1], [0, 0, 0, 1, 1, 1], [0], [0]>} : vector<4x8x8xbf16>, vector<4x8x8xbf16>, vector<4x8x8xf32> -> vector<4x8x8xf32>
    "tpu.trace_stop"() : () -> ()
    %cst_11 = arith.constant dense<0xFF800000> : vector<4x8xf32>
    %7 = vector.multi_reduction <maximumf>, %6, %cst_11 [2] : vector<4x8x8xf32> to vector<4x8xf32>
    %8 = vector.shape_cast %7 : vector<4x8xf32> to vector<4x8x1xf32>
    %9 = vector.broadcast %8 : vector<4x8x1xf32> to vector<4x8x8xf32>
    %10 = arith.subf %6, %9 : vector<4x8x8xf32>
    %11 = math.exp %10 : vector<4x8x8xf32>
    %cst_12 = arith.constant dense<0.000000e+00> : vector<4x8xf32>
    %12 = vector.multi_reduction <add>, %11, %cst_12 [2] : vector<4x8x8xf32> to vector<4x8xf32>
    %13 = vector.shape_cast %12 : vector<4x8xf32> to vector<4x8x1xf32>
    %14 = tpu.reciprocal %13 {approx = true} : vector<4x8x1xf32> -> vector<4x8x1xf32>
    %15 = vector.broadcast %14 : vector<4x8x1xf32> to vector<4x8x8xf32>
    %16 = arith.mulf %11, %15 : vector<4x8x8xf32>
    %17 = arith.truncf %16 : vector<4x8x8xf32> to vector<4x8x8xbf16>
    "tpu.trace_start"() <{level = 10 : i32, message = "hqk,hkd->hqd"}> : () -> ()
    %cst_13 = arith.constant dense<0.000000e+00> : vector<4x8x8xf32>
    %18 = tpu.matmul %17, %5, %cst_13 {dimension_numbers = #tpu.dot_dimension_numbers<[2], [1], [1], [2], [0, 0, 0, 1, 1, 2], [0], [0]>} : vector<4x8x8xbf16>, vector<4x8x8xbf16>, vector<4x8x8xf32> -> vector<4x8x8xf32>
    "tpu.trace_stop"() : () -> ()
    %19 = arith.truncf %18 : vector<4x8x8xf32> to vector<4x8x8xbf16>
    %c0_14 = arith.constant 0 : index
    %c0_15 = arith.constant 0 : index
    %c0_16 = arith.constant 0 : index
    %20 = vector.load %arg5[%c0_14, %c0_15, %c0_16] : memref<4x8x32xbf16, #tpu.memory_space<vmem>>, vector<4x8x32xbf16>
    "tpu.trace_start"() <{level = 10 : i32, message = "hqd,hde->hqe"}> : () -> ()
    %cst_17 = arith.constant dense<0.000000e+00> : vector<4x8x32xf32>
    %21 = tpu.matmul %19, %20, %cst_17 {dimension_numbers = #tpu.dot_dimension_numbers<[2], [1], [1], [2], [0, 0, 0, 1, 1, 2], [0], [0]>} : vector<4x8x8xbf16>, vector<4x8x32xbf16>, vector<4x8x32xf32> -> vector<4x8x32xf32>
    "tpu.trace_stop"() : () -> ()
    %cst_18 = arith.constant dense<0.000000e+00> : vector<8x32xf32>
    %22 = vector.multi_reduction <add>, %21, %cst_18 [0] : vector<4x8x32xf32> to vector<8x32xf32>
    %c0_19 = arith.constant 0 : index
    %c0_20 = arith.constant 0 : index
    %23 = vector.load %arg6[%c0_19, %c0_20] : memref<1x32xf32, #tpu.memory_space<vmem>>, vector<1x32xf32>
    %24 = vector.broadcast %23 : vector<1x32xf32> to vector<8x32xf32>
    %25 = arith.addf %22, %24 : vector<8x32xf32>
    %c0_21 = arith.constant 0 : index
    %c0_22 = arith.constant 0 : index
    %26 = vector.load %arg1[%c0_21, %c0_22] : memref<8x32xf32, #tpu.memory_space<vmem>>, vector<8x32xf32>
    %27 = arith.addf %26, %25 : vector<8x32xf32>
    %cst_23 = arith.constant dense<0.000000e+00> : vector<8xf32>
    %28 = vector.multi_reduction <add>, %27, %cst_23 [1] : vector<8x32xf32> to vector<8xf32>
    %29 = vector.shape_cast %28 : vector<8xf32> to vector<8x1xf32>
    %cst_24 = arith.constant 3.200000e+01 : f32
    %30 = vector.broadcast %cst_24 : f32 to vector<8x1xf32>
    %31 = arith.divf %29, %30 : vector<8x1xf32>
    %32 = vector.broadcast %31 : vector<8x1xf32> to vector<8x32xf32>
    %33 = arith.subf %27, %32 : vector<8x32xf32>
    %34 = vector.broadcast %31 : vector<8x1xf32> to vector<8x32xf32>
    %35 = arith.subf %27, %34 : vector<8x32xf32>
    %36 = arith.mulf %33, %35 : vector<8x32xf32>
    %cst_25 = arith.constant dense<0.000000e+00> : vector<8xf32>
    %37 = vector.multi_reduction <add>, %36, %cst_25 [1] : vector<8x32xf32> to vector<8xf32>
    %38 = vector.shape_cast %37 : vector<8xf32> to vector<8x1xf32>
    %cst_26 = arith.constant 3.200000e+01 : f32
    %39 = vector.broadcast %cst_26 : f32 to vector<8x1xf32>
    %40 = arith.divf %38, %39 : vector<8x1xf32>
    %41 = vector.broadcast %31 : vector<8x1xf32> to vector<8x32xf32>
    %42 = arith.subf %27, %41 : vector<8x32xf32>
    %cst_27 = arith.constant 9.99999974E-6 : f32
    %43 = vector.broadcast %cst_27 : f32 to vector<8x1xf32>
    %44 = arith.addf %40, %43 : vector<8x1xf32>
    %45 = math.rsqrt %44 : vector<8x1xf32>
    %46 = vector.broadcast %45 : vector<8x1xf32> to vector<8x32xf32>
    %47 = arith.mulf %42, %46 : vector<8x32xf32>
    %c0_28 = arith.constant 0 : index
    %c0_29 = arith.constant 0 : index
    %48 = vector.load %arg7[%c0_28, %c0_29] : memref<1x32xf32, #tpu.memory_space<vmem>>, vector<1x32xf32>
    %49 = vector.broadcast %48 : vector<1x32xf32> to vector<8x32xf32>
    %50 = arith.mulf %47, %49 : vector<8x32xf32>
    %c0_30 = arith.constant 0 : index
    %c0_31 = arith.constant 0 : index
    %51 = vector.load %arg8[%c0_30, %c0_31] : memref<1x32xf32, #tpu.memory_space<vmem>>, vector<1x32xf32>
    %52 = vector.broadcast %51 : vector<1x32xf32> to vector<8x32xf32>
    %53 = arith.addf %50, %52 : vector<8x32xf32>
    %c0_32 = arith.constant 0 : index
    %c0_33 = arith.constant 0 : index
    %54 = vector.load %arg9[%c0_32, %c0_33] : memref<8x32xf32, #tpu.memory_space<vmem>>, vector<8x32xf32>
    tpu.vector_store %arg9[%c0_32, %c0_33], %53 {strides = array<i32>} : memref<8x32xf32, #tpu.memory_space<vmem>>, vector<8x32xf32>,
    return
  }
  func.func @transform_0(%arg0: i32) -> (i32, i32) {
    %c0_i32 = arith.constant 0 : i32
    %c0_i32_0 = arith.constant 0 : i32
    return %arg0, %c0_i32 : i32, i32
  }
  func.func @transform_1(%arg0: i32) -> (i32, i32, i32, i32) {
    %c0_i32 = arith.constant 0 : i32
    %c0_i32_0 = arith.constant 0 : i32
    %c0_i32_1 = arith.constant 0 : i32
    %c0_i32_2 = arith.constant 0 : i32
    return %arg0, %c0_i32, %c0_i32_0, %c0_i32_1 : i32, i32, i32, i32
  }
  func.func @transform_2(%arg0: i32) -> (i32, i32, i32, i32) {
    %c0_i32 = arith.constant 0 : i32
    %c0_i32_0 = arith.constant 0 : i32
    %c0_i32_1 = arith.constant 0 : i32
    %c0_i32_2 = arith.constant 0 : i32
    return %arg0, %c0_i32, %c0_i32_0, %c0_i32_1 : i32, i32, i32, i32
  }
  func.func @transform_3(%arg0: i32) -> (i32, i32, i32, i32) {
    %c0_i32 = arith.constant 0 : i32
    %c0_i32_0 = arith.constant 0 : i32
    %c0_i32_1 = arith.constant 0 : i32
    %c0_i32_2 = arith.constant 0 : i32
    return %arg0, %c0_i32, %c0_i32_0, %c0_i32_1 : i32, i32, i32, i32
  }
  func.func @transform_4(%arg0: i32) -> (i32, i32, i32) {
    %c0_i32 = arith.constant 0 : i32
    %c0_i32_0 = arith.constant 0 : i32
    %c0_i32_1 = arith.constant 0 : i32
    %c0_i32_2 = arith.constant 0 : i32
    return %c0_i32, %c0_i32_0, %c0_i32_1 : i32, i32, i32
  }
  func.func @transform_5(%arg0: i32) -> (i32, i32) {
    %c0_i32 = arith.constant 0 : i32
    %c0_i32_0 = arith.constant 0 : i32
    %c0_i32_1 = arith.constant 0 : i32
    return %c0_i32, %c0_i32_0 : i32, i32
  }
  func.func @transform_6(%arg0: i32) -> (i32, i32) {
    %c0_i32 = arith.constant 0 : i32
    %c0_i32_0 = arith.constant 0 : i32
    %c0_i32_1 = arith.constant 0 : i32
    return %c0_i32, %c0_i32_0 : i32, i32
  }
  func.func @transform_7(%arg0: i32) -> (i32, i32) {
    %c0_i32 = arith.constant 0 : i32
    %c0_i32_0 = arith.constant 0 : i32
    %c0_i32_1 = arith.constant 0 : i32
    return %c0_i32, %c0_i32_0 : i32, i32
  }
  func.func @transform_8(%arg0: i32) -> (i32, i32) {
    %c0_i32 = arith.constant 0 : i32
    %c0_i32_0 = arith.constant 0 : i32
    return %arg0, %c0_i32 : i32, i32
  }
}

module attributes {stable_mosaic.version = 11 : i64} {
  func.func @_qkv_proj_kernel(%arg0: i32, %arg1: memref<16x32xf32, #tpu.memory_space<vmem>>, %arg2: memref<32x96xbf16, #tpu.memory_space<vmem>>, %arg3: memref<1x96xf32, #tpu.memory_space<vmem>>, %arg4: memref<16x32xbf16, #tpu.memory_space<vmem>>, %arg5: memref<16x32xbf16, #tpu.memory_space<vmem>>, %arg6: memref<16x32xbf16, #tpu.memory_space<vmem>>) attributes {dimension_semantics = [#tpu.dimension_semantics<parallel>], iteration_bounds = array<i64: 1>, scalar_prefetch = 0 : i64, scratch_operands = 0 : i64, tpu.core_type = #tpu.core_type<tc>, window_params = [{transform_indices = @transform_0, window_bounds = array<i64: 16, 32>}, {pipeline_mode = #tpu.pipeline_mode<synchronous>, transform_indices = @transform_1, window_bounds = array<i64: 32, 96>}, {pipeline_mode = #tpu.pipeline_mode<synchronous>, transform_indices = @transform_2, window_bounds = array<i64: 1, 96>}, {transform_indices = @transform_3, window_bounds = array<i64: 16, 32>}, {transform_indices = @transform_4, window_bounds = array<i64: 16, 32>}, {transform_indices = @transform_5, window_bounds = array<i64: 16, 32>}]} {
    %c0 = arith.constant 0 : index
    %c0_0 = arith.constant 0 : index
    %0 = vector.load %arg1[%c0, %c0_0] : memref<16x32xf32, #tpu.memory_space<vmem>>, vector<16x32xf32>
    %1 = arith.truncf %0 : vector<16x32xf32> to vector<16x32xbf16>
    %c0_1 = arith.constant 0 : index
    %c0_2 = arith.constant 0 : index
    %2 = vector.load %arg2[%c0_1, %c0_2] : memref<32x96xbf16, #tpu.memory_space<vmem>>, vector<32x96xbf16>
    %cst = arith.constant dense<0.000000e+00> : vector<16x96xf32>
    %3 = tpu.matmul %1, %2, %cst {dimension_numbers = #tpu.dot_dimension_numbers<[1], [0], [0], [1], [0, 0, 1, 1], [], []>} : vector<16x32xbf16>, vector<32x96xbf16>, vector<16x96xf32> -> vector<16x96xf32>
    %c0_3 = arith.constant 0 : index
    %c0_4 = arith.constant 0 : index
    %4 = vector.load %arg3[%c0_3, %c0_4] : memref<1x96xf32, #tpu.memory_space<vmem>>, vector<1x96xf32>
    %5 = vector.broadcast %4 : vector<1x96xf32> to vector<16x96xf32>
    %6 = arith.addf %3, %5 : vector<16x96xf32>
    %7 = vector.extract_strided_slice %6 {offsets = [0, 0], sizes = [16, 32], strides = [1, 1]} : vector<16x96xf32> to vector<16x32xf32>
    %cst_5 = arith.constant 0.353553385 : f32
    %8 = vector.broadcast %cst_5 : f32 to vector<16x32xf32>
    %9 = arith.mulf %7, %8 : vector<16x32xf32>
    %10 = arith.truncf %9 : vector<16x32xf32> to vector<16x32xbf16>
    %c0_6 = arith.constant 0 : index
    %c0_7 = arith.constant 0 : index
    %11 = vector.load %arg4[%c0_6, %c0_7] : memref<16x32xbf16, #tpu.memory_space<vmem>>, vector<16x32xbf16>
    tpu.vector_store %arg4[%c0_6, %c0_7], %10 {strides = array<i32>} : memref<16x32xbf16, #tpu.memory_space<vmem>>, vector<16x32xbf16>,
    %12 = vector.extract_strided_slice %6 {offsets = [0, 32], sizes = [16, 32], strides = [1, 1]} : vector<16x96xf32> to vector<16x32xf32>
    %13 = arith.truncf %12 : vector<16x32xf32> to vector<16x32xbf16>
    %c0_8 = arith.constant 0 : index
    %c0_9 = arith.constant 0 : index
    %14 = vector.load %arg5[%c0_8, %c0_9] : memref<16x32xbf16, #tpu.memory_space<vmem>>, vector<16x32xbf16>
    tpu.vector_store %arg5[%c0_8, %c0_9], %13 {strides = array<i32>} : memref<16x32xbf16, #tpu.memory_space<vmem>>, vector<16x32xbf16>,
    %15 = vector.extract_strided_slice %6 {offsets = [0, 64], sizes = [16, 32], strides = [1, 1]} : vector<16x96xf32> to vector<16x32xf32>
    %16 = arith.truncf %15 : vector<16x32xf32> to vector<16x32xbf16>
    %c0_10 = arith.constant 0 : index
    %c0_11 = arith.constant 0 : index
    %17 = vector.load %arg6[%c0_10, %c0_11] : memref<16x32xbf16, #tpu.memory_space<vmem>>, vector<16x32xbf16>
    tpu.vector_store %arg6[%c0_10, %c0_11], %16 {strides = array<i32>} : memref<16x32xbf16, #tpu.memory_space<vmem>>, vector<16x32xbf16>,
    return
  }
  func.func @transform_0(%arg0: i32) -> (i32, i32) {
    %c0_i32 = arith.constant 0 : i32
    %c0_i32_0 = arith.constant 0 : i32
    return %arg0, %c0_i32 : i32, i32
  }
  func.func @transform_1(%arg0: i32) -> (i32, i32) {
    %c0_i32 = arith.constant 0 : i32
    %c0_i32_0 = arith.constant 0 : i32
    %c0_i32_1 = arith.constant 0 : i32
    return %c0_i32, %c0_i32_0 : i32, i32
  }
  func.func @transform_2(%arg0: i32) -> (i32, i32) {
    %c0_i32 = arith.constant 0 : i32
    %c0_i32_0 = arith.constant 0 : i32
    %c0_i32_1 = arith.constant 0 : i32
    return %c0_i32, %c0_i32_0 : i32, i32
  }
  func.func @transform_3(%arg0: i32) -> (i32, i32) {
    %c0_i32 = arith.constant 0 : i32
    %c0_i32_0 = arith.constant 0 : i32
    return %arg0, %c0_i32 : i32, i32
  }
  func.func @transform_4(%arg0: i32) -> (i32, i32) {
    %c0_i32 = arith.constant 0 : i32
    %c0_i32_0 = arith.constant 0 : i32
    return %arg0, %c0_i32 : i32, i32
  }
  func.func @transform_5(%arg0: i32) -> (i32, i32) {
    %c0_i32 = arith.constant 0 : i32
    %c0_i32_0 = arith.constant 0 : i32
    return %arg0, %c0_i32 : i32, i32
  }
}

module attributes {stable_mosaic.version = 11 : i64} {
  func.func @_attn_proj_ln_kernel(%arg0: i32, %arg1: memref<8x32xf32, #tpu.memory_space<vmem>>, %arg2: memref<1x4x8x8xbf16, #tpu.memory_space<vmem>>, %arg3: memref<1x4x8x8xbf16, #tpu.memory_space<vmem>>, %arg4: memref<1x4x8x8xbf16, #tpu.memory_space<vmem>>, %arg5: memref<4x8x32xbf16, #tpu.memory_space<vmem>>, %arg6: memref<1x32xf32, #tpu.memory_space<vmem>>, %arg7: memref<1x32xf32, #tpu.memory_space<vmem>>, %arg8: memref<1x32xf32, #tpu.memory_space<vmem>>, %arg9: memref<8x32xf32, #tpu.memory_space<vmem>>) attributes {dimension_semantics = [#tpu.dimension_semantics<parallel>], iteration_bounds = array<i64: 2>, scalar_prefetch = 0 : i64, scratch_operands = 0 : i64, tpu.core_type = #tpu.core_type<tc>, window_params = [{transform_indices = @transform_0, window_bounds = array<i64: 8, 32>}, {transform_indices = @transform_1, window_bounds = array<i64: 1, 4, 8, 8>}, {transform_indices = @transform_2, window_bounds = array<i64: 1, 4, 8, 8>}, {transform_indices = @transform_3, window_bounds = array<i64: 1, 4, 8, 8>}, {pipeline_mode = #tpu.pipeline_mode<synchronous>, transform_indices = @transform_4, window_bounds = array<i64: 4, 8, 32>}, {pipeline_mode = #tpu.pipeline_mode<synchronous>, transform_indices = @transform_5, window_bounds = array<i64: 1, 32>}, {pipeline_mode = #tpu.pipeline_mode<synchronous>, transform_indices = @transform_6, window_bounds = array<i64: 1, 32>}, {pipeline_mode = #tpu.pipeline_mode<synchronous>, transform_indices = @transform_7, window_bounds = array<i64: 1, 32>}, {transform_indices = @transform_8, window_bounds = array<i64: 8, 32>}]} {
    %c0 = arith.constant 0 : index
    %c0_0 = arith.constant 0 : index
    %c0_1 = arith.constant 0 : index
    %c0_2 = arith.constant 0 : index
    %0 = vector.load %arg2[%c0, %c0_0, %c0_1, %c0_2] : memref<1x4x8x8xbf16, #tpu.memory_space<vmem>>, vector<1x4x8x8xbf16>
    %1 = vector.shape_cast %0 : vector<1x4x8x8xbf16> to vector<4x8x8xbf16>
    %c0_3 = arith.constant 0 : index
    %c0_4 = arith.constant 0 : index
    %c0_5 = arith.constant 0 : index
    %c0_6 = arith.constant 0 : index
    %2 = vector.load %arg3[%c0_3, %c0_4, %c0_5, %c0_6] : memref<1x4x8x8xbf16, #tpu.memory_space<vmem>>, vector<1x4x8x8xbf16>
    %3 = vector.shape_cast %2 : vector<1x4x8x8xbf16> to vector<4x8x8xbf16>
    %c0_7 = arith.constant 0 : index
    %c0_8 = arith.constant 0 : index
    %c0_9 = arith.constant 0 : index
    %c0_10 = arith.constant 0 : index
    %4 = vector.load %arg4[%c0_7, %c0_8, %c0_9, %c0_10] : memref<1x4x8x8xbf16, #tpu.memory_space<vmem>>, vector<1x4x8x8xbf16>
    %5 = vector.shape_cast %4 : vector<1x4x8x8xbf16> to vector<4x8x8xbf16>
    "tpu.trace_start"() <{level = 10 : i32, message = "hqd,hkd->hqk"}> : () -> ()
    %cst = arith.constant dense<0.000000e+00> : vector<4x8x8xf32>
    %6 = tpu.matmul %1, %3, %cst {dimension_numbers = #tpu.dot_dimension_numbers<[2], [2], [1], [1], [0, 0, 0, 1, 1, 1], [0], [0]>} : vector<4x8x8xbf16>, vector<4x8x8xbf16>, vector<4x8x8xf32> -> vector<4x8x8xf32>
    "tpu.trace_stop"() : () -> ()
    %cst_11 = arith.constant dense<0xFF800000> : vector<4x8xf32>
    %7 = vector.multi_reduction <maximumf>, %6, %cst_11 [2] : vector<4x8x8xf32> to vector<4x8xf32>
    %8 = vector.shape_cast %7 : vector<4x8xf32> to vector<4x8x1xf32>
    %9 = vector.broadcast %8 : vector<4x8x1xf32> to vector<4x8x8xf32>
    %10 = arith.subf %6, %9 : vector<4x8x8xf32>
    %11 = math.exp %10 : vector<4x8x8xf32>
    %cst_12 = arith.constant dense<0.000000e+00> : vector<4x8xf32>
    %12 = vector.multi_reduction <add>, %11, %cst_12 [2] : vector<4x8x8xf32> to vector<4x8xf32>
    %13 = vector.shape_cast %12 : vector<4x8xf32> to vector<4x8x1xf32>
    %14 = tpu.reciprocal %13 {approx = true} : vector<4x8x1xf32> -> vector<4x8x1xf32>
    %15 = vector.broadcast %14 : vector<4x8x1xf32> to vector<4x8x8xf32>
    %16 = arith.mulf %11, %15 : vector<4x8x8xf32>
    %17 = arith.truncf %16 : vector<4x8x8xf32> to vector<4x8x8xbf16>
    "tpu.trace_start"() <{level = 10 : i32, message = "hqk,hkd->hqd"}> : () -> ()
    %cst_13 = arith.constant dense<0.000000e+00> : vector<4x8x8xf32>
    %18 = tpu.matmul %17, %5, %cst_13 {dimension_numbers = #tpu.dot_dimension_numbers<[2], [1], [1], [2], [0, 0, 0, 1, 1, 2], [0], [0]>} : vector<4x8x8xbf16>, vector<4x8x8xbf16>, vector<4x8x8xf32> -> vector<4x8x8xf32>
    "tpu.trace_stop"() : () -> ()
    %19 = arith.truncf %18 : vector<4x8x8xf32> to vector<4x8x8xbf16>
    %c0_14 = arith.constant 0 : index
    %c0_15 = arith.constant 0 : index
    %c0_16 = arith.constant 0 : index
    %20 = vector.load %arg5[%c0_14, %c0_15, %c0_16] : memref<4x8x32xbf16, #tpu.memory_space<vmem>>, vector<4x8x32xbf16>
    "tpu.trace_start"() <{level = 10 : i32, message = "hqd,hde->hqe"}> : () -> ()
    %cst_17 = arith.constant dense<0.000000e+00> : vector<4x8x32xf32>
    %21 = tpu.matmul %19, %20, %cst_17 {dimension_numbers = #tpu.dot_dimension_numbers<[2], [1], [1], [2], [0, 0, 0, 1, 1, 2], [0], [0]>} : vector<4x8x8xbf16>, vector<4x8x32xbf16>, vector<4x8x32xf32> -> vector<4x8x32xf32>
    "tpu.trace_stop"() : () -> ()
    %cst_18 = arith.constant dense<0.000000e+00> : vector<8x32xf32>
    %22 = vector.multi_reduction <add>, %21, %cst_18 [0] : vector<4x8x32xf32> to vector<8x32xf32>
    %c0_19 = arith.constant 0 : index
    %c0_20 = arith.constant 0 : index
    %23 = vector.load %arg6[%c0_19, %c0_20] : memref<1x32xf32, #tpu.memory_space<vmem>>, vector<1x32xf32>
    %24 = vector.broadcast %23 : vector<1x32xf32> to vector<8x32xf32>
    %25 = arith.addf %22, %24 : vector<8x32xf32>
    %c0_21 = arith.constant 0 : index
    %c0_22 = arith.constant 0 : index
    %26 = vector.load %arg1[%c0_21, %c0_22] : memref<8x32xf32, #tpu.memory_space<vmem>>, vector<8x32xf32>
    %27 = arith.addf %26, %25 : vector<8x32xf32>
    %cst_23 = arith.constant dense<0.000000e+00> : vector<8xf32>
    %28 = vector.multi_reduction <add>, %27, %cst_23 [1] : vector<8x32xf32> to vector<8xf32>
    %29 = vector.shape_cast %28 : vector<8xf32> to vector<8x1xf32>
    %cst_24 = arith.constant 3.200000e+01 : f32
    %30 = vector.broadcast %cst_24 : f32 to vector<8x1xf32>
    %31 = arith.divf %29, %30 : vector<8x1xf32>
    %32 = vector.broadcast %31 : vector<8x1xf32> to vector<8x32xf32>
    %33 = arith.subf %27, %32 : vector<8x32xf32>
    %34 = vector.broadcast %31 : vector<8x1xf32> to vector<8x32xf32>
    %35 = arith.subf %27, %34 : vector<8x32xf32>
    %36 = arith.mulf %33, %35 : vector<8x32xf32>
    %cst_25 = arith.constant dense<0.000000e+00> : vector<8xf32>
    %37 = vector.multi_reduction <add>, %36, %cst_25 [1] : vector<8x32xf32> to vector<8xf32>
    %38 = vector.shape_cast %37 : vector<8xf32> to vector<8x1xf32>
    %cst_26 = arith.constant 3.200000e+01 : f32
    %39 = vector.broadcast %cst_26 : f32 to vector<8x1xf32>
    %40 = arith.divf %38, %39 : vector<8x1xf32>
    %41 = vector.broadcast %31 : vector<8x1xf32> to vector<8x32xf32>
    %42 = arith.subf %27, %41 : vector<8x32xf32>
    %cst_27 = arith.constant 9.99999974E-6 : f32
    %43 = vector.broadcast %cst_27 : f32 to vector<8x1xf32>
    %44 = arith.addf %40, %43 : vector<8x1xf32>
    %45 = math.rsqrt %44 : vector<8x1xf32>
    %46 = vector.broadcast %45 : vector<8x1xf32> to vector<8x32xf32>
    %47 = arith.mulf %42, %46 : vector<8x32xf32>
    %c0_28 = arith.constant 0 : index
    %c0_29 = arith.constant 0 : index
    %48 = vector.load %arg7[%c0_28, %c0_29] : memref<1x32xf32, #tpu.memory_space<vmem>>, vector<1x32xf32>
    %49 = vector.broadcast %48 : vector<1x32xf32> to vector<8x32xf32>
    %50 = arith.mulf %47, %49 : vector<8x32xf32>
    %c0_30 = arith.constant 0 : index
    %c0_31 = arith.constant 0 : index
    %51 = vector.load %arg8[%c0_30, %c0_31] : memref<1x32xf32, #tpu.memory_space<vmem>>, vector<1x32xf32>
    %52 = vector.broadcast %51 : vector<1x32xf32> to vector<8x32xf32>
    %53 = arith.addf %50, %52 : vector<8x32xf32>
    %c0_32 = arith.constant 0 : index
    %c0_33 = arith.constant 0 : index
    %54 = vector.load %arg9[%c0_32, %c0_33] : memref<8x32xf32, #tpu.memory_space<vmem>>, vector<8x32xf32>
    tpu.vector_store %arg9[%c0_32, %c0_33], %53 {strides = array<i32>} : memref<8x32xf32, #tpu.memory_space<vmem>>, vector<8x32xf32>,
    return
  }
  func.func @transform_0(%arg0: i32) -> (i32, i32) {
    %c0_i32 = arith.constant 0 : i32
    %c0_i32_0 = arith.constant 0 : i32
    return %arg0, %c0_i32 : i32, i32
  }
  func.func @transform_1(%arg0: i32) -> (i32, i32, i32, i32) {
    %c0_i32 = arith.constant 0 : i32
    %c0_i32_0 = arith.constant 0 : i32
    %c0_i32_1 = arith.constant 0 : i32
    %c0_i32_2 = arith.constant 0 : i32
    return %arg0, %c0_i32, %c0_i32_0, %c0_i32_1 : i32, i32, i32, i32
  }
  func.func @transform_2(%arg0: i32) -> (i32, i32, i32, i32) {
    %c0_i32 = arith.constant 0 : i32
    %c0_i32_0 = arith.constant 0 : i32
    %c0_i32_1 = arith.constant 0 : i32
    %c0_i32_2 = arith.constant 0 : i32
    return %arg0, %c0_i32, %c0_i32_0, %c0_i32_1 : i32, i32, i32, i32
  }
  func.func @transform_3(%arg0: i32) -> (i32, i32, i32, i32) {
    %c0_i32 = arith.constant 0 : i32
    %c0_i32_0 = arith.constant 0 : i32
    %c0_i32_1 = arith.constant 0 : i32
    %c0_i32_2 = arith.constant 0 : i32
    return %arg0, %c0_i32, %c0_i32_0, %c0_i32_1 : i32, i32, i32, i32
  }
  func.func @transform_4(%arg0: i32) -> (i32, i32, i32) {
    %c0_i32 = arith.constant 0 : i32
    %c0_i32_0 = arith.constant 0 : i32
    %c0_i32_1 = arith.constant 0 : i32
    %c0_i32_2 = arith.constant 0 : i32
    return %c0_i32, %c0_i32_0, %c0_i32_1 : i32, i32, i32
  }
  func.func @transform_5(%arg0: i32) -> (i32, i32) {
    %c0_i32 = arith.constant 0 : i32
    %c0_i32_0 = arith.constant 0 : i32
    %c0_i32_1 = arith.constant 0 : i32
    return %c0_i32, %c0_i32_0 : i32, i32
  }
  func.func @transform_6(%arg0: i32) -> (i32, i32) {
    %c0_i32 = arith.constant 0 : i32
    %c0_i32_0 = arith.constant 0 : i32
    %c0_i32_1 = arith.constant 0 : i32
    return %c0_i32, %c0_i32_0 : i32, i32
  }
  func.func @transform_7(%arg0: i32) -> (i32, i32) {
    %c0_i32 = arith.constant 0 : i32
    %c0_i32_0 = arith.constant 0 : i32
    %c0_i32_1 = arith.constant 0 : i32
    return %c0_i32, %c0_i32_0 : i32, i32
  }
  func.func @transform_8(%arg0: i32) -> (i32, i32) {
    %c0_i32 = arith.constant 0 : i32
    %c0_i32_0 = arith.constant 0 : i32
    return %arg0, %c0_i32 : i32, i32
  }
}

module attributes {stable_mosaic.version = 11 : i64} {
  func.func @_mlp_add_ln_kernel(%arg0: i32, %arg1: i32, %arg2: memref<16x32xf32, #tpu.memory_space<vmem>>, %arg3: memref<32x64xbf16, #tpu.memory_space<vmem>>, %arg4: memref<1x64xf32, #tpu.memory_space<vmem>>, %arg5: memref<64x32xbf16, #tpu.memory_space<vmem>>, %arg6: memref<1x32xf32, #tpu.memory_space<vmem>>, %arg7: memref<1x32xf32, #tpu.memory_space<vmem>>, %arg8: memref<1x32xf32, #tpu.memory_space<vmem>>, %arg9: memref<16x32xf32, #tpu.memory_space<vmem>>, %arg10: memref<16x32xf32, #tpu.memory_space<vmem>>) attributes {dimension_semantics = [#tpu.dimension_semantics<parallel>, #tpu.dimension_semantics<arbitrary>], iteration_bounds = array<i64: 1, 1>, scalar_prefetch = 0 : i64, scratch_operands = 1 : i64, tpu.core_type = #tpu.core_type<tc>, window_params = [{transform_indices = @transform_0, window_bounds = array<i64: 16, 32>}, {transform_indices = @transform_1, window_bounds = array<i64: 32, 64>}, {transform_indices = @transform_2, window_bounds = array<i64: 1, 64>}, {transform_indices = @transform_3, window_bounds = array<i64: 64, 32>}, {pipeline_mode = #tpu.pipeline_mode<synchronous>, transform_indices = @transform_4, window_bounds = array<i64: 1, 32>}, {pipeline_mode = #tpu.pipeline_mode<synchronous>, transform_indices = @transform_5, window_bounds = array<i64: 1, 32>}, {pipeline_mode = #tpu.pipeline_mode<synchronous>, transform_indices = @transform_6, window_bounds = array<i64: 1, 32>}, {transform_indices = @transform_7, window_bounds = array<i64: 16, 32>}]} {
    %c0_i32 = arith.constant 0 : i32
    %0 = arith.cmpi eq, %arg1, %c0_i32 : i32
    %1 = arith.extui %0 : i1 to i32
    %c0_i32_0 = arith.constant 0 : i32
    %2 = arith.cmpi ne, %1, %c0_i32_0 : i32
    scf.if %2 {
      %cst_16 = arith.constant 0.000000e+00 : f32
      %21 = vector.broadcast %cst_16 : f32 to vector<16x32xf32>
      %c0_17 = arith.constant 0 : index
      %c0_18 = arith.constant 0 : index
      %22 = vector.load %arg10[%c0_17, %c0_18] : memref<16x32xf32, #tpu.memory_space<vmem>>, vector<16x32xf32>
      tpu.vector_store %arg10[%c0_17, %c0_18], %21 {strides = array<i32>} : memref<16x32xf32, #tpu.memory_space<vmem>>, vector<16x32xf32>,
    } else {
    }
    %c0 = arith.constant 0 : index
    %c0_1 = arith.constant 0 : index
    %3 = vector.load %arg2[%c0, %c0_1] : memref<16x32xf32, #tpu.memory_space<vmem>>, vector<16x32xf32>
    %4 = arith.truncf %3 : vector<16x32xf32> to vector<16x32xbf16>
    %c0_2 = arith.constant 0 : index
    %c0_3 = arith.constant 0 : index
    %5 = vector.load %arg3[%c0_2, %c0_3] : memref<32x64xbf16, #tpu.memory_space<vmem>>, vector<32x64xbf16>
    %cst = arith.constant dense<0.000000e+00> : vector<16x64xf32>
    %6 = tpu.matmul %4, %5, %cst {dimension_numbers = #tpu.dot_dimension_numbers<[1], [0], [0], [1], [0, 0, 1, 1], [], []>} : vector<16x32xbf16>, vector<32x64xbf16>, vector<16x64xf32> -> vector<16x64xf32>
    %c0_4 = arith.constant 0 : index
    %c0_5 = arith.constant 0 : index
    %7 = vector.load %arg4[%c0_4, %c0_5] : memref<1x64xf32, #tpu.memory_space<vmem>>, vector<1x64xf32>
    %8 = vector.broadcast %7 : vector<1x64xf32> to vector<16x64xf32>
    %9 = arith.addf %6, %8 : vector<16x64xf32>
    %cst_6 = arith.constant 0.000000e+00 : f32
    %10 = vector.broadcast %cst_6 : f32 to vector<16x64xf32>
    %11 = arith.maximumf %9, %10 : vector<16x64xf32>
    %c0_7 = arith.constant 0 : index
    %c0_8 = arith.constant 0 : index
    %12 = vector.load %arg10[%c0_7, %c0_8] : memref<16x32xf32, #tpu.memory_space<vmem>>, vector<16x32xf32>
    %13 = arith.truncf %11 : vector<16x64xf32> to vector<16x64xbf16>
    %c0_9 = arith.constant 0 : index
    %c0_10 = arith.constant 0 : index
    %14 = vector.load %arg5[%c0_9, %c0_10] : memref<64x32xbf16, #tpu.memory_space<vmem>>, vector<64x32xbf16>
    %cst_11 = arith.constant dense<0.000000e+00> : vector<16x32xf32>
    %15 = tpu.matmul %13, %14, %cst_11 {dimension_numbers = #tpu.dot_dimension_numbers<[1], [0], [0], [1], [0, 0, 1, 1], [], []>} : vector<16x64xbf16>, vector<64x32xbf16>, vector<16x32xf32> -> vector<16x32xf32>
    %16 = arith.addf %12, %15 : vector<16x32xf32>
    %c0_12 = arith.constant 0 : index
    %c0_13 = arith.constant 0 : index
    %17 = vector.load %arg10[%c0_12, %c0_13] : memref<16x32xf32, #tpu.memory_space<vmem>>, vector<16x32xf32>
    tpu.vector_store %arg10[%c0_12, %c0_13], %16 {strides = array<i32>} : memref<16x32xf32, #tpu.memory_space<vmem>>, vector<16x32xf32>,
    %c0_i32_14 = arith.constant 0 : i32
    %18 = arith.cmpi eq, %arg1, %c0_i32_14 : i32
    %19 = arith.extui %18 : i1 to i32
    %c0_i32_15 = arith.constant 0 : i32
    %20 = arith.cmpi ne, %19, %c0_i32_15 : i32
    scf.if %20 {
      %c0_16 = arith.constant 0 : index
      %c0_17 = arith.constant 0 : index
      %21 = vector.load %arg2[%c0_16, %c0_17] : memref<16x32xf32, #tpu.memory_space<vmem>>, vector<16x32xf32>
      %c0_18 = arith.constant 0 : index
      %c0_19 = arith.constant 0 : index
      %22 = vector.load %arg10[%c0_18, %c0_19] : memref<16x32xf32, #tpu.memory_space<vmem>>, vector<16x32xf32>
      %23 = arith.addf %21, %22 : vector<16x32xf32>
      %c0_20 = arith.constant 0 : index
      %c0_21 = arith.constant 0 : index
      %24 = vector.load %arg6[%c0_20, %c0_21] : memref<1x32xf32, #tpu.memory_space<vmem>>, vector<1x32xf32>
      %25 = vector.broadcast %24 : vector<1x32xf32> to vector<16x32xf32>
      %26 = arith.addf %23, %25 : vector<16x32xf32>
      %cst_22 = arith.constant dense<0.000000e+00> : vector<16xf32>
      %27 = vector.multi_reduction <add>, %26, %cst_22 [1] : vector<16x32xf32> to vector<16xf32>
      %28 = vector.shape_cast %27 : vector<16xf32> to vector<16x1xf32>
      %cst_23 = arith.constant 3.200000e+01 : f32
      %29 = vector.broadcast %cst_23 : f32 to vector<16x1xf32>
      %30 = arith.divf %28, %29 : vector<16x1xf32>
      %31 = vector.broadcast %30 : vector<16x1xf32> to vector<16x32xf32>
      %32 = arith.subf %26, %31 : vector<16x32xf32>
      %33 = vector.broadcast %30 : vector<16x1xf32> to vector<16x32xf32>
      %34 = arith.subf %26, %33 : vector<16x32xf32>
      %35 = arith.mulf %32, %34 : vector<16x32xf32>
      %cst_24 = arith.constant dense<0.000000e+00> : vector<16xf32>
      %36 = vector.multi_reduction <add>, %35, %cst_24 [1] : vector<16x32xf32> to vector<16xf32>
      %37 = vector.shape_cast %36 : vector<16xf32> to vector<16x1xf32>
      %cst_25 = arith.constant 3.200000e+01 : f32
      %38 = vector.broadcast %cst_25 : f32 to vector<16x1xf32>
      %39 = arith.divf %37, %38 : vector<16x1xf32>
      %40 = vector.broadcast %30 : vector<16x1xf32> to vector<16x32xf32>
      %41 = arith.subf %26, %40 : vector<16x32xf32>
      %cst_26 = arith.constant 9.99999974E-6 : f32
      %42 = vector.broadcast %cst_26 : f32 to vector<16x1xf32>
      %43 = arith.addf %39, %42 : vector<16x1xf32>
      %44 = math.rsqrt %43 : vector<16x1xf32>
      %45 = vector.broadcast %44 : vector<16x1xf32> to vector<16x32xf32>
      %46 = arith.mulf %41, %45 : vector<16x32xf32>
      %c0_27 = arith.constant 0 : index
      %c0_28 = arith.constant 0 : index
      %47 = vector.load %arg7[%c0_27, %c0_28] : memref<1x32xf32, #tpu.memory_space<vmem>>, vector<1x32xf32>
      %48 = vector.broadcast %47 : vector<1x32xf32> to vector<16x32xf32>
      %49 = arith.mulf %46, %48 : vector<16x32xf32>
      %c0_29 = arith.constant 0 : index
      %c0_30 = arith.constant 0 : index
      %50 = vector.load %arg8[%c0_29, %c0_30] : memref<1x32xf32, #tpu.memory_space<vmem>>, vector<1x32xf32>
      %51 = vector.broadcast %50 : vector<1x32xf32> to vector<16x32xf32>
      %52 = arith.addf %49, %51 : vector<16x32xf32>
      %c0_31 = arith.constant 0 : index
      %c0_32 = arith.constant 0 : index
      %53 = vector.load %arg9[%c0_31, %c0_32] : memref<16x32xf32, #tpu.memory_space<vmem>>, vector<16x32xf32>
      tpu.vector_store %arg9[%c0_31, %c0_32], %52 {strides = array<i32>} : memref<16x32xf32, #tpu.memory_space<vmem>>, vector<16x32xf32>,
    } else {
    }
    return
  }
  func.func @transform_0(%arg0: i32, %arg1: i32) -> (i32, i32) {
    %c0_i32 = arith.constant 0 : i32
    %c0_i32_0 = arith.constant 0 : i32
    return %arg0, %c0_i32 : i32, i32
  }
  func.func @transform_1(%arg0: i32, %arg1: i32) -> (i32, i32) {
    %c0_i32 = arith.constant 0 : i32
    %c0_i32_0 = arith.constant 0 : i32
    return %c0_i32, %arg1 : i32, i32
  }
  func.func @transform_2(%arg0: i32, %arg1: i32) -> (i32, i32) {
    %c0_i32 = arith.constant 0 : i32
    %c0_i32_0 = arith.constant 0 : i32
    return %c0_i32, %arg1 : i32, i32
  }
  func.func @transform_3(%arg0: i32, %arg1: i32) -> (i32, i32) {
    %c0_i32 = arith.constant 0 : i32
    %c0_i32_0 = arith.constant 0 : i32
    return %arg1, %c0_i32 : i32, i32
  }
  func.func @transform_4(%arg0: i32, %arg1: i32) -> (i32, i32) {
    %c0_i32 = arith.constant 0 : i32
    %c0_i32_0 = arith.constant 0 : i32
    %c0_i32_1 = arith.constant 0 : i32
    return %c0_i32, %c0_i32_0 : i32, i32
  }
  func.func @transform_5(%arg0: i32, %arg1: i32) -> (i32, i32) {
    %c0_i32 = arith.constant 0 : i32
    %c0_i32_0 = arith.constant 0 : i32
    %c0_i32_1 = arith.constant 0 : i32
    return %c0_i32, %c0_i32_0 : i32, i32
  }
  func.func @transform_6(%arg0: i32, %arg1: i32) -> (i32, i32) {
    %c0_i32 = arith.constant 0 : i32
    %c0_i32_0 = arith.constant 0 : i32
    %c0_i32_1 = arith.constant 0 : i32
    return %c0_i32, %c0_i32_0 : i32, i32
  }
  func.func @transform_7(%arg0: i32, %arg1: i32) -> (i32, i32) {
    %c0_i32 = arith.constant 0 : i32
    %c0_i32_0 = arith.constant 0 : i32
    return %arg0, %c0_i32 : i32, i32
  }
}

</mosaic_0001>

<llo_original>
// kernel: encoder_block_forward.3
$region0: #{encoder_block_forward.3}
  #allocation0 [shape = 'u32[]', space=smem, size = 0x4, offset = 0x4, fixed_abs, tag = 'smem constant byte address 0x4 - core index']
  #allocation1 [shape = 'u32[144,128]{1,0:T(1,128)}', space=vmem, size = 0x12000, scoped, tag = 'internal scratch']
  %s0 = inlined_call_operand.hbm [shape: f32[16,32], index: 0, kind: input, shape index: {}]
  %s1 = inlined_call_operand.hbm [shape: bf16[32,96], index: 1, kind: input, shape index: {}]
  %s2 = inlined_call_operand.hbm [shape: f32[1,96], index: 2, kind: input, shape index: {}]
  %s3 = inlined_call_operand.hbm [shape: bf16[16,32], index: 3, kind: output, shape index: {0}]
  %s4 = inlined_call_operand.hbm [shape: bf16[16,32], index: 4, kind: output, shape index: {1}]
  %s5 = inlined_call_operand.hbm [shape: bf16[16,32], index: 5, kind: output, shape index: {2}]
  %6 = xla_tuple %s3, %s4, %s5
  %s7 = sld [smem:[#allocation0]]
  $region50: #{encoder_block_forward.3} parent=0
    _
  %s9 = ssub.s32 1, %s7
  %s10 = scalar_select 0, %s9, %s7
  $region1: #{encoder_block_forward.3} parent=0
    #allocation2 [shape = 'u8[8192]{0}', space=vmem, size = 0x2000, scoped, tag = 'input window, operand 0, single buffered']
    #allocation3 [shape = 's32[1]{0}', space=sflag, size = 0x4, scoped, tag = 'scoped memory for encoder_block_forward.3']
    #allocation4 [shape = 's32[1]{0}', space=sflag, size = 0x4, scoped, tag = 'scoped memory for encoder_block_forward.3']
    #allocation5 [shape = 'u8[8192]{0}', space=vmem, size = 0x2000, scoped, tag = 'input window, operand 1, single buffered']
    #allocation6 [shape = 's32[1]{0}', space=sflag, size = 0x4, scoped, tag = 'scoped memory for encoder_block_forward.3']
    #allocation7 [shape = 'u8[512]{0}', space=vmem, size = 0x400, scoped, tag = 'input window, operand 2, single buffered']
    #allocation8 [shape = 'u8[4096]{0}', space=vmem, size = 0x1000, scoped, tag = 'output window, operand 0, single buffered']
    #allocation9 [shape = 'u8[4096]{0}', space=vmem, size = 0x1000, scoped, tag = 'output window, operand 1, single buffered']
    #allocation10 [shape = 's32[1]{0}', space=sflag, size = 0x4, scoped, tag = 'scoped memory for encoder_block_forward.3']
    #allocation11 [shape = 'u8[4096]{0}', space=vmem, size = 0x1000, scoped, tag = 'output window, operand 2, single buffered']
    %11 = vsyncpa [#allocation3], 0
    %12 = vsyncpa [#allocation6], 0
    %13 = vsyncpa [#allocation4], 0
    %14 = vsyncpa [#allocation10], 0
    // Predicated region
    $region2: #{encoder_block_forward.3} parent=1 // pred_check
      _
    $region3: #{encoder_block_forward.3} parent=1 // pred_check_branch
      %16 = sbr.rel (0) target = $region5
    $region4: #{encoder_block_forward.3} parent=1 // pred_region
      %s18 = ssub.s32 256, 256
      %19 = vsyncadd [#allocation3], %s18
      %s20 = sshll.u32 [#allocation2], 4
      %s21 = int_to_ptr.vmem [resolvable:$true] %s20
      %26 = dma.hbm_to_vmem [thread:$0]  %s0, 256, %s21, [#allocation3], 128, 128, 8
    $region5: #{encoder_block_forward.3} parent=1 // pred_fallthru
      _
    // Predicated region
    $region6: #{encoder_block_forward.3} parent=1 // pred_check
      _
    $region7: #{encoder_block_forward.3} parent=1 // pred_check_branch
      %28 = sbr.rel (0) target = $region9
    $region8: #{encoder_block_forward.3} parent=1 // pred_region
      %s30 = ssub.s32 256, 256
      %31 = vsyncadd [#allocation6], %s30
      %s32 = sshll.u32 [#allocation5], 4
      %s33 = int_to_ptr.vmem [resolvable:$true] %s32
      %38 = dma.hbm_to_vmem [thread:$0]  %s1, 256, %s33, [#allocation6], 64, 64, 4
    $region9: #{encoder_block_forward.3} parent=1 // pred_fallthru
      _
    // Predicated region
    $region10: #{encoder_block_forward.3} parent=1 // pred_check
      _
    $region11: #{encoder_block_forward.3} parent=1 // pred_check_branch
      %40 = sbr.rel (0) target = $region13
    $region12: #{encoder_block_forward.3} parent=1 // pred_region
      %s42 = ssub.s32 16, 16
      %43 = vsyncadd [#allocation6], %s42
      %s45 = sshll.u32 [#allocation7], 4
      %s46 = int_to_ptr.vmem [resolvable:$true] %s45
      %48 = dma.hbm_to_vmem [thread:$0]  %s2, 16, %s46, [#allocation6]
    $region13: #{encoder_block_forward.3} parent=1 // pred_fallthru
      _
    // Predicated region
    $region14: #{encoder_block_forward.3} parent=1 // pred_check
      _
    $region15: #{encoder_block_forward.3} parent=1 // pred_check_branch
      %50 = sbr.rel (0) target = $region17
    $region16: #{encoder_block_forward.3} parent=1 // pred_region
      %51 = dma.done [#allocation3], 256
    $region17: #{encoder_block_forward.3} parent=1 // pred_fallthru
      _
    // Predicated region
    $region18: #{encoder_block_forward.3} parent=1 // pred_check
      _
    $region19: #{encoder_block_forward.3} parent=1 // pred_check_branch
      %53 = sbr.rel (0) target = $region21
    $region20: #{encoder_block_forward.3} parent=1 // pred_region
      %54 = dma.done [#allocation6], 256
    $region21: #{encoder_block_forward.3} parent=1 // pred_fallthru
      _
    // Predicated region
    $region22: #{encoder_block_forward.3} parent=1 // pred_check
      _
    $region23: #{encoder_block_forward.3} parent=1 // pred_check_branch
      %56 = sbr.rel (0) target = $region25
    $region24: #{encoder_block_forward.3} parent=1 // pred_region
      %57 = dma.done [#allocation6], 16
    $region25: #{encoder_block_forward.3} parent=1 // pred_fallthru
      _
    %v59 = vld [vmem:[#allocation2] sm:$0xff]
    %v60 = vld [vmem:[#allocation2 + $0x8] sm:$0xff]
    %v61 = vpack.c.bf16 %v60, %v59
    %v62 = vld [vmem:[#allocation5] sm:$0xf]
    %v63 = vld [vmem:[#allocation5 + $0x4] sm:$0xf]
    %v64 = vld [vmem:[#allocation5 + $0x8] sm:$0xf]
    %v65 = vld [vmem:[#allocation5 + $0xc] sm:$0xf]
    %v66 = vld [vmem:[#allocation7] sm:$0x1]
    %v68 = vlaneseq
    %v69 = vshrl.u32 %v68, 7
    %v70 = vsub.s32 0, %v69
    %v71 = vrot.slane %v66, %v70
    %v77 = vunpack.c.l.b16 %v62
    %v78 = vunpack.c.l.b16 %v63
    %v79 = vunpack.c.l.b16 %v64
    %v80 = vunpack.c.l.b16 %v65
    %v81 = vpack.c.b16 %v78, %v77
    %v82 = vpack.c.b16 %v80, %v79
    %vm85 = vcmask 261120
    %v87 = vsel %vm85, %v61, 0
    %89 = vmatprep.subr.bf16.mxu0 0
    %90 = vmatpush1.bf16.msra.mxu0 %v81
    %91 = vmatprep.subr.bf16.mxu0 0
    %92 = vmatpush1.bf16.msra.mxu0 %v82
    %93 = vmatprep.subr.bf16.mxu0 0
    %94 = vmatpush1.bf16.msra.mxu0 0
    %95 = vmatprep.subr.bf16.mxu0 0
    %96 = vmatpush1.bf16.msra.mxu0 0
    %97 = vmatprep.subr.bf16.mxu0 0
    %98 = vmatpush1.bf16.msra.mxu0 0
    %99 = vmatprep.subr.bf16.mxu0 0
    %100 = vmatpush1.bf16.msra.mxu0 0
    %101 = vmatprep.subr.bf16.mxu0 0
    %102 = vmatpush1.bf16.msra.mxu0 0
    %103 = vmatprep.subr.bf16.mxu0 0
    %104 = vmatpush1.bf16.msra.mxu0 0
    %105 = vmatprep.subr.bf16.mxu0 0
    %106 = vmatpush1.bf16.msra.mxu0 0
    %107 = vmatprep.subr.bf16.mxu0 0
    %108 = vmatpush1.bf16.msra.mxu0 0
    %109 = vmatprep.subr.bf16.mxu0 0
    %110 = vmatpush1.bf16.msra.mxu0 0
    %111 = vmatprep.subr.bf16.mxu0 0
    %112 = vmatpush1.bf16.msra.mxu0 0
    %113 = vmatprep.subr.bf16.mxu0 0
    %114 = vmatpush1.bf16.msra.mxu0 0
    %115 = vmatprep.subr.bf16.mxu0 0
    %116 = vmatpush1.bf16.msra.mxu0 0
    %117 = vmatprep.subr.bf16.mxu0 0
    %118 = vmatpush1.bf16.msra.mxu0 0
    %119 = vmatprep.subr.bf16.mxu0 0
    %120 = vmatpush1.bf16.msra.mxu0 0
    %121 = vmatprep.mubr.bf16.mxu0 0
    %122 = vmatmul.mubr.bf16.gmra.mrb[0].mxu0 %v87
    %v123 = vpop.f32.mrb[0].mxu0
    %v124 = vadd.f32 %v71, %v123
    %v125 = vpop.f32.mrb[0].mxu0
    %v126 = vpop.f32.mrb[0].mxu0
    %v127 = vadd.f32 %v71, %v126
    %v128 = vpop.f32.mrb[0].mxu0
    %129 = vdwg.mxu0
    %v130 = vmul.f32 %v124, 0.35355338
    %v131 = vmul.f32 %v127, 0.35355338
    %v132 = vpack.c.bf16 %v131, %v130
    %v134 = vunpack.c.l.b16 %v132
    %v135 = vunpack.c.h.b16 %v132
    %v136 = vpack.c.b16 %v134, %v134
    %v137 = vpack.c.b16 %v135, %v135
    %vm140 = vcmask 257024
    %141 = vst.msk [vmem:[#allocation8] sm:$0xf] %vm140, %v136
    %142 = vst.msk [vmem:[#allocation8 + $0x4] sm:$0xf] %vm140, %v137
    %v143 = vpack.c.bf16 %v127, %v124
    %v145 = vunpack.c.l.b16 %v143
    %v146 = vunpack.c.h.b16 %v143
    %v147 = vpack.c.b16 %v145, %v145
    %v148 = vpack.c.b16 %v146, %v146
    %149 = vrot.lane.b32.xlu0 %v147, 96
    %v150 = vpop.permute.xlu0 %149
    %151 = vrot.lane.b32.xlu0 %v148, 96
    %v152 = vpop.permute.xlu0 %151
    %155 = vst.msk [vmem:[#allocation9] sm:$0xf] %vm140, %v150
    %156 = vst.msk [vmem:[#allocation9 + $0x4] sm:$0xf] %vm140, %v152
    %157 = vrot.lane.b32.xlu0 %v147, 64
    %v158 = vpop.permute.xlu0 %157
    %159 = vrot.lane.b32.xlu0 %v148, 64
    %v160 = vpop.permute.xlu0 %159
    %163 = vst.msk [vmem:[#allocation11] sm:$0xf] %vm140, %v158
    %164 = vst.msk [vmem:[#allocation11 + $0x4] sm:$0xf] %vm140, %v160
    // Predicated region
    $region26: #{encoder_block_forward.3} parent=1 // pred_check
      _
    $region27: #{encoder_block_forward.3} parent=1 // pred_check_branch
      %166 = sbr.rel (0) target = $region29
    $region28: #{encoder_block_forward.3} parent=1 // pred_region
      %s168 = ssub.s32 128, 128
      %169 = vsyncadd [#allocation4], %s168
      %s170 = sshll.u32 [#allocation8], 4
      %s171 = int_to_ptr.vmem [resolvable:$true] %s170
      %176 = dma.vmem_to_hbm [thread:$0]  %s171, 128, %s3, [#allocation4], 64, 64, 4
    $region29: #{encoder_block_forward.3} parent=1 // pred_fallthru
      _
    // Predicated region
    $region30: #{encoder_block_forward.3} parent=1 // pred_check
      _
    $region31: #{encoder_block_forward.3} parent=1 // pred_check_branch
      %178 = sbr.rel (0) target = $region33
    $region32: #{encoder_block_forward.3} parent=1 // pred_region
      %s180 = ssub.s32 128, 128
      %181 = vsyncadd [#allocation10], %s180
      %s182 = sshll.u32 [#allocation9], 4
      %s183 = int_to_ptr.vmem [resolvable:$true] %s182
      %188 = dma.vmem_to_hbm [thread:$0]  %s183, 128, %s4, [#allocation10], 64, 64, 4
    $region33: #{encoder_block_forward.3} parent=1 // pred_fallthru
      _
    // Predicated region
    $region34: #{encoder_block_forward.3} parent=1 // pred_check
      _
    $region35: #{encoder_block_forward.3} parent=1 // pred_check_branch
      %190 = sbr.rel (0) target = $region37
    $region36: #{encoder_block_forward.3} parent=1 // pred_region
      %s192 = ssub.s32 128, 128
      %193 = vsyncadd [#allocation10], %s192
      %s194 = sshll.u32 [#allocation11], 4
      %s195 = int_to_ptr.vmem [resolvable:$true] %s194
      %200 = dma.vmem_to_hbm [thread:$0]  %s195, 128, %s5, [#allocation10], 64, 64, 4
    $region37: #{encoder_block_forward.3} parent=1 // pred_fallthru
      _
    // Predicated region
    $region38: #{encoder_block_forward.3} parent=1 // pred_check
      _
    $region39: #{encoder_block_forward.3} parent=1 // pred_check_branch
      %202 = sbr.rel (0) target = $region41
    $region40: #{encoder_block_forward.3} parent=1 // pred_region
      %203 = dma.done [#allocation4], 128
    $region41: #{encoder_block_forward.3} parent=1 // pred_fallthru
      _
    // Predicated region
    $region42: #{encoder_block_forward.3} parent=1 // pred_check
      _
    $region43: #{encoder_block_forward.3} parent=1 // pred_check_branch
      %205 = sbr.rel (0) target = $region45
    $region44: #{encoder_block_forward.3} parent=1 // pred_region
      %206 = dma.done [#allocation10], 128
    $region45: #{encoder_block_forward.3} parent=1 // pred_fallthru
      _
    // Predicated region
    $region46: #{encoder_block_forward.3} parent=1 // pred_check
      _
    $region47: #{encoder_block_forward.3} parent=1 // pred_check_branch
      %208 = sbr.rel (0) target = $region49
    $region48: #{encoder_block_forward.3} parent=1 // pred_region
      %209 = dma.done [#allocation10], 128
    $region49: #{encoder_block_forward.3} parent=1 // pred_fallthru
      _
    %210 = vsyncpa [#allocation3], 1
    %211 = vsyncpa [#allocation6], 1
    %212 = vsyncpa [#allocation4], 1
    %213 = vsyncpa [#allocation10], 1

// kernel: encoder_block_forward.5
$region0: #{encoder_block_forward.5}
  #allocation0 [shape = 'u32[]', space=smem, size = 0x4, offset = 0x4, fixed_abs, tag = 'smem constant byte address 0x4 - core index']
  #allocation1 [shape = 'u32[144,128]{1,0:T(1,128)}', space=vmem, size = 0x12000, scoped, tag = 'internal scratch']
  #allocation2 [shape = 'f32[16,32]{1,0:T(8,128)}', space=vmem, size = 0x2000, scoped, tag = 'scratch operand']
  %s0 = inlined_call_operand.hbm [shape: f32[16,32], index: 0, kind: input, shape index: {}]
  %s1 = inlined_call_operand.hbm [shape: bf16[32,64], index: 1, kind: input, shape index: {}]
  %s2 = inlined_call_operand.hbm [shape: f32[1,64], index: 2, kind: input, shape index: {}]
  %s3 = inlined_call_operand.hbm [shape: bf16[64,32], index: 3, kind: input, shape index: {}]
  %s4 = inlined_call_operand.hbm [shape: f32[1,32], index: 4, kind: input, shape index: {}]
  %s5 = inlined_call_operand.hbm [shape: f32[1,32], index: 5, kind: input, shape index: {}]
  %s6 = inlined_call_operand.hbm [shape: f32[1,32], index: 6, kind: input, shape index: {}]
  %s7 = inlined_call_operand.hbm [shape: f32[16,32], index: 7, kind: output, shape index: {}]
  %s8 = sld [smem:[#allocation0]]
  $region74: #{encoder_block_forward.5} parent=0
    _
  %s10 = ssub.s32 1, %s8
  %s11 = scalar_select 0, %s10, %s8
  $region1: #{encoder_block_forward.5} parent=0
    #allocation3 [shape = 'u8[8192]{0}', space=vmem, size = 0x2000, scoped, tag = 'input window, operand 0, single buffered']
    #allocation4 [shape = 's32[1]{0}', space=sflag, size = 0x4, scoped, tag = 'scoped memory for encoder_block_forward.5']
    #allocation5 [shape = 's32[1]{0}', space=sflag, size = 0x4, scoped, tag = 'scoped memory for encoder_block_forward.5']
    #allocation6 [shape = 'u8[8192]{0}', space=vmem, size = 0x2000, scoped, tag = 'input window, operand 1, single buffered']
    #allocation7 [shape = 's32[1]{0}', space=sflag, size = 0x4, scoped, tag = 'scoped memory for encoder_block_forward.5']
    #allocation8 [shape = 'u8[512]{0}', space=vmem, size = 0x400, scoped, tag = 'input window, operand 2, single buffered']
    #allocation9 [shape = 'u8[16384]{0}', space=vmem, size = 0x4000, scoped, tag = 'input window, operand 3, single buffered']
    #allocation10 [shape = 's32[1]{0}', space=sflag, size = 0x4, scoped, tag = 'scoped memory for encoder_block_forward.5']
    #allocation11 [shape = 'u8[512]{0}', space=vmem, size = 0x400, scoped, tag = 'input window, operand 4, single buffered']
    #allocation12 [shape = 'u8[512]{0}', space=vmem, size = 0x400, scoped, tag = 'input window, operand 5, single buffered']
    #allocation13 [shape = 's32[1]{0}', space=sflag, size = 0x4, scoped, tag = 'scoped memory for encoder_block_forward.5']
    #allocation14 [shape = 'u8[512]{0}', space=vmem, size = 0x400, scoped, tag = 'input window, operand 6, single buffered']
    #allocation15 [shape = 'u8[8192]{0}', space=vmem, size = 0x2000, scoped, tag = 'output window, operand 0, single buffered']
    %12 = vsyncpa [#allocation4], 0
    %13 = vsyncpa [#allocation7], 0
    %14 = vsyncpa [#allocation10], 0
    %15 = vsyncpa [#allocation13], 0
    %16 = vsyncpa [#allocation5], 0
    // Predicated region
    $region2: #{encoder_block_forward.5} parent=1 // pred_check
      _
    $region3: #{encoder_block_forward.5} parent=1 // pred_check_branch
      %18 = sbr.rel (0) target = $region5
    $region4: #{encoder_block_forward.5} parent=1 // pred_region
      %s20 = ssub.s32 256, 256
      %21 = vsyncadd [#allocation4], %s20
      %s22 = sshll.u32 [#allocation3], 4
      %s23 = int_to_ptr.vmem [resolvable:$true] %s22
      %28 = dma.hbm_to_vmem [thread:$0]  %s0, 256, %s23, [#allocation4], 128, 128, 8
    $region5: #{encoder_block_forward.5} parent=1 // pred_fallthru
      _
    // Predicated region
    $region6: #{encoder_block_forward.5} parent=1 // pred_check
      _
    $region7: #{encoder_block_forward.5} parent=1 // pred_check_branch
      %30 = sbr.rel (0) target = $region9
    $region8: #{encoder_block_forward.5} parent=1 // pred_region
      %s32 = ssub.s32 256, 256
      %33 = vsyncadd [#allocation7], %s32
      %s34 = sshll.u32 [#allocation6], 4
      %s35 = int_to_ptr.vmem [resolvable:$true] %s34
      %40 = dma.hbm_to_vmem [thread:$0]  %s1, 256, %s35, [#allocation7], 64, 64, 4
    $region9: #{encoder_block_forward.5} parent=1 // pred_fallthru
      _
    // Predicated region
    $region10: #{encoder_block_forward.5} parent=1 // pred_check
      _
    $region11: #{encoder_block_forward.5} parent=1 // pred_check_branch
      %42 = sbr.rel (0) target = $region13
    $region12: #{encoder_block_forward.5} parent=1 // pred_region
      %s44 = ssub.s32 16, 16
      %45 = vsyncadd [#allocation7], %s44
      %s47 = sshll.u32 [#allocation8], 4
      %s48 = int_to_ptr.vmem [resolvable:$true] %s47
      %50 = dma.hbm_to_vmem [thread:$0]  %s2, 16, %s48, [#allocation7]
    $region13: #{encoder_block_forward.5} parent=1 // pred_fallthru
      _
    // Predicated region
    $region14: #{encoder_block_forward.5} parent=1 // pred_check
      _
    $region15: #{encoder_block_forward.5} parent=1 // pred_check_branch
      %52 = sbr.rel (0) target = $region17
    $region16: #{encoder_block_forward.5} parent=1 // pred_region
      %s54 = ssub.s32 512, 512
      %55 = vsyncadd [#allocation10], %s54
      %s56 = sshll.u32 [#allocation9], 4
      %s57 = int_to_ptr.vmem [resolvable:$true] %s56
      %62 = dma.hbm_to_vmem [thread:$0]  %s3, 512, %s57, [#allocation10], 64, 64, 4
    $region17: #{encoder_block_forward.5} parent=1 // pred_fallthru
      _
    // Predicated region
    $region18: #{encoder_block_forward.5} parent=1 // pred_check
      _
    $region19: #{encoder_block_forward.5} parent=1 // pred_check_branch
      %64 = sbr.rel (0) target = $region21
    $region20: #{encoder_block_forward.5} parent=1 // pred_region
      %s66 = ssub.s32 16, 16
      %67 = vsyncadd [#allocation10], %s66
      %s69 = sshll.u32 [#allocation11], 4
      %s70 = int_to_ptr.vmem [resolvable:$true] %s69
      %72 = dma.hbm_to_vmem [thread:$0]  %s4, 16, %s70, [#allocation10]
    $region21: #{encoder_block_forward.5} parent=1 // pred_fallthru
      _
    // Predicated region
    $region22: #{encoder_block_forward.5} parent=1 // pred_check
      _
    $region23: #{encoder_block_forward.5} parent=1 // pred_check_branch
      %74 = sbr.rel (0) target = $region25
    $region24: #{encoder_block_forward.5} parent=1 // pred_region
      %s76 = ssub.s32 16, 16
      %77 = vsyncadd [#allocation13], %s76
      %s79 = sshll.u32 [#allocation12], 4
      %s80 = int_to_ptr.vmem [resolvable:$true] %s79
      %82 = dma.hbm_to_vmem [thread:$0]  %s5, 16, %s80, [#allocation13]
    $region25: #{encoder_block_forward.5} parent=1 // pred_fallthru
      _
    // Predicated region
    $region26: #{encoder_block_forward.5} parent=1 // pred_check
      _
    $region27: #{encoder_block_forward.5} parent=1 // pred_check_branch
      %84 = sbr.rel (0) target = $region29
    $region28: #{encoder_block_forward.5} parent=1 // pred_region
      %s86 = ssub.s32 16, 16
      %87 = vsyncadd [#allocation13], %s86
      %s89 = sshll.u32 [#allocation14], 4
      %s90 = int_to_ptr.vmem [resolvable:$true] %s89
      %92 = dma.hbm_to_vmem [thread:$0]  %s6, 16, %s90, [#allocation13]
    $region29: #{encoder_block_forward.5} parent=1 // pred_fallthru
      _
    // Predicated region
    $region30: #{encoder_block_forward.5} parent=1 // pred_check
      _
    $region31: #{encoder_block_forward.5} parent=1 // pred_check_branch
      %94 = sbr.rel (0) target = $region33
    $region32: #{encoder_block_forward.5} parent=1 // pred_region
      %95 = dma.done [#allocation4], 256
    $region33: #{encoder_block_forward.5} parent=1 // pred_fallthru
      _
    // Predicated region
    $region34: #{encoder_block_forward.5} parent=1 // pred_check
      _
    $region35: #{encoder_block_forward.5} parent=1 // pred_check_branch
      %97 = sbr.rel (0) target = $region37
    $region36: #{encoder_block_forward.5} parent=1 // pred_region
      %98 = dma.done [#allocation7], 256
    $region37: #{encoder_block_forward.5} parent=1 // pred_fallthru
      _
    // Predicated region
    $region38: #{encoder_block_forward.5} parent=1 // pred_check
      _
    $region39: #{encoder_block_forward.5} parent=1 // pred_check_branch
      %100 = sbr.rel (0) target = $region41
    $region40: #{encoder_block_forward.5} parent=1 // pred_region
      %101 = dma.done [#allocation7], 16
    $region41: #{encoder_block_forward.5} parent=1 // pred_fallthru
      _
    // Predicated region
    $region42: #{encoder_block_forward.5} parent=1 // pred_check
      _
    $region43: #{encoder_block_forward.5} parent=1 // pred_check_branch
      %103 = sbr.rel (0) target = $region45
    $region44: #{encoder_block_forward.5} parent=1 // pred_region
      %104 = dma.done [#allocation10], 512
    $region45: #{encoder_block_forward.5} parent=1 // pred_fallthru
      _
    // Predicated region
    $region46: #{encoder_block_forward.5} parent=1 // pred_check
      _
    $region47: #{encoder_block_forward.5} parent=1 // pred_check_branch
      %106 = sbr.rel (0) target = $region49
    $region48: #{encoder_block_forward.5} parent=1 // pred_region
      %107 = dma.done [#allocation10], 16
    $region49: #{encoder_block_forward.5} parent=1 // pred_fallthru
      _
    // Predicated region
    $region50: #{encoder_block_forward.5} parent=1 // pred_check
      _
    $region51: #{encoder_block_forward.5} parent=1 // pred_check_branch
      %109 = sbr.rel (0) target = $region53
    $region52: #{encoder_block_forward.5} parent=1 // pred_region
      %110 = dma.done [#allocation13], 16
    $region53: #{encoder_block_forward.5} parent=1 // pred_fallthru
      _
    // Predicated region
    $region54: #{encoder_block_forward.5} parent=1 // pred_check
      _
    $region55: #{encoder_block_forward.5} parent=1 // pred_check_branch
      %112 = sbr.rel (0) target = $region57
    $region56: #{encoder_block_forward.5} parent=1 // pred_region
      %113 = dma.done [#allocation13], 16
    $region57: #{encoder_block_forward.5} parent=1 // pred_fallthru
      _
    %p115 = scmp.eq.s32.totalorder 0, 0
    // Predicated region
    $region58: #{encoder_block_forward.5} parent=1 // pred_check
      %p116 = pneg %p115
    $region59: #{encoder_block_forward.5} parent=1 // pred_check_branch
      %118 = sbr.rel (%p116) target = $region61
    $region60: #{encoder_block_forward.5} parent=1 // pred_region
      %vm119 = vcmask 261120
      %120 = vst.msk [vmem:[#allocation2] sm:$0xff] %vm119, 0.0
      %121 = vst.msk [vmem:[#allocation2 + $0x8] sm:$0xff] %vm119, 0.0
    $region61: #{encoder_block_forward.5} parent=1 // pred_fallthru
      _
    %v122 = vld [vmem:[#allocation3] sm:$0xff]
    %v123 = vld [vmem:[#allocation3 + $0x8] sm:$0xff]
    %v124 = vpack.c.bf16 %v123, %v122
    %v125 = vld [vmem:[#allocation6] sm:$0xf]
    %v126 = vld [vmem:[#allocation6 + $0x4] sm:$0xf]
    %v127 = vld [vmem:[#allocation6 + $0x8] sm:$0xf]
    %v128 = vld [vmem:[#allocation6 + $0xc] sm:$0xf]
    %v129 = vld [vmem:[#allocation8] sm:$0x1]
    %v131 = vlaneseq
    %v132 = vshrl.u32 %v131, 7
    %v133 = vsub.s32 0, %v132
    %v134 = vrot.slane %v129, %v133
    %v140 = vunpack.c.l.b16 %v125
    %v141 = vunpack.c.l.b16 %v126
    %v142 = vunpack.c.l.b16 %v127
    %v143 = vunpack.c.l.b16 %v128
    %v144 = vpack.c.b16 %v141, %v140
    %v145 = vpack.c.b16 %v143, %v142
    %vm148 = vcmask 261120
    %v150 = vsel %vm148, %v124, 0
    %152 = vmatprep.subr.bf16.mxu0 0
    %153 = vmatpush1.bf16.msra.mxu0 %v144
    %154 = vmatprep.subr.bf16.mxu0 0
    %155 = vmatpush1.bf16.msra.mxu0 %v145
    %156 = vmatprep.subr.bf16.mxu0 0
    %157 = vmatpush1.bf16.msra.mxu0 0
    %158 = vmatprep.subr.bf16.mxu0 0
    %159 = vmatpush1.bf16.msra.mxu0 0
    %160 = vmatprep.subr.bf16.mxu0 0
    %161 = vmatpush1.bf16.msra.mxu0 0
    %162 = vmatprep.subr.bf16.mxu0 0
    %163 = vmatpush1.bf16.msra.mxu0 0
    %164 = vmatprep.subr.bf16.mxu0 0
    %165 = vmatpush1.bf16.msra.mxu0 0
    %166 = vmatprep.subr.bf16.mxu0 0
    %167 = vmatpush1.bf16.msra.mxu0 0
    %168 = vmatprep.subr.bf16.mxu0 0
    %169 = vmatpush1.bf16.msra.mxu0 0
    %170 = vmatprep.subr.bf16.mxu0 0
    %171 = vmatpush1.bf16.msra.mxu0 0
    %172 = vmatprep.subr.bf16.mxu0 0
    %173 = vmatpush1.bf16.msra.mxu0 0
    %174 = vmatprep.subr.bf16.mxu0 0
    %175 = vmatpush1.bf16.msra.mxu0 0
    %176 = vmatprep.subr.bf16.mxu0 0
    %177 = vmatpush1.bf16.msra.mxu0 0
    %178 = vmatprep.subr.bf16.mxu0 0
    %179 = vmatpush1.bf16.msra.mxu0 0
    %180 = vmatprep.subr.bf16.mxu0 0
    %181 = vmatpush1.bf16.msra.mxu0 0
    %182 = vmatprep.subr.bf16.mxu0 0
    %183 = vmatpush1.bf16.msra.mxu0 0
    %184 = vmatprep.mubr.bf16.mxu0 0
    %185 = vmatmul.mubr.bf16.gmra.mrb[0].mxu0 %v150
    %v186 = vpop.f32.mrb[0].mxu0
    %v187 = vadd.f32 %v134, %v186
    %v188 = vpop.f32.mrb[0].mxu0
    %v189 = vpop.f32.mrb[0].mxu0
    %v190 = vadd.f32 %v134, %v189
    %v191 = vpop.f32.mrb[0].mxu0
    %192 = vdwg.mxu0
    %v193 = vmax.f32 %v187, 0.0
    %v194 = vmax.f32 %v190, 0.0
    %v195 = vld [vmem:[#allocation2] sm:$0xff]
    %v196 = vld [vmem:[#allocation2 + $0x8] sm:$0xff]
    %v197 = vpack.c.bf16 %v194, %v193
    %v198 = vld [vmem:[#allocation9] sm:$0xf]
    %v199 = vld [vmem:[#allocation9 + $0x4] sm:$0xf]
    %v200 = vld [vmem:[#allocation9 + $0x8] sm:$0xf]
    %v201 = vld [vmem:[#allocation9 + $0xc] sm:$0xf]
    %v202 = vld [vmem:[#allocation9 + $0x10] sm:$0xf]
    %v203 = vld [vmem:[#allocation9 + $0x14] sm:$0xf]
    %v204 = vld [vmem:[#allocation9 + $0x18] sm:$0xf]
    %v205 = vld [vmem:[#allocation9 + $0x1c] sm:$0xf]
    %v214 = vunpack.c.l.b16 %v198
    %v215 = vunpack.c.l.b16 %v199
    %v216 = vunpack.c.l.b16 %v200
    %v217 = vunpack.c.l.b16 %v201
    %v218 = vunpack.c.l.b16 %v202
    %v219 = vunpack.c.l.b16 %v203
    %v220 = vunpack.c.l.b16 %v204
    %v221 = vunpack.c.l.b16 %v205
    %v222 = vpack.c.b16 %v215, %v214
    %v223 = vpack.c.b16 %v217, %v216
    %v224 = vpack.c.b16 %v219, %v218
    %v225 = vpack.c.b16 %v221, %v220
    %vm230 = vcmask 523264
    %v232 = vsel %vm230, %v197, 0
    %234 = vmatprep.subr.bf16.mxu0 0
    %235 = vmatpush1.bf16.msra.mxu0 %v222
    %236 = vmatprep.subr.bf16.mxu0 0
    %237 = vmatpush1.bf16.msra.mxu0 %v223
    %238 = vmatprep.subr.bf16.mxu0 0
    %239 = vmatpush1.bf16.msra.mxu0 %v224
    %240 = vmatprep.subr.bf16.mxu0 0
    %241 = vmatpush1.bf16.msra.mxu0 %v225
    %242 = vmatprep.subr.bf16.mxu0 0
    %243 = vmatpush1.bf16.msra.mxu0 0
    %244 = vmatprep.subr.bf16.mxu0 0
    %245 = vmatpush1.bf16.msra.mxu0 0
    %246 = vmatprep.subr.bf16.mxu0 0
    %247 = vmatpush1.bf16.msra.mxu0 0
    %248 = vmatprep.subr.bf16.mxu0 0
    %249 = vmatpush1.bf16.msra.mxu0 0
    %250 = vmatprep.subr.bf16.mxu0 0
    %251 = vmatpush1.bf16.msra.mxu0 0
    %252 = vmatprep.subr.bf16.mxu0 0
    %253 = vmatpush1.bf16.msra.mxu0 0
    %254 = vmatprep.subr.bf16.mxu0 0
    %255 = vmatpush1.bf16.msra.mxu0 0
    %256 = vmatprep.subr.bf16.mxu0 0
    %257 = vmatpush1.bf16.msra.mxu0 0
    %258 = vmatprep.subr.bf16.mxu0 0
    %259 = vmatpush1.bf16.msra.mxu0 0
    %260 = vmatprep.subr.bf16.mxu0 0
    %261 = vmatpush1.bf16.msra.mxu0 0
    %262 = vmatprep.subr.bf16.mxu0 0
    %263 = vmatpush1.bf16.msra.mxu0 0
    %264 = vmatprep.subr.bf16.mxu0 0
    %265 = vmatpush1.bf16.msra.mxu0 0
    %266 = vmatprep.mubr.bf16.mxu0 0
    %267 = vmatmul.mubr.bf16.gmra.mrb[0].mxu0 %v232
    %v268 = vpop.f32.mrb[0].mxu0
    %v269 = vadd.f32 0.0, %v268
    %v270 = vpop.f32.mrb[0].mxu0
    %v271 = vpop.f32.mrb[0].mxu0
    %v272 = vadd.f32 0.0, %v271
    %v273 = vpop.f32.mrb[0].mxu0
    %274 = vdwg.mxu0
    %v275 = vadd.f32 %v195, %v269
    %v276 = vadd.f32 %v196, %v272
    %277 = vst.msk [vmem:[#allocation2] sm:$0xff] %vm148, %v275
    %278 = vst.msk [vmem:[#allocation2 + $0x8] sm:$0xff] %vm148, %v276
    // Predicated region
    $region62: #{encoder_block_forward.5} parent=1 // pred_check
      %p279 = pneg %p115
    $region63: #{encoder_block_forward.5} parent=1 // pred_check_branch
      %281 = sbr.rel (%p279) target = $region65
    $region64: #{encoder_block_forward.5} parent=1 // pred_region
      %v282 = vld [vmem:[#allocation3] sm:$0xff]
      %v283 = vld [vmem:[#allocation3 + $0x8] sm:$0xff]
      %v284 = vld [vmem:[#allocation2] sm:$0xff]
      %v285 = vld [vmem:[#allocation2 + $0x8] sm:$0xff]
      %v286 = vadd.f32 %v282, %v284
      %v287 = vadd.f32 %v283, %v285
      %v288 = vld [vmem:[#allocation11] sm:$0x1]
      %v290 = vlaneseq
      %v291 = vshrl.u32 %v290, 7
      %v292 = vsub.s32 0, %v291
      %v293 = vrot.slane %v288, %v292
      %v295 = vadd.f32 %v286, %v293
      %v296 = vadd.f32 %v287, %v293
      %v297 = vsel %vm148, %v295, 0.0
      %298 = vadd.xlane.f32.xlu0 %v297
      %v299 = vpop.xlane.xlu0 %298
      %v300 = vsel %vm148, %v296, 0.0
      %301 = vadd.xlane.f32.xlu0 %v300
      %v302 = vpop.xlane.xlu0 %301
      %v303 = vrcp.pop 32.0
      %v304 = vmul.f32 %v299, %v303
      %v305 = vmul.f32 %v302, %v303
      %v306 = vsub.f32 %v295, %v304
      %v307 = vsub.f32 %v296, %v305
      %v308 = vmul.f32 %v306, %v306
      %v309 = vmul.f32 %v307, %v307
      %v310 = vsel %vm148, %v308, 0.0
      %311 = vadd.xlane.f32.xlu0 %v310
      %v312 = vpop.xlane.xlu0 %311
      %v313 = vsel %vm148, %v309, 0.0
      %314 = vadd.xlane.f32.xlu0 %v313
      %v315 = vpop.xlane.xlu0 %314
      %v316 = vmul.f32 %v312, %v303
      %v317 = vmul.f32 %v315, %v303
      %v318 = vadd.f32 %v316, 1e-05
      %v319 = vadd.f32 %v317, 1e-05
      %v320 = vrsqrt.pop %v318
      %v321 = vrsqrt.pop %v319
      %v322 = vmul.f32 %v306, %v320
      %v323 = vmul.f32 %v307, %v321
      %v324 = vld [vmem:[#allocation12] sm:$0x1]
      %v326 = vlaneseq
      %v327 = vshrl.u32 %v326, 7
      %v328 = vsub.s32 0, %v327
      %v329 = vrot.slane %v324, %v328
      %v331 = vmul.f32 %v322, %v329
      %v332 = vmul.f32 %v323, %v329
      %v333 = vld [vmem:[#allocation14] sm:$0x1]
      %v335 = vlaneseq
      %v336 = vshrl.u32 %v335, 7
      %v337 = vsub.s32 0, %v336
      %v338 = vrot.slane %v333, %v337
      %v340 = vadd.f32 %v331, %v338
      %v341 = vadd.f32 %v332, %v338
      %342 = vst.msk [vmem:[#allocation15] sm:$0xff] %vm148, %v340
      %343 = vst.msk [vmem:[#allocation15 + $0x8] sm:$0xff] %vm148, %v341
    $region65: #{encoder_block_forward.5} parent=1 // pred_fallthru
      _
    // Predicated region
    $region66: #{encoder_block_forward.5} parent=1 // pred_check
      _
    $region67: #{encoder_block_forward.5} parent=1 // pred_check_branch
      %345 = sbr.rel (0) target = $region69
    $region68: #{encoder_block_forward.5} parent=1 // pred_region
      %s347 = ssub.s32 256, 256
      %348 = vsyncadd [#allocation5], %s347
      %s349 = sshll.u32 [#allocation15], 4
      %s350 = int_to_ptr.vmem [resolvable:$true] %s349
      %355 = dma.vmem_to_hbm [thread:$0]  %s350, 256, %s7, [#allocation5], 128, 128, 8
    $region69: #{encoder_block_forward.5} parent=1 // pred_fallthru
      _
    // Predicated region
    $region70: #{encoder_block_forward.5} parent=1 // pred_check
      _
    $region71: #{encoder_block_forward.5} parent=1 // pred_check_branch
      %357 = sbr.rel (0) target = $region73
    $region72: #{encoder_block_forward.5} parent=1 // pred_region
      %358 = dma.done [#allocation5], 256
    $region73: #{encoder_block_forward.5} parent=1 // pred_fallthru
      _
    %359 = vsyncpa [#allocation4], 1
    %360 = vsyncpa [#allocation7], 1
    %361 = vsyncpa [#allocation10], 1
    %362 = vsyncpa [#allocation13], 1
    %363 = vsyncpa [#allocation5], 1

// kernel: encoder_block_forward.4
$region0: #{encoder_block_forward.4}
  #allocation0 [shape = 'u32[]', space=smem, size = 0x4, offset = 0x4, fixed_abs, tag = 'smem constant byte address 0x4 - core index']
  #allocation1 [shape = 'u32[144,128]{1,0:T(1,128)}', space=vmem, size = 0x12000, scoped, tag = 'internal scratch']
  %s0 = inlined_call_operand.hbm [shape: f32[16,32], index: 0, kind: input, shape index: {}]
  %s1 = inlined_call_operand.hbm [shape: bf16[2,4,8,8], index: 1, kind: input, shape index: {}]
  %s2 = inlined_call_operand.hbm [shape: bf16[2,4,8,8], index: 2, kind: input, shape index: {}]
  %s3 = inlined_call_operand.hbm [shape: bf16[2,4,8,8], index: 3, kind: input, shape index: {}]
  %s4 = inlined_call_operand.hbm [shape: bf16[4,8,32], index: 4, kind: input, shape index: {}]
  %s5 = inlined_call_operand.hbm [shape: f32[1,32], index: 5, kind: input, shape index: {}]
  %s6 = inlined_call_operand.hbm [shape: f32[1,32], index: 6, kind: input, shape index: {}]
  %s7 = inlined_call_operand.hbm [shape: f32[1,32], index: 7, kind: input, shape index: {}]
  %s8 = inlined_call_operand.hbm [shape: f32[16,32], index: 8, kind: output, shape index: {}]
  %s9 = sld [smem:[#allocation0]]
  $region97: #{encoder_block_forward.4} parent=0
    _
  %s11 = ssub.s32 1, %s9
  %s12 = scalar_select 0, %s11, %s9
  $region1: #{encoder_block_forward.4} parent=0
    #allocation2 [shape = 'u8[8192]{0}', space=vmem, size = 0x2000, scoped, tag = 'input window, operand 0']
    #allocation3 [shape = 's32[2]{0}', space=sflag, size = 0x8, scoped, tag = 'scoped memory for encoder_block_forward.4']
    #allocation4 [shape = 's32[2]{0}', space=sflag, size = 0x8, scoped, tag = 'scoped memory for encoder_block_forward.4']
    #allocation5 [shape = 'u8[16384]{0}', space=vmem, size = 0x4000, scoped, tag = 'input window, operand 1']
    #allocation6 [shape = 's32[2]{0}', space=sflag, size = 0x8, scoped, tag = 'scoped memory for encoder_block_forward.4']
    #allocation7 [shape = 'u8[16384]{0}', space=vmem, size = 0x4000, scoped, tag = 'input window, operand 2']
    #allocation8 [shape = 'u8[16384]{0}', space=vmem, size = 0x4000, scoped, tag = 'input window, operand 3']
    #allocation9 [shape = 's32[2]{0}', space=sflag, size = 0x8, scoped, tag = 'scoped memory for encoder_block_forward.4']
    #allocation10 [shape = 'u8[8192]{0}', space=vmem, size = 0x2000, scoped, tag = 'input window, operand 4, single buffered']
    #allocation11 [shape = 'u8[512]{0}', space=vmem, size = 0x400, scoped, tag = 'input window, operand 5, single buffered']
    #allocation12 [shape = 's32[1]{0}', space=sflag, size = 0x4, scoped, tag = 'scoped memory for encoder_block_forward.4']
    #allocation13 [shape = 'u8[512]{0}', space=vmem, size = 0x400, scoped, tag = 'input window, operand 6, single buffered']
    #allocation14 [shape = 'u8[512]{0}', space=vmem, size = 0x400, scoped, tag = 'input window, operand 7, single buffered']
    #allocation15 [shape = 's32[1]{0}', space=sflag, size = 0x4, scoped, tag = 'scoped memory for encoder_block_forward.4']
    #allocation16 [shape = 'u8[8192]{0}', space=vmem, size = 0x2000, scoped, tag = 'output window, operand 0']
    %13 = vsyncpa [#allocation3], 0
    %s14 = scalar_lea.sflag [#allocation3], 1
    %15 = vsyncpa %s14, 0
    %16 = vsyncpa [#allocation6], 0
    %s17 = scalar_lea.sflag [#allocation6], 1
    %18 = vsyncpa %s17, 0
    %19 = vsyncpa [#allocation9], 0
    %s20 = scalar_lea.sflag [#allocation9], 1
    %21 = vsyncpa %s20, 0
    %22 = vsyncpa [#allocation12], 0
    %23 = vsyncpa [#allocation15], 0
    %24 = vsyncpa [#allocation4], 0
    %s25 = scalar_lea.sflag [#allocation4], 1
    %26 = vsyncpa %s25, 0
    loop: start=0, step=1, limit=4
    $region2: #{encoder_block_forward.4} parent=1 // loop_pre_header
      _
    $region3: #{encoder_block_forward.4} parent=1 // loop_header
      %s28 = sphi 0, %s32
      %p29 = scmp.ge.s32.totalorder %s28, 4
      %s38 = sphi 0, %s40
      %s41 = sphi 0, %s38
      %s42 = sphi 0, %s41
      %s58 = sphi 0, %s42
      %s64 = sphi 0, %s66
      %s67 = sphi 0, %s64
      %s68 = sphi 0, %s67
      %s84 = sphi 0, %s68
      %s90 = sphi 0, %s92
      %s93 = sphi 0, %s90
      %s94 = sphi 0, %s93
      %s110 = sphi 0, %s94
      %s116 = sphi 0, %s118
      %s119 = sphi 0, %s116
      %s120 = sphi 0, %s119
      %s136 = sphi 0, %s120
      %s140 = sphi 0, %s140
      %s142 = sphi 0, %s140
      %s143 = sphi 0, %s142
      %s157 = sphi 0, %s143
      %s161 = sphi 0, %s161
      %s163 = sphi 0, %s161
      %s164 = sphi 0, %s163
      %s178 = sphi 0, %s164
      %s182 = sphi 0, %s182
      %s184 = sphi 0, %s182
      %s185 = sphi 0, %s184
      %s199 = sphi 0, %s185
      %s203 = sphi 0, %s203
      %s205 = sphi 0, %s203
      %s206 = sphi 0, %s205
      %s220 = sphi 0, %s206
      %s226 = sphi 0, %s228
      %s229 = sphi 0, %s226
      %s230 = sphi 0, %s229
      %s246 = sphi 0, %s230
    $region4: #{encoder_block_forward.4} parent=1 // loop_header_branch
      %31 = sbr.rel (%p29) target = $region8
    $region5: #{encoder_block_forward.4} parent=1 // loop_body
      %s33 = ssub.s32 %s28, 1
      %s34 = ssub.s32 %s28, 2
      %s35 = sadd.s32 %s28, 1
      %s36 = ssub.s32 %s28, %s35
      %p37 = scmp.eq.s32.totalorder %s36, 0
      %s39 = sadd.s32 %s38, 1
      %s40 = scalar_select %p37, %s38, %s39
      %p43 = pneg %p37
      %p44 = scmp.eq.s32.totalorder %s28, 1
      %p45 = por %p43, %p44
      %p46 = scmp.ne.s32.totalorder %s38, %s41
      %p47 = scmp.eq.s32.totalorder %s28, 0
      %p48 = por %p46, %p47
      %p49 = scmp.ne.s32.totalorder %s38, %s41
      %p50 = scmp.eq.s32.totalorder %s33, 1
      %p51 = por %p49, %p50
      %p52 = scmp.ne.s32.totalorder %s41, %s42
      %p53 = scmp.eq.s32.totalorder %s33, 0
      %p54 = por %p52, %p53
      %p55 = scmp.ne.s32.totalorder %s41, %s42
      %p56 = scmp.eq.s32.totalorder %s34, 1
      %p57 = por %p55, %p56
      %p59 = scmp.ne.s32.totalorder %s42, %s58
      %p60 = scmp.eq.s32.totalorder %s34, 0
      %p61 = por %p59, %p60
      %s62 = ssub.s32 %s28, %s35
      %p63 = scmp.eq.s32.totalorder %s62, 0
      %s65 = sadd.s32 %s64, 1
      %s66 = scalar_select %p63, %s64, %s65
      %p69 = pneg %p63
      %p70 = scmp.eq.s32.totalorder %s28, 1
      %p71 = por %p69, %p70
      %p72 = scmp.ne.s32.totalorder %s64, %s67
      %p73 = scmp.eq.s32.totalorder %s28, 0
      %p74 = por %p72, %p73
      %p75 = scmp.ne.s32.totalorder %s64, %s67
      %p76 = scmp.eq.s32.totalorder %s33, 1
      %p77 = por %p75, %p76
      %p78 = scmp.ne.s32.totalorder %s67, %s68
      %p79 = scmp.eq.s32.totalorder %s33, 0
      %p80 = por %p78, %p79
      %p81 = scmp.ne.s32.totalorder %s67, %s68
      %p82 = scmp.eq.s32.totalorder %s34, 1
      %p83 = por %p81, %p82
      %p85 = scmp.ne.s32.totalorder %s68, %s84
      %p86 = scmp.eq.s32.totalorder %s34, 0
      %p87 = por %p85, %p86
      %s88 = ssub.s32 %s28, %s35
      %p89 = scmp.eq.s32.totalorder %s88, 0
      %s91 = sadd.s32 %s90, 1
      %s92 = scalar_select %p89, %s90, %s91
      %p95 = pneg %p89
      %p96 = scmp.eq.s32.totalorder %s28, 1
      %p97 = por %p95, %p96
      %p98 = scmp.ne.s32.totalorder %s90, %s93
      %p99 = scmp.eq.s32.totalorder %s28, 0
      %p100 = por %p98, %p99
      %p101 = scmp.ne.s32.totalorder %s90, %s93
      %p102 = scmp.eq.s32.totalorder %s33, 1
      %p103 = por %p101, %p102
      %p104 = scmp.ne.s32.totalorder %s93, %s94
      %p105 = scmp.eq.s32.totalorder %s33, 0
      %p106 = por %p104, %p105
      %p107 = scmp.ne.s32.totalorder %s93, %s94
      %p108 = scmp.eq.s32.totalorder %s34, 1
      %p109 = por %p107, %p108
      %p111 = scmp.ne.s32.totalorder %s94, %s110
      %p112 = scmp.eq.s32.totalorder %s34, 0
      %p113 = por %p111, %p112
      %s114 = ssub.s32 %s28, %s35
      %p115 = scmp.eq.s32.totalorder %s114, 0
      %s117 = sadd.s32 %s116, 1
      %s118 = scalar_select %p115, %s116, %s117
      %p121 = pneg %p115
      %p122 = scmp.eq.s32.totalorder %s28, 1
      %p123 = por %p121, %p122
      %p124 = scmp.ne.s32.totalorder %s116, %s119
      %p125 = scmp.eq.s32.totalorder %s28, 0
      %p126 = por %p124, %p125
      %p127 = scmp.ne.s32.totalorder %s116, %s119
      %p128 = scmp.eq.s32.totalorder %s33, 1
      %p129 = por %p127, %p128
      %p130 = scmp.ne.s32.totalorder %s119, %s120
      %p131 = scmp.eq.s32.totalorder %s33, 0
      %p132 = por %p130, %p131
      %p133 = scmp.ne.s32.totalorder %s119, %s120
      %p134 = scmp.eq.s32.totalorder %s34, 1
      %p135 = por %p133, %p134
      %p137 = scmp.ne.s32.totalorder %s120, %s136
      %p138 = scmp.eq.s32.totalorder %s34, 0
      %p139 = por %p137, %p138
      %s141 = sadd.s32 %s140, 1
      %p144 = scmp.eq.s32.totalorder %s28, 1
      %p145 = scmp.ne.s32.totalorder %s140, %s142
      %p146 = scmp.eq.s32.totalorder %s28, 0
      %p147 = por %p145, %p146
      %p148 = scmp.ne.s32.totalorder %s140, %s142
      %p149 = scmp.eq.s32.totalorder %s33, 1
      %p150 = por %p148, %p149
      %p151 = scmp.ne.s32.totalorder %s142, %s143
      %p152 = scmp.eq.s32.totalorder %s33, 0
      %p153 = por %p151, %p152
      %p154 = scmp.ne.s32.totalorder %s142, %s143
      %p155 = scmp.eq.s32.totalorder %s34, 1
      %p156 = por %p154, %p155
      %p158 = scmp.ne.s32.totalorder %s143, %s157
      %p159 = scmp.eq.s32.totalorder %s34, 0
      %p160 = por %p158, %p159
      %s162 = sadd.s32 %s161, 1
      %p165 = scmp.eq.s32.totalorder %s28, 1
      %p166 = scmp.ne.s32.totalorder %s161, %s163
      %p167 = scmp.eq.s32.totalorder %s28, 0
      %p168 = por %p166, %p167
      %p169 = scmp.ne.s32.totalorder %s161, %s163
      %p170 = scmp.eq.s32.totalorder %s33, 1
      %p171 = por %p169, %p170
      %p172 = scmp.ne.s32.totalorder %s163, %s164
      %p173 = scmp.eq.s32.totalorder %s33, 0
      %p174 = por %p172, %p173
      %p175 = scmp.ne.s32.totalorder %s163, %s164
      %p176 = scmp.eq.s32.totalorder %s34, 1
      %p177 = por %p175, %p176
      %p179 = scmp.ne.s32.totalorder %s164, %s178
      %p180 = scmp.eq.s32.totalorder %s34, 0
      %p181 = por %p179, %p180
      %s183 = sadd.s32 %s182, 1
      %p186 = scmp.eq.s32.totalorder %s28, 1
      %p187 = scmp.ne.s32.totalorder %s182, %s184
      %p188 = scmp.eq.s32.totalorder %s28, 0
      %p189 = por %p187, %p188
      %p190 = scmp.ne.s32.totalorder %s182, %s184
      %p191 = scmp.eq.s32.totalorder %s33, 1
      %p192 = por %p190, %p191
      %p193 = scmp.ne.s32.totalorder %s184, %s185
      %p194 = scmp.eq.s32.totalorder %s33, 0
      %p195 = por %p193, %p194
      %p196 = scmp.ne.s32.totalorder %s184, %s185
      %p197 = scmp.eq.s32.totalorder %s34, 1
      %p198 = por %p196, %p197
      %p200 = scmp.ne.s32.totalorder %s185, %s199
      %p201 = scmp.eq.s32.totalorder %s34, 0
      %p202 = por %p200, %p201
      %s204 = sadd.s32 %s203, 1
      %p207 = scmp.eq.s32.totalorder %s28, 1
      %p208 = scmp.ne.s32.totalorder %s203, %s205
      %p209 = scmp.eq.s32.totalorder %s28, 0
      %p210 = por %p208, %p209
      %p211 = scmp.ne.s32.totalorder %s203, %s205
      %p212 = scmp.eq.s32.totalorder %s33, 1
      %p213 = por %p211, %p212
      %p214 = scmp.ne.s32.totalorder %s205, %s206
      %p215 = scmp.eq.s32.totalorder %s33, 0
      %p216 = por %p214, %p215
      %p217 = scmp.ne.s32.totalorder %s205, %s206
      %p218 = scmp.eq.s32.totalorder %s34, 1
      %p219 = por %p217, %p218
      %p221 = scmp.ne.s32.totalorder %s206, %s220
      %p222 = scmp.eq.s32.totalorder %s34, 0
      %p223 = por %p221, %p222
      %s224 = ssub.s32 %s28, %s35
      %p225 = scmp.eq.s32.totalorder %s224, 0
      %s227 = sadd.s32 %s226, 1
      %s228 = scalar_select %p225, %s226, %s227
      %p231 = pneg %p225
      %p232 = scmp.eq.s32.totalorder %s28, 1
      %p233 = por %p231, %p232
      %p234 = scmp.ne.s32.totalorder %s226, %s229
      %p235 = scmp.eq.s32.totalorder %s28, 0
      %p236 = por %p234, %p235
      %p237 = scmp.ne.s32.totalorder %s226, %s229
      %p238 = scmp.eq.s32.totalorder %s33, 1
      %p239 = por %p237, %p238
      %p240 = scmp.ne.s32.totalorder %s229, %s230
      %p241 = scmp.eq.s32.totalorder %s33, 0
      %p242 = por %p240, %p241
      %p243 = scmp.ne.s32.totalorder %s229, %s230
      %p244 = scmp.eq.s32.totalorder %s34, 1
      %p245 = por %p243, %p244
      %p247 = scmp.ne.s32.totalorder %s230, %s246
      %p248 = scmp.eq.s32.totalorder %s34, 0
      %p249 = por %p247, %p248
      %p250 = scmp.le.s32.totalorder 1, %s28
      %p251 = scmp.lt.s32.totalorder %s28, 3
      %p252 = pnand %p250, %p251
      %p253 = pneg %p252
      // Predicated region
      $region9: #{encoder_block_forward.4} parent=5 // pred_check
        _
      $region10: #{encoder_block_forward.4} parent=5 // pred_check_branch
        %255 = sbr.rel (%p252) target = $region12
      $region11: #{encoder_block_forward.4} parent=5 // pred_region
        %s256 = ssub.s32 %s28, 1
        // Predicated region
        $region13: #{encoder_block_forward.4} parent=11 // pred_check
          %p257 = pneg %p153
        $region14: #{encoder_block_forward.4} parent=11 // pred_check_branch
          %259 = sbr.rel (%p257) target = $region16
        $region15: #{encoder_block_forward.4} parent=11 // pred_region
          %s261 = ssub.s32 256, 256
          %262 = vsyncadd [#allocation9], %s261
          %s263 = sshll.u32 [#allocation10], 4
          %s264 = int_to_ptr.vmem [resolvable:$true] %s263
          %269 = dma.hbm_to_vmem [thread:$0]  %s4, 256, %s264, [#allocation9], 64, 64, 4
        $region16: #{encoder_block_forward.4} parent=11 // pred_fallthru
          _
        // Predicated region
        $region17: #{encoder_block_forward.4} parent=11 // pred_check
          %p270 = pneg %p174
        $region18: #{encoder_block_forward.4} parent=11 // pred_check_branch
          %272 = sbr.rel (%p270) target = $region20
        $region19: #{encoder_block_forward.4} parent=11 // pred_region
          %s274 = ssub.s32 16, 16
          %275 = vsyncadd [#allocation12], %s274
          %s277 = sshll.u32 [#allocation11], 4
          %s278 = int_to_ptr.vmem [resolvable:$true] %s277
          %280 = dma.hbm_to_vmem [thread:$0]  %s5, 16, %s278, [#allocation12]
        $region20: #{encoder_block_forward.4} parent=11 // pred_fallthru
          _
        // Predicated region
        $region21: #{encoder_block_forward.4} parent=11 // pred_check
          %p281 = pneg %p195
        $region22: #{encoder_block_forward.4} parent=11 // pred_check_branch
          %283 = sbr.rel (%p281) target = $region24
        $region23: #{encoder_block_forward.4} parent=11 // pred_region
          %s285 = ssub.s32 16, 16
          %286 = vsyncadd [#allocation12], %s285
          %s288 = sshll.u32 [#allocation13], 4
          %s289 = int_to_ptr.vmem [resolvable:$true] %s288
          %291 = dma.hbm_to_vmem [thread:$0]  %s6, 16, %s289, [#allocation12]
        $region24: #{encoder_block_forward.4} parent=11 // pred_fallthru
          _
        // Predicated region
        $region25: #{encoder_block_forward.4} parent=11 // pred_check
          %p292 = pneg %p216
        $region26: #{encoder_block_forward.4} parent=11 // pred_check_branch
          %294 = sbr.rel (%p292) target = $region28
        $region27: #{encoder_block_forward.4} parent=11 // pred_region
          %s296 = ssub.s32 16, 16
          %297 = vsyncadd [#allocation15], %s296
          %s299 = sshll.u32 [#allocation14], 4
          %s300 = int_to_ptr.vmem [resolvable:$true] %s299
          %302 = dma.hbm_to_vmem [thread:$0]  %s7, 16, %s300, [#allocation15]
        $region28: #{encoder_block_forward.4} parent=11 // pred_fallthru
          _
      $region12: #{encoder_block_forward.4} parent=5 // pred_fallthru
        _
      %p303 = scmp.lt.s32.totalorder %s28, 2
      // Predicated region
      $region29: #{encoder_block_forward.4} parent=5 // pred_check
        %p304 = pneg %p303
      $region30: #{encoder_block_forward.4} parent=5 // pred_check_branch
        %306 = sbr.rel (%p304) target = $region32
      $region31: #{encoder_block_forward.4} parent=5 // pred_region
        // Predicated region
        $region33: #{encoder_block_forward.4} parent=31 // pred_check
          %p307 = pneg %p48
        $region34: #{encoder_block_forward.4} parent=31 // pred_check_branch
          %309 = sbr.rel (%p307) target = $region36
        $region35: #{encoder_block_forward.4} parent=31 // pred_region
          %s310 = sand.u32 %s38, 1
          %s311 = scalar_lea.sflag [#allocation3], %s310
          %s312 = sand.u32 %s38, 1
          %s313 = smul.addr %s312, 8
          %s314 = scalar_lea.vmem [#allocation2], %s313
          %s316 = ssub.s32 128, 128
          %317 = vsyncadd %s311, %s316
          %s318 = smul.addr %s28, 128
          %s319 = scalar_lea.hbm %s0, %s318
          %s321 = sshll.u32 %s314, 4
          %s322 = int_to_ptr.vmem [resolvable:$true] %s321
          %324 = dma.hbm_to_vmem [thread:$0]  %s319, 128, %s322, %s311
        $region36: #{encoder_block_forward.4} parent=31 // pred_fallthru
          _
        // Predicated region
        $region37: #{encoder_block_forward.4} parent=31 // pred_check
          %p325 = pneg %p74
        $region38: #{encoder_block_forward.4} parent=31 // pred_check_branch
          %327 = sbr.rel (%p325) target = $region40
        $region39: #{encoder_block_forward.4} parent=31 // pred_region
          %s328 = sand.u32 %s28, 1
          %s329 = scalar_lea.sflag [#allocation6], %s328
          %s330 = sand.u32 %s64, 1
          %s331 = smul.addr %s330, 16
          %s332 = scalar_lea.vmem [#allocation5], %s331
          %s334 = ssub.s32 256, 256
          %335 = vsyncadd %s329, %s334
          %s336 = smul.addr %s28, 4
          %s337 = smul.addr %s336, 64
          %s338 = scalar_lea.hbm %s1, %s337
          %s339 = sshll.u32 %s332, 4
          %s340 = int_to_ptr.vmem [resolvable:$true] %s339
          %345 = dma.hbm_to_vmem [thread:$0]  %s338, 256, %s340, %s329, 64, 64, 4
        $region40: #{encoder_block_forward.4} parent=31 // pred_fallthru
          _
        // Predicated region
        $region41: #{encoder_block_forward.4} parent=31 // pred_check
          %p346 = pneg %p100
        $region42: #{encoder_block_forward.4} parent=31 // pred_check_branch
          %348 = sbr.rel (%p346) target = $region44
        $region43: #{encoder_block_forward.4} parent=31 // pred_region
          %s349 = sand.u32 %s28, 1
          %s350 = scalar_lea.sflag [#allocation6], %s349
          %s351 = sand.u32 %s90, 1
          %s352 = smul.addr %s351, 16
          %s353 = scalar_lea.vmem [#allocation7], %s352
          %s355 = ssub.s32 256, 256
          %356 = vsyncadd %s350, %s355
          %s357 = smul.addr %s28, 4
          %s358 = smul.addr %s357, 64
          %s359 = scalar_lea.hbm %s2, %s358
          %s360 = sshll.u32 %s353, 4
          %s361 = int_to_ptr.vmem [resolvable:$true] %s360
          %366 = dma.hbm_to_vmem [thread:$0]  %s359, 256, %s361, %s350, 64, 64, 4
        $region44: #{encoder_block_forward.4} parent=31 // pred_fallthru
          _
        // Predicated region
        $region45: #{encoder_block_forward.4} parent=31 // pred_check
          %p367 = pneg %p126
        $region46: #{encoder_block_forward.4} parent=31 // pred_check_branch
          %369 = sbr.rel (%p367) target = $region48
        $region47: #{encoder_block_forward.4} parent=31 // pred_region
          %s370 = sand.u32 %s28, 1
          %s371 = scalar_lea.sflag [#allocation9], %s370
          %s372 = sand.u32 %s116, 1
          %s373 = smul.addr %s372, 16
          %s374 = scalar_lea.vmem [#allocation8], %s373
          %s376 = ssub.s32 256, 256
          %377 = vsyncadd %s371, %s376
          %s378 = smul.addr %s28, 4
          %s379 = smul.addr %s378, 64
          %s380 = scalar_lea.hbm %s3, %s379
          %s381 = sshll.u32 %s374, 4
          %s382 = int_to_ptr.vmem [resolvable:$true] %s381
          %387 = dma.hbm_to_vmem [thread:$0]  %s380, 256, %s382, %s371, 64, 64, 4
        $region48: #{encoder_block_forward.4} parent=31 // pred_fallthru
          _
      $region32: #{encoder_block_forward.4} parent=5 // pred_fallthru
        _
      %p388 = scmp.le.s32.totalorder 1, %s28
      %p389 = scmp.lt.s32.totalorder %s28, 3
      %p390 = pnand %p388, %p389
      %p391 = pneg %p390
      // Predicated region
      $region49: #{encoder_block_forward.4} parent=5 // pred_check
        _
      $region50: #{encoder_block_forward.4} parent=5 // pred_check_branch
        %393 = sbr.rel (%p390) target = $region52
      $region51: #{encoder_block_forward.4} parent=5 // pred_region
        %s394 = ssub.s32 %s28, 1
        %s395 = sand.u32 %s41, 1
        %s396 = scalar_lea.sflag [#allocation3], %s395
        %s397 = sand.u32 %s41, 1
        %s398 = smul.addr %s397, 8
        %s399 = scalar_lea.vmem [#allocation2], %s398
        // Predicated region
        $region53: #{encoder_block_forward.4} parent=51 // pred_check
          %p400 = pneg %p54
        $region54: #{encoder_block_forward.4} parent=51 // pred_check_branch
          %402 = sbr.rel (%p400) target = $region56
        $region55: #{encoder_block_forward.4} parent=51 // pred_region
          %403 = dma.done %s396, 128
        $region56: #{encoder_block_forward.4} parent=51 // pred_fallthru
          _
        %s404 = sand.u32 %s33, 1
        %s405 = scalar_lea.sflag [#allocation6], %s404
        %s406 = sand.u32 %s67, 1
        %s407 = smul.addr %s406, 16
        %s408 = scalar_lea.vmem [#allocation5], %s407
        // Predicated region
        $region57: #{encoder_block_forward.4} parent=51 // pred_check
          %p409 = pneg %p80
        $region58: #{encoder_block_forward.4} parent=51 // pred_check_branch
          %411 = sbr.rel (%p409) target = $region60
        $region59: #{encoder_block_forward.4} parent=51 // pred_region
          %412 = dma.done %s405, 256
        $region60: #{encoder_block_forward.4} parent=51 // pred_fallthru
          _
        %s413 = sand.u32 %s33, 1
        %s414 = scalar_lea.sflag [#allocation6], %s413
        %s415 = sand.u32 %s93, 1
        %s416 = smul.addr %s415, 16
        %s417 = scalar_lea.vmem [#allocation7], %s416
        // Predicated region
        $region61: #{encoder_block_forward.4} parent=51 // pred_check
          %p418 = pneg %p106
        $region62: #{encoder_block_forward.4} parent=51 // pred_check_branch
          %420 = sbr.rel (%p418) target = $region64
        $region63: #{encoder_block_forward.4} parent=51 // pred_region
          %421 = dma.done %s414, 256
        $region64: #{encoder_block_forward.4} parent=51 // pred_fallthru
          _
        %s422 = sand.u32 %s33, 1
        %s423 = scalar_lea.sflag [#allocation9], %s422
        %s424 = sand.u32 %s119, 1
        %s425 = smul.addr %s424, 16
        %s426 = scalar_lea.vmem [#allocation8], %s425
        // Predicated region
        $region65: #{encoder_block_forward.4} parent=51 // pred_check
          %p427 = pneg %p132
        $region66: #{encoder_block_forward.4} parent=51 // pred_check_branch
          %429 = sbr.rel (%p427) target = $region68
        $region67: #{encoder_block_forward.4} parent=51 // pred_region
          %430 = dma.done %s423, 256
        $region68: #{encoder_block_forward.4} parent=51 // pred_fallthru
          _
        // Predicated region
        $region69: #{encoder_block_forward.4} parent=51 // pred_check
          %p431 = pneg %p153
        $region70: #{encoder_block_forward.4} parent=51 // pred_check_branch
          %433 = sbr.rel (%p431) target = $region72
        $region71: #{encoder_block_forward.4} parent=51 // pred_region
          %434 = dma.done [#allocation9], 256
        $region72: #{encoder_block_forward.4} parent=51 // pred_fallthru
          _
        // Predicated region
        $region73: #{encoder_block_forward.4} parent=51 // pred_check
          %p435 = pneg %p174
        $region74: #{encoder_block_forward.4} parent=51 // pred_check_branch
          %437 = sbr.rel (%p435) target = $region76
        $region75: #{encoder_block_forward.4} parent=51 // pred_region
          %438 = dma.done [#allocation12], 16
        $region76: #{encoder_block_forward.4} parent=51 // pred_fallthru
          _
        // Predicated region
        $region77: #{encoder_block_forward.4} parent=51 // pred_check
          %p439 = pneg %p195
        $region78: #{encoder_block_forward.4} parent=51 // pred_check_branch
          %441 = sbr.rel (%p439) target = $region80
        $region79: #{encoder_block_forward.4} parent=51 // pred_region
          %442 = dma.done [#allocation12], 16
        $region80: #{encoder_block_forward.4} parent=51 // pred_fallthru
          _
        // Predicated region
        $region81: #{encoder_block_forward.4} parent=51 // pred_check
          %p443 = pneg %p216
        $region82: #{encoder_block_forward.4} parent=51 // pred_check_branch
          %445 = sbr.rel (%p443) target = $region84
        $region83: #{encoder_block_forward.4} parent=51 // pred_region
          %446 = dma.done [#allocation15], 16
        $region84: #{encoder_block_forward.4} parent=51 // pred_fallthru
          _
        %s447 = sand.u32 %s41, 1
        %s448 = scalar_lea.sflag [#allocation3], %s447
        %s449 = sand.u32 %s41, 1
        %s450 = smul.addr %s449, 8
        %s451 = scalar_lea.vmem [#allocation2], %s450
        %p452 = pneg %p54
        %p453 = pneg %p51
        %s454 = sand.u32 %s33, 1
        %s455 = scalar_lea.sflag [#allocation6], %s454
        %s456 = sand.u32 %s67, 1
        %s457 = smul.addr %s456, 16
        %s458 = scalar_lea.vmem [#allocation5], %s457
        %p459 = pneg %p80
        %p460 = pneg %p77
        %s461 = sand.u32 %s33, 1
        %s462 = scalar_lea.sflag [#allocation6], %s461
        %s463 = sand.u32 %s93, 1
        %s464 = smul.addr %s463, 16
        %s465 = scalar_lea.vmem [#allocation7], %s464
        %p466 = pneg %p106
        %p467 = pneg %p103
        %s468 = sand.u32 %s33, 1
        %s469 = scalar_lea.sflag [#allocation9], %s468
        %s470 = sand.u32 %s119, 1
        %s471 = smul.addr %s470, 16
        %s472 = scalar_lea.vmem [#allocation8], %s471
        %p473 = pneg %p132
        %p474 = pneg %p129
        %p475 = pneg %p153
        %p476 = pneg %p150
        %p477 = pneg %p174
        %p478 = pneg %p171
        %p479 = pneg %p195
        %p480 = pneg %p192
        %p481 = pneg %p216
        %p482 = pneg %p213
        %p483 = pneg %p242
        %p484 = pneg %p239
        %s485 = sand.u32 %s229, 1
        %s486 = scalar_lea.sflag [#allocation4], %s485
        %s487 = sand.u32 %s229, 1
        %s488 = smul.addr %s487, 8
        %s489 = scalar_lea.vmem [#allocation16], %s488
        %v491 = vld [vmem:[%s408] sm:$0xf]
        %v492 = vld [vmem:[%s408 + $0x4] sm:$0xf]
        %v493 = vld [vmem:[%s408 + $0x8] sm:$0xf]
        %v494 = vld [vmem:[%s408 + $0xc] sm:$0xf]
        %v495 = vld [vmem:[%s417] sm:$0xf]
        %v496 = vld [vmem:[%s417 + $0x4] sm:$0xf]
        %v497 = vld [vmem:[%s417 + $0x8] sm:$0xf]
        %v498 = vld [vmem:[%s417 + $0xc] sm:$0xf]
        %v499 = vld [vmem:[%s426] sm:$0xf]
        %v500 = vld [vmem:[%s426 + $0x4] sm:$0xf]
        %v501 = vld [vmem:[%s426 + $0x8] sm:$0xf]
        %v502 = vld [vmem:[%s426 + $0xc] sm:$0xf]
        %vm503 = vcmask 64512
        %v505 = vsel %vm503, %v491, 0
        %v508 = vsel %vm503, %v495, 0
        %510 = vmatprep.subr.bf16.mxu0 0
        %511 = vmatpush1.bf16.xpose.msra.mxu0 %v508
        %512 = vmatprep.subr.bf16.mxu0 0
        %513 = vmatpush1.bf16.xpose.msra.mxu0 0
        %514 = vmatprep.subr.bf16.mxu0 0
        %515 = vmatpush1.bf16.xpose.msra.mxu0 0
        %516 = vmatprep.subr.bf16.mxu0 0
        %517 = vmatpush1.bf16.xpose.msra.mxu0 0
        %518 = vmatprep.subr.bf16.mxu0 0
        %519 = vmatpush1.bf16.xpose.msra.mxu0 0
        %520 = vmatprep.subr.bf16.mxu0 0
        %521 = vmatpush1.bf16.xpose.msra.mxu0 0
        %522 = vmatprep.subr.bf16.mxu0 0
        %523 = vmatpush1.bf16.xpose.msra.mxu0 0
        %524 = vmatprep.subr.bf16.mxu0 0
        %525 = vmatpush1.bf16.xpose.msra.mxu0 0
        %526 = vmatprep.subr.bf16.mxu0 0
        %527 = vmatpush1.bf16.xpose.msra.mxu0 0
        %528 = vmatprep.subr.bf16.mxu0 0
        %529 = vmatpush1.bf16.xpose.msra.mxu0 0
        %530 = vmatprep.subr.bf16.mxu0 0
        %531 = vmatpush1.bf16.xpose.msra.mxu0 0
        %532 = vmatprep.subr.bf16.mxu0 0
        %533 = vmatpush1.bf16.xpose.msra.mxu0 0
        %534 = vmatprep.subr.bf16.mxu0 0
        %535 = vmatpush1.bf16.xpose.msra.mxu0 0
        %536 = vmatprep.subr.bf16.mxu0 0
        %537 = vmatpush1.bf16.xpose.msra.mxu0 0
        %538 = vmatprep.subr.bf16.mxu0 0
        %539 = vmatpush1.bf16.xpose.msra.mxu0 0
        %540 = vmatprep.subr.bf16.mxu0 0
        %541 = vmatpush1.bf16.xpose.msra.mxu0 0
        %542 = vmatprep.mubr.bf16.mxu0 0
        %543 = vmatmul.mubr.bf16.gmra.mrb[0].mxu0 %v505
        %v544 = vpop.f32.mrb[0].mxu0
        %v545 = vadd.f32 0.0, %v544
        %v546 = vpop.f32.mrb[0].mxu0
        %v547 = vpop.f32.mrb[0].mxu0
        %v548 = vpop.f32.mrb[0].mxu0
        %549 = vdwg.mxu0
        %v551 = vsel %vm503, %v492, 0
        %v554 = vsel %vm503, %v496, 0
        %556 = vmatprep.subr.bf16.mxu0 0
        %557 = vmatpush1.bf16.xpose.msra.mxu0 %v554
        %558 = vmatprep.subr.bf16.mxu0 0
        %559 = vmatpush1.bf16.xpose.msra.mxu0 0
        %560 = vmatprep.subr.bf16.mxu0 0
        %561 = vmatpush1.bf16.xpose.msra.mxu0 0
        %562 = vmatprep.subr.bf16.mxu0 0
        %563 = vmatpush1.bf16.xpose.msra.mxu0 0
        %564 = vmatprep.subr.bf16.mxu0 0
        %565 = vmatpush1.bf16.xpose.msra.mxu0 0
        %566 = vmatprep.subr.bf16.mxu0 0
        %567 = vmatpush1.bf16.xpose.msra.mxu0 0
        %568 = vmatprep.subr.bf16.mxu0 0
        %569 = vmatpush1.bf16.xpose.msra.mxu0 0
        %570 = vmatprep.subr.bf16.mxu0 0
        %571 = vmatpush1.bf16.xpose.msra.mxu0 0
        %572 = vmatprep.subr.bf16.mxu0 0
        %573 = vmatpush1.bf16.xpose.msra.mxu0 0
        %574 = vmatprep.subr.bf16.mxu0 0
        %575 = vmatpush1.bf16.xpose.msra.mxu0 0
        %576 = vmatprep.subr.bf16.mxu0 0
        %577 = vmatpush1.bf16.xpose.msra.mxu0 0
        %578 = vmatprep.subr.bf16.mxu0 0
        %579 = vmatpush1.bf16.xpose.msra.mxu0 0
        %580 = vmatprep.subr.bf16.mxu0 0
        %581 = vmatpush1.bf16.xpose.msra.mxu0 0
        %582 = vmatprep.subr.bf16.mxu0 0
        %583 = vmatpush1.bf16.xpose.msra.mxu0 0
        %584 = vmatprep.subr.bf16.mxu0 0
        %585 = vmatpush1.bf16.xpose.msra.mxu0 0
        %586 = vmatprep.subr.bf16.mxu0 0
        %587 = vmatpush1.bf16.xpose.msra.mxu0 0
        %588 = vmatprep.mubr.bf16.mxu0 0
        %589 = vmatmul.mubr.bf16.gmra.mrb[0].mxu0 %v551
        %v590 = vpop.f32.mrb[0].mxu0
        %v591 = vadd.f32 0.0, %v590
        %v592 = vpop.f32.mrb[0].mxu0
        %v593 = vpop.f32.mrb[0].mxu0
        %v594 = vpop.f32.mrb[0].mxu0
        %595 = vdwg.mxu0
        %v597 = vsel %vm503, %v493, 0
        %v600 = vsel %vm503, %v497, 0
        %602 = vmatprep.subr.bf16.mxu0 0
        %603 = vmatpush1.bf16.xpose.msra.mxu0 %v600
        %604 = vmatprep.subr.bf16.mxu0 0
        %605 = vmatpush1.bf16.xpose.msra.mxu0 0
        %606 = vmatprep.subr.bf16.mxu0 0
        %607 = vmatpush1.bf16.xpose.msra.mxu0 0
        %608 = vmatprep.subr.bf16.mxu0 0
        %609 = vmatpush1.bf16.xpose.msra.mxu0 0
        %610 = vmatprep.subr.bf16.mxu0 0
        %611 = vmatpush1.bf16.xpose.msra.mxu0 0
        %612 = vmatprep.subr.bf16.mxu0 0
        %613 = vmatpush1.bf16.xpose.msra.mxu0 0
        %614 = vmatprep.subr.bf16.mxu0 0
        %615 = vmatpush1.bf16.xpose.msra.mxu0 0
        %616 = vmatprep.subr.bf16.mxu0 0
        %617 = vmatpush1.bf16.xpose.msra.mxu0 0
        %618 = vmatprep.subr.bf16.mxu0 0
        %619 = vmatpush1.bf16.xpose.msra.mxu0 0
        %620 = vmatprep.subr.bf16.mxu0 0
        %621 = vmatpush1.bf16.xpose.msra.mxu0 0
        %622 = vmatprep.subr.bf16.mxu0 0
        %623 = vmatpush1.bf16.xpose.msra.mxu0 0
        %624 = vmatprep.subr.bf16.mxu0 0
        %625 = vmatpush1.bf16.xpose.msra.mxu0 0
        %626 = vmatprep.subr.bf16.mxu0 0
        %627 = vmatpush1.bf16.xpose.msra.mxu0 0
        %628 = vmatprep.subr.bf16.mxu0 0
        %629 = vmatpush1.bf16.xpose.msra.mxu0 0
        %630 = vmatprep.subr.bf16.mxu0 0
        %631 = vmatpush1.bf16.xpose.msra.mxu0 0
        %632 = vmatprep.subr.bf16.mxu0 0
        %633 = vmatpush1.bf16.xpose.msra.mxu0 0
        %634 = vmatprep.mubr.bf16.mxu0 0
        %635 = vmatmul.mubr.bf16.gmra.mrb[0].mxu0 %v597
        %v636 = vpop.f32.mrb[0].mxu0
        %v637 = vadd.f32 0.0, %v636
        %v638 = vpop.f32.mrb[0].mxu0
        %v639 = vpop.f32.mrb[0].mxu0
        %v640 = vpop.f32.mrb[0].mxu0
        %641 = vdwg.mxu0
        %v643 = vsel %vm503, %v494, 0
        %v646 = vsel %vm503, %v498, 0
        %648 = vmatprep.subr.bf16.mxu0 0
        %649 = vmatpush1.bf16.xpose.msra.mxu0 %v646
        %650 = vmatprep.subr.bf16.mxu0 0
        %651 = vmatpush1.bf16.xpose.msra.mxu0 0
        %652 = vmatprep.subr.bf16.mxu0 0
        %653 = vmatpush1.bf16.xpose.msra.mxu0 0
        %654 = vmatprep.subr.bf16.mxu0 0
        %655 = vmatpush1.bf16.xpose.msra.mxu0 0
        %656 = vmatprep.subr.bf16.mxu0 0
        %657 = vmatpush1.bf16.xpose.msra.mxu0 0
        %658 = vmatprep.subr.bf16.mxu0 0
        %659 = vmatpush1.bf16.xpose.msra.mxu0 0
        %660 = vmatprep.subr.bf16.mxu0 0
        %661 = vmatpush1.bf16.xpose.msra.mxu0 0
        %662 = vmatprep.subr.bf16.mxu0 0
        %663 = vmatpush1.bf16.xpose.msra.mxu0 0
        %664 = vmatprep.subr.bf16.mxu0 0
        %665 = vmatpush1.bf16.xpose.msra.mxu0 0
        %666 = vmatprep.subr.bf16.mxu0 0
        %667 = vmatpush1.bf16.xpose.msra.mxu0 0
        %668 = vmatprep.subr.bf16.mxu0 0
        %669 = vmatpush1.bf16.xpose.msra.mxu0 0
        %670 = vmatprep.subr.bf16.mxu0 0
        %671 = vmatpush1.bf16.xpose.msra.mxu0 0
        %672 = vmatprep.subr.bf16.mxu0 0
        %673 = vmatpush1.bf16.xpose.msra.mxu0 0
        %674 = vmatprep.subr.bf16.mxu0 0
        %675 = vmatpush1.bf16.xpose.msra.mxu0 0
        %676 = vmatprep.subr.bf16.mxu0 0
        %677 = vmatpush1.bf16.xpose.msra.mxu0 0
        %678 = vmatprep.subr.bf16.mxu0 0
        %679 = vmatpush1.bf16.xpose.msra.mxu0 0
        %680 = vmatprep.mubr.bf16.mxu0 0
        %681 = vmatmul.mubr.bf16.gmra.mrb[0].mxu0 %v643
        %v682 = vpop.f32.mrb[0].mxu0
        %v683 = vadd.f32 0.0, %v682
        %v684 = vpop.f32.mrb[0].mxu0
        %v685 = vpop.f32.mrb[0].mxu0
        %v686 = vpop.f32.mrb[0].mxu0
        %687 = vdwg.mxu0
        %v688 = vsel %vm503, %v545, -inf
        %689 = vmax.xlane.f32.xlu0 %v688
        %v690 = vpop.xlane.xlu0 %689
        %v691 = vsel %vm503, %v591, -inf
        %692 = vmax.xlane.f32.xlu0 %v691
        %v693 = vpop.xlane.xlu0 %692
        %v694 = vsel %vm503, %v637, -inf
        %695 = vmax.xlane.f32.xlu0 %v694
        %v696 = vpop.xlane.xlu0 %695
        %v697 = vsel %vm503, %v683, -inf
        %698 = vmax.xlane.f32.xlu0 %v697
        %v699 = vpop.xlane.xlu0 %698
        %v700 = vsub.f32 %v545, %v690
        %v701 = vsub.f32 %v591, %v693
        %v702 = vsub.f32 %v637, %v696
        %v703 = vsub.f32 %v683, %v699
        %v704 = vmul.f32 %v700, 1.442695
        %v705 = vpow.pop %v704
        %v706 = vmul.f32 %v701, 1.442695
        %v707 = vpow.pop %v706
        %v708 = vmul.f32 %v702, 1.442695
        %v709 = vpow.pop %v708
        %v710 = vmul.f32 %v703, 1.442695
        %v711 = vpow.pop %v710
        %v712 = vsel %vm503, %v705, 0.0
        %713 = vadd.xlane.f32.xlu0 %v712
        %v714 = vpop.xlane.xlu0 %713
        %v715 = vsel %vm503, %v707, 0.0
        %716 = vadd.xlane.f32.xlu0 %v715
        %v717 = vpop.xlane.xlu0 %716
        %v718 = vsel %vm503, %v709, 0.0
        %719 = vadd.xlane.f32.xlu0 %v718
        %v720 = vpop.xlane.xlu0 %719
        %v721 = vsel %vm503, %v711, 0.0
        %722 = vadd.xlane.f32.xlu0 %v721
        %v723 = vpop.xlane.xlu0 %722
        %v724 = vrcp.pop %v714
        %v725 = vrcp.pop %v717
        %v726 = vrcp.pop %v720
        %v727 = vrcp.pop %v723
        %v728 = vmul.f32 %v705, %v724
        %v729 = vmul.f32 %v707, %v725
        %v730 = vmul.f32 %v709, %v726
        %v731 = vmul.f32 %v711, %v727
        %v732 = vpack.c.bf16 %v728, %v728
        %v733 = vpack.c.bf16 %v729, %v729
        %v734 = vpack.c.bf16 %v730, %v730
        %v735 = vpack.c.bf16 %v731, %v731
        %v737 = vsel %vm503, %v732, 0
        %vm739 = vcmask 1043456
        %v741 = vsel %vm739, %v499, 0
        %743 = vmatprep.subr.bf16.mxu0 0
        %744 = vmatpush1.bf16.msra.mxu0 %v741
        %745 = vmatprep.subr.bf16.mxu0 0
        %746 = vmatpush1.bf16.msra.mxu0 0
        %747 = vmatprep.subr.bf16.mxu0 0
        %748 = vmatpush1.bf16.msra.mxu0 0
        %749 = vmatprep.subr.bf16.mxu0 0
        %750 = vmatpush1.bf16.msra.mxu0 0
        %751 = vmatprep.subr.bf16.mxu0 0
        %752 = vmatpush1.bf16.msra.mxu0 0
        %753 = vmatprep.subr.bf16.mxu0 0
        %754 = vmatpush1.bf16.msra.mxu0 0
        %755 = vmatprep.subr.bf16.mxu0 0
        %756 = vmatpush1.bf16.msra.mxu0 0
        %757 = vmatprep.subr.bf16.mxu0 0
        %758 = vmatpush1.bf16.msra.mxu0 0
        %759 = vmatprep.subr.bf16.mxu0 0
        %760 = vmatpush1.bf16.msra.mxu0 0
        %761 = vmatprep.subr.bf16.mxu0 0
        %762 = vmatpush1.bf16.msra.mxu0 0
        %763 = vmatprep.subr.bf16.mxu0 0
        %764 = vmatpush1.bf16.msra.mxu0 0
        %765 = vmatprep.subr.bf16.mxu0 0
        %766 = vmatpush1.bf16.msra.mxu0 0
        %767 = vmatprep.subr.bf16.mxu0 0
        %768 = vmatpush1.bf16.msra.mxu0 0
        %769 = vmatprep.subr.bf16.mxu0 0
        %770 = vmatpush1.bf16.msra.mxu0 0
        %771 = vmatprep.subr.bf16.mxu0 0
        %772 = vmatpush1.bf16.msra.mxu0 0
        %773 = vmatprep.subr.bf16.mxu0 0
        %774 = vmatpush1.bf16.msra.mxu0 0
        %775 = vmatprep.mubr.bf16.mxu0 0
        %776 = vmatmul.mubr.bf16.gmra.mrb[0].mxu0 %v737
        %v777 = vpop.f32.mrb[0].mxu0
        %v778 = vadd.f32 0.0, %v777
        %v779 = vpop.f32.mrb[0].mxu0
        %v780 = vpop.f32.mrb[0].mxu0
        %v781 = vpop.f32.mrb[0].mxu0
        %782 = vdwg.mxu0
        %v784 = vsel %vm503, %v733, 0
        %v787 = vsel %vm739, %v500, 0
        %789 = vmatprep.subr.bf16.mxu0 0
        %790 = vmatpush1.bf16.msra.mxu0 %v787
        %791 = vmatprep.subr.bf16.mxu0 0
        %792 = vmatpush1.bf16.msra.mxu0 0
        %793 = vmatprep.subr.bf16.mxu0 0
        %794 = vmatpush1.bf16.msra.mxu0 0
        %795 = vmatprep.subr.bf16.mxu0 0
        %796 = vmatpush1.bf16.msra.mxu0 0
        %797 = vmatprep.subr.bf16.mxu0 0
        %798 = vmatpush1.bf16.msra.mxu0 0
        %799 = vmatprep.subr.bf16.mxu0 0
        %800 = vmatpush1.bf16.msra.mxu0 0
        %801 = vmatprep.subr.bf16.mxu0 0
        %802 = vmatpush1.bf16.msra.mxu0 0
        %803 = vmatprep.subr.bf16.mxu0 0
        %804 = vmatpush1.bf16.msra.mxu0 0
        %805 = vmatprep.subr.bf16.mxu0 0
        %806 = vmatpush1.bf16.msra.mxu0 0
        %807 = vmatprep.subr.bf16.mxu0 0
        %808 = vmatpush1.bf16.msra.mxu0 0
        %809 = vmatprep.subr.bf16.mxu0 0
        %810 = vmatpush1.bf16.msra.mxu0 0
        %811 = vmatprep.subr.bf16.mxu0 0
        %812 = vmatpush1.bf16.msra.mxu0 0
        %813 = vmatprep.subr.bf16.mxu0 0
        %814 = vmatpush1.bf16.msra.mxu0 0
        %815 = vmatprep.subr.bf16.mxu0 0
        %816 = vmatpush1.bf16.msra.mxu0 0
        %817 = vmatprep.subr.bf16.mxu0 0
        %818 = vmatpush1.bf16.msra.mxu0 0
        %819 = vmatprep.subr.bf16.mxu0 0
        %820 = vmatpush1.bf16.msra.mxu0 0
        %821 = vmatprep.mubr.bf16.mxu0 0
        %822 = vmatmul.mubr.bf16.gmra.mrb[0].mxu0 %v784
        %v823 = vpop.f32.mrb[0].mxu0
        %v824 = vadd.f32 0.0, %v823
        %v825 = vpop.f32.mrb[0].mxu0
        %v826 = vpop.f32.mrb[0].mxu0
        %v827 = vpop.f32.mrb[0].mxu0
        %828 = vdwg.mxu0
        %v830 = vsel %vm503, %v734, 0
        %v833 = vsel %vm739, %v501, 0
        %835 = vmatprep.subr.bf16.mxu0 0
        %836 = vmatpush1.bf16.msra.mxu0 %v833
        %837 = vmatprep.subr.bf16.mxu0 0
        %838 = vmatpush1.bf16.msra.mxu0 0
        %839 = vmatprep.subr.bf16.mxu0 0
        %840 = vmatpush1.bf16.msra.mxu0 0
        %841 = vmatprep.subr.bf16.mxu0 0
        %842 = vmatpush1.bf16.msra.mxu0 0
        %843 = vmatprep.subr.bf16.mxu0 0
        %844 = vmatpush1.bf16.msra.mxu0 0
        %845 = vmatprep.subr.bf16.mxu0 0
        %846 = vmatpush1.bf16.msra.mxu0 0
        %847 = vmatprep.subr.bf16.mxu0 0
        %848 = vmatpush1.bf16.msra.mxu0 0
        %849 = vmatprep.subr.bf16.mxu0 0
        %850 = vmatpush1.bf16.msra.mxu0 0
        %851 = vmatprep.subr.bf16.mxu0 0
        %852 = vmatpush1.bf16.msra.mxu0 0
        %853 = vmatprep.subr.bf16.mxu0 0
        %854 = vmatpush1.bf16.msra.mxu0 0
        %855 = vmatprep.subr.bf16.mxu0 0
        %856 = vmatpush1.bf16.msra.mxu0 0
        %857 = vmatprep.subr.bf16.mxu0 0
        %858 = vmatpush1.bf16.msra.mxu0 0
        %859 = vmatprep.subr.bf16.mxu0 0
        %860 = vmatpush1.bf16.msra.mxu0 0
        %861 = vmatprep.subr.bf16.mxu0 0
        %862 = vmatpush1.bf16.msra.mxu0 0
        %863 = vmatprep.subr.bf16.mxu0 0
        %864 = vmatpush1.bf16.msra.mxu0 0
        %865 = vmatprep.subr.bf16.mxu0 0
        %866 = vmatpush1.bf16.msra.mxu0 0
        %867 = vmatprep.mubr.bf16.mxu0 0
        %868 = vmatmul.mubr.bf16.gmra.mrb[0].mxu0 %v830
        %v869 = vpop.f32.mrb[0].mxu0
        %v870 = vadd.f32 0.0, %v869
        %v871 = vpop.f32.mrb[0].mxu0
        %v872 = vpop.f32.mrb[0].mxu0
        %v873 = vpop.f32.mrb[0].mxu0
        %874 = vdwg.mxu0
        %v876 = vsel %vm503, %v735, 0
        %v879 = vsel %vm739, %v502, 0
        %881 = vmatprep.subr.bf16.mxu0 0
        %882 = vmatpush1.bf16.msra.mxu0 %v879
        %883 = vmatprep.subr.bf16.mxu0 0
        %884 = vmatpush1.bf16.msra.mxu0 0
        %885 = vmatprep.subr.bf16.mxu0 0
        %886 = vmatpush1.bf16.msra.mxu0 0
        %887 = vmatprep.subr.bf16.mxu0 0
        %888 = vmatpush1.bf16.msra.mxu0 0
        %889 = vmatprep.subr.bf16.mxu0 0
        %890 = vmatpush1.bf16.msra.mxu0 0
        %891 = vmatprep.subr.bf16.mxu0 0
        %892 = vmatpush1.bf16.msra.mxu0 0
        %893 = vmatprep.subr.bf16.mxu0 0
        %894 = vmatpush1.bf16.msra.mxu0 0
        %895 = vmatprep.subr.bf16.mxu0 0
        %896 = vmatpush1.bf16.msra.mxu0 0
        %897 = vmatprep.subr.bf16.mxu0 0
        %898 = vmatpush1.bf16.msra.mxu0 0
        %899 = vmatprep.subr.bf16.mxu0 0
        %900 = vmatpush1.bf16.msra.mxu0 0
        %901 = vmatprep.subr.bf16.mxu0 0
        %902 = vmatpush1.bf16.msra.mxu0 0
        %903 = vmatprep.subr.bf16.mxu0 0
        %904 = vmatpush1.bf16.msra.mxu0 0
        %905 = vmatprep.subr.bf16.mxu0 0
        %906 = vmatpush1.bf16.msra.mxu0 0
        %907 = vmatprep.subr.bf16.mxu0 0
        %908 = vmatpush1.bf16.msra.mxu0 0
        %909 = vmatprep.subr.bf16.mxu0 0
        %910 = vmatpush1.bf16.msra.mxu0 0
        %911 = vmatprep.subr.bf16.mxu0 0
        %912 = vmatpush1.bf16.msra.mxu0 0
        %913 = vmatprep.mubr.bf16.mxu0 0
        %914 = vmatmul.mubr.bf16.gmra.mrb[0].mxu0 %v876
        %v915 = vpop.f32.mrb[0].mxu0
        %v916 = vadd.f32 0.0, %v915
        %v917 = vpop.f32.mrb[0].mxu0
        %v918 = vpop.f32.mrb[0].mxu0
        %v919 = vpop.f32.mrb[0].mxu0
        %920 = vdwg.mxu0
        %v921 = vpack.c.bf16 %v778, %v778
        %v922 = vpack.c.bf16 %v824, %v824
        %v923 = vpack.c.bf16 %v870, %v870
        %v924 = vpack.c.bf16 %v916, %v916
        %v925 = vld [vmem:[#allocation10] sm:$0xf]
        %v926 = vld [vmem:[#allocation10 + $0x4] sm:$0xf]
        %v927 = vld [vmem:[#allocation10 + $0x8] sm:$0xf]
        %v928 = vld [vmem:[#allocation10 + $0xc] sm:$0xf]
        %v930 = vsel %vm503, %v921, 0
        %v933 = vsel %vm739, %v925, 0
        %935 = vmatprep.subr.bf16.mxu0 0
        %936 = vmatpush1.bf16.msra.mxu0 %v933
        %937 = vmatprep.subr.bf16.mxu0 0
        %938 = vmatpush1.bf16.msra.mxu0 0
        %939 = vmatprep.subr.bf16.mxu0 0
        %940 = vmatpush1.bf16.msra.mxu0 0
        %941 = vmatprep.subr.bf16.mxu0 0
        %942 = vmatpush1.bf16.msra.mxu0 0
        %943 = vmatprep.subr.bf16.mxu0 0
        %944 = vmatpush1.bf16.msra.mxu0 0
        %945 = vmatprep.subr.bf16.mxu0 0
        %946 = vmatpush1.bf16.msra.mxu0 0
        %947 = vmatprep.subr.bf16.mxu0 0
        %948 = vmatpush1.bf16.msra.mxu0 0
        %949 = vmatprep.subr.bf16.mxu0 0
        %950 = vmatpush1.bf16.msra.mxu0 0
        %951 = vmatprep.subr.bf16.mxu0 0
        %952 = vmatpush1.bf16.msra.mxu0 0
        %953 = vmatprep.subr.bf16.mxu0 0
        %954 = vmatpush1.bf16.msra.mxu0 0
        %955 = vmatprep.subr.bf16.mxu0 0
        %956 = vmatpush1.bf16.msra.mxu0 0
        %957 = vmatprep.subr.bf16.mxu0 0
        %958 = vmatpush1.bf16.msra.mxu0 0
        %959 = vmatprep.subr.bf16.mxu0 0
        %960 = vmatpush1.bf16.msra.mxu0 0
        %961 = vmatprep.subr.bf16.mxu0 0
        %962 = vmatpush1.bf16.msra.mxu0 0
        %963 = vmatprep.subr.bf16.mxu0 0
        %964 = vmatpush1.bf16.msra.mxu0 0
        %965 = vmatprep.subr.bf16.mxu0 0
        %966 = vmatpush1.bf16.msra.mxu0 0
        %967 = vmatprep.mubr.bf16.mxu0 0
        %968 = vmatmul.mubr.bf16.gmra.mrb[0].mxu0 %v930
        %v969 = vpop.f32.mrb[0].mxu0
        %v970 = vadd.f32 0.0, %v969
        %v971 = vpop.f32.mrb[0].mxu0
        %v972 = vpop.f32.mrb[0].mxu0
        %v973 = vpop.f32.mrb[0].mxu0
        %974 = vdwg.mxu0
        %v976 = vsel %vm503, %v922, 0
        %v979 = vsel %vm739, %v926, 0
        %981 = vmatprep.subr.bf16.mxu0 0
        %982 = vmatpush1.bf16.msra.mxu0 %v979
        %983 = vmatprep.subr.bf16.mxu0 0
        %984 = vmatpush1.bf16.msra.mxu0 0
        %985 = vmatprep.subr.bf16.mxu0 0
        %986 = vmatpush1.bf16.msra.mxu0 0
        %987 = vmatprep.subr.bf16.mxu0 0
        %988 = vmatpush1.bf16.msra.mxu0 0
        %989 = vmatprep.subr.bf16.mxu0 0
        %990 = vmatpush1.bf16.msra.mxu0 0
        %991 = vmatprep.subr.bf16.mxu0 0
        %992 = vmatpush1.bf16.msra.mxu0 0
        %993 = vmatprep.subr.bf16.mxu0 0
        %994 = vmatpush1.bf16.msra.mxu0 0
        %995 = vmatprep.subr.bf16.mxu0 0
        %996 = vmatpush1.bf16.msra.mxu0 0
        %997 = vmatprep.subr.bf16.mxu0 0
        %998 = vmatpush1.bf16.msra.mxu0 0
        %999 = vmatprep.subr.bf16.mxu0 0
        %1000 = vmatpush1.bf16.msra.mxu0 0
        %1001 = vmatprep.subr.bf16.mxu0 0
        %1002 = vmatpush1.bf16.msra.mxu0 0
        %1003 = vmatprep.subr.bf16.mxu0 0
        %1004 = vmatpush1.bf16.msra.mxu0 0
        %1005 = vmatprep.subr.bf16.mxu0 0
        %1006 = vmatpush1.bf16.msra.mxu0 0
        %1007 = vmatprep.subr.bf16.mxu0 0
        %1008 = vmatpush1.bf16.msra.mxu0 0
        %1009 = vmatprep.subr.bf16.mxu0 0
        %1010 = vmatpush1.bf16.msra.mxu0 0
        %1011 = vmatprep.subr.bf16.mxu0 0
        %1012 = vmatpush1.bf16.msra.mxu0 0
        %1013 = vmatprep.mubr.bf16.mxu0 0
        %1014 = vmatmul.mubr.bf16.gmra.mrb[0].mxu0 %v976
        %v1015 = vpop.f32.mrb[0].mxu0
        %v1016 = vadd.f32 0.0, %v1015
        %v1017 = vpop.f32.mrb[0].mxu0
        %v1018 = vpop.f32.mrb[0].mxu0
        %v1019 = vpop.f32.mrb[0].mxu0
        %1020 = vdwg.mxu0
        %v1022 = vsel %vm503, %v923, 0
        %v1025 = vsel %vm739, %v927, 0
        %1027 = vmatprep.subr.bf16.mxu0 0
        %1028 = vmatpush1.bf16.msra.mxu0 %v1025
        %1029 = vmatprep.subr.bf16.mxu0 0
        %1030 = vmatpush1.bf16.msra.mxu0 0
        %1031 = vmatprep.subr.bf16.mxu0 0
        %1032 = vmatpush1.bf16.msra.mxu0 0
        %1033 = vmatprep.subr.bf16.mxu0 0
        %1034 = vmatpush1.bf16.msra.mxu0 0
        %1035 = vmatprep.subr.bf16.mxu0 0
        %1036 = vmatpush1.bf16.msra.mxu0 0
        %1037 = vmatprep.subr.bf16.mxu0 0
        %1038 = vmatpush1.bf16.msra.mxu0 0
        %1039 = vmatprep.subr.bf16.mxu0 0
        %1040 = vmatpush1.bf16.msra.mxu0 0
        %1041 = vmatprep.subr.bf16.mxu0 0
        %1042 = vmatpush1.bf16.msra.mxu0 0
        %1043 = vmatprep.subr.bf16.mxu0 0
        %1044 = vmatpush1.bf16.msra.mxu0 0
        %1045 = vmatprep.subr.bf16.mxu0 0
        %1046 = vmatpush1.bf16.msra.mxu0 0
        %1047 = vmatprep.subr.bf16.mxu0 0
        %1048 = vmatpush1.bf16.msra.mxu0 0
        %1049 = vmatprep.subr.bf16.mxu0 0
        %1050 = vmatpush1.bf16.msra.mxu0 0
        %1051 = vmatprep.subr.bf16.mxu0 0
        %1052 = vmatpush1.bf16.msra.mxu0 0
        %1053 = vmatprep.subr.bf16.mxu0 0
        %1054 = vmatpush1.bf16.msra.mxu0 0
        %1055 = vmatprep.subr.bf16.mxu0 0
        %1056 = vmatpush1.bf16.msra.mxu0 0
        %1057 = vmatprep.subr.bf16.mxu0 0
        %1058 = vmatpush1.bf16.msra.mxu0 0
        %1059 = vmatprep.mubr.bf16.mxu0 0
        %1060 = vmatmul.mubr.bf16.gmra.mrb[0].mxu0 %v1022
        %v1061 = vpop.f32.mrb[0].mxu0
        %v1062 = vadd.f32 0.0, %v1061
        %v1063 = vpop.f32.mrb[0].mxu0
        %v1064 = vpop.f32.mrb[0].mxu0
        %v1065 = vpop.f32.mrb[0].mxu0
        %1066 = vdwg.mxu0
        %v1068 = vsel %vm503, %v924, 0
        %v1071 = vsel %vm739, %v928, 0
        %1073 = vmatprep.subr.bf16.mxu0 0
        %1074 = vmatpush1.bf16.msra.mxu0 %v1071
        %1075 = vmatprep.subr.bf16.mxu0 0
        %1076 = vmatpush1.bf16.msra.mxu0 0
        %1077 = vmatprep.subr.bf16.mxu0 0
        %1078 = vmatpush1.bf16.msra.mxu0 0
        %1079 = vmatprep.subr.bf16.mxu0 0
        %1080 = vmatpush1.bf16.msra.mxu0 0
        %1081 = vmatprep.subr.bf16.mxu0 0
        %1082 = vmatpush1.bf16.msra.mxu0 0
        %1083 = vmatprep.subr.bf16.mxu0 0
        %1084 = vmatpush1.bf16.msra.mxu0 0
        %1085 = vmatprep.subr.bf16.mxu0 0
        %1086 = vmatpush1.bf16.msra.mxu0 0
        %1087 = vmatprep.subr.bf16.mxu0 0
        %1088 = vmatpush1.bf16.msra.mxu0 0
        %1089 = vmatprep.subr.bf16.mxu0 0
        %1090 = vmatpush1.bf16.msra.mxu0 0
        %1091 = vmatprep.subr.bf16.mxu0 0
        %1092 = vmatpush1.bf16.msra.mxu0 0
        %1093 = vmatprep.subr.bf16.mxu0 0
        %1094 = vmatpush1.bf16.msra.mxu0 0
        %1095 = vmatprep.subr.bf16.mxu0 0
        %1096 = vmatpush1.bf16.msra.mxu0 0
        %1097 = vmatprep.subr.bf16.mxu0 0
        %1098 = vmatpush1.bf16.msra.mxu0 0
        %1099 = vmatprep.subr.bf16.mxu0 0
        %1100 = vmatpush1.bf16.msra.mxu0 0
        %1101 = vmatprep.subr.bf16.mxu0 0
        %1102 = vmatpush1.bf16.msra.mxu0 0
        %1103 = vmatprep.subr.bf16.mxu0 0
        %1104 = vmatpush1.bf16.msra.mxu0 0
        %1105 = vmatprep.mubr.bf16.mxu0 0
        %1106 = vmatmul.mubr.bf16.gmra.mrb[0].mxu0 %v1068
        %v1107 = vpop.f32.mrb[0].mxu0
        %v1108 = vadd.f32 0.0, %v1107
        %v1109 = vpop.f32.mrb[0].mxu0
        %v1110 = vpop.f32.mrb[0].mxu0
        %v1111 = vpop.f32.mrb[0].mxu0
        %1112 = vdwg.mxu0
        %vm1113 = vcmask 261120
        %v1114 = vsel %vm1113, %v970, 0.0
        %v1115 = vsel %vm1113, %v1016, 0.0
        %v1116 = vadd.f32 %v1114, %v1115
        %v1117 = vsel %vm1113, %v1062, 0.0
        %v1118 = vadd.f32 %v1116, %v1117
        %v1119 = vsel %vm1113, %v1108, 0.0
        %v1120 = vadd.f32 %v1118, %v1119
        %v1121 = vld [vmem:[#allocation11] sm:$0x1]
        %v1123 = vlaneseq
        %v1124 = vshrl.u32 %v1123, 7
        %v1125 = vsub.s32 0, %v1124
        %v1126 = vrot.slane %v1121, %v1125
        %v1128 = vadd.f32 %v1120, %v1126
        %v1129 = vld [vmem:[%s399] sm:$0xff]
        %v1130 = vadd.f32 %v1129, %v1128
        %v1131 = vsel %vm1113, %v1130, 0.0
        %1132 = vadd.xlane.f32.xlu0 %v1131
        %v1133 = vpop.xlane.xlu0 %1132
        %v1134 = vrcp.pop 32.0
        %v1135 = vmul.f32 %v1133, %v1134
        %v1136 = vsub.f32 %v1130, %v1135
        %v1137 = vmul.f32 %v1136, %v1136
        %v1138 = vsel %vm1113, %v1137, 0.0
        %1139 = vadd.xlane.f32.xlu0 %v1138
        %v1140 = vpop.xlane.xlu0 %1139
        %v1141 = vmul.f32 %v1140, %v1134
        %v1142 = vadd.f32 %v1141, 1e-05
        %v1143 = vrsqrt.pop %v1142
        %v1144 = vmul.f32 %v1136, %v1143
        %v1145 = vld [vmem:[#allocation13] sm:$0x1]
        %v1147 = vlaneseq
        %v1148 = vshrl.u32 %v1147, 7
        %v1149 = vsub.s32 0, %v1148
        %v1150 = vrot.slane %v1145, %v1149
        %v1152 = vmul.f32 %v1144, %v1150
        %v1153 = vld [vmem:[#allocation14] sm:$0x1]
        %v1155 = vlaneseq
        %v1156 = vshrl.u32 %v1155, 7
        %v1157 = vsub.s32 0, %v1156
        %v1158 = vrot.slane %v1153, %v1157
        %v1160 = vadd.f32 %v1152, %v1158
        %1161 = vst.msk [vmem:[%s489] sm:$0xff] %vm1113, %v1160
        %s1162 = sand.u32 %s229, 1
        %s1163 = scalar_lea.sflag [#allocation4], %s1162
        %s1164 = sand.u32 %s229, 1
        %s1165 = smul.addr %s1164, 8
        %s1166 = scalar_lea.vmem [#allocation16], %s1165
        // Predicated region
        $region85: #{encoder_block_forward.4} parent=51 // pred_check
          %p1167 = pneg %p239
        $region86: #{encoder_block_forward.4} parent=51 // pred_check_branch
          %1169 = sbr.rel (%p1167) target = $region88
        $region87: #{encoder_block_forward.4} parent=51 // pred_region
          %s1171 = ssub.s32 128, 128
          %1172 = vsyncadd %s1163, %s1171
          %s1173 = smul.addr %s33, 128
          %s1174 = scalar_lea.hbm %s8, %s1173
          %s1176 = sshll.u32 %s1166, 4
          %s1177 = int_to_ptr.vmem [resolvable:$true] %s1176
          %1179 = dma.vmem_to_hbm [thread:$0]  %s1177, 128, %s1174, %s1163
        $region88: #{encoder_block_forward.4} parent=51 // pred_fallthru
          _
      $region52: #{encoder_block_forward.4} parent=5 // pred_fallthru
        _
      %p1180 = scmp.le.s32.totalorder 2, %s28
      // Predicated region
      $region89: #{encoder_block_forward.4} parent=5 // pred_check
        %p1181 = pneg %p1180
      $region90: #{encoder_block_forward.4} parent=5 // pred_check_branch
        %1183 = sbr.rel (%p1181) target = $region92
      $region91: #{encoder_block_forward.4} parent=5 // pred_region
        %s1184 = ssub.s32 %s28, 2
        // Predicated region
        $region93: #{encoder_block_forward.4} parent=91 // pred_check
          %p1185 = pneg %p245
        $region94: #{encoder_block_forward.4} parent=91 // pred_check_branch
          %1187 = sbr.rel (%p1185) target = $region96
        $region95: #{encoder_block_forward.4} parent=91 // pred_region
          %s1188 = sand.u32 %s230, 1
          %s1189 = scalar_lea.sflag [#allocation4], %s1188
          %s1190 = sand.u32 %s230, 1
          %s1191 = smul.addr %s1190, 8
          %s1192 = scalar_lea.vmem [#allocation16], %s1191
          %1193 = dma.done %s1189, 128
        $region96: #{encoder_block_forward.4} parent=91 // pred_fallthru
          _
      $region92: #{encoder_block_forward.4} parent=5 // pred_fallthru
        _
    $region6: #{encoder_block_forward.4} parent=1 // loop_footer
      %s32 = sadd.s32 1, %s28
    $region7: #{encoder_block_forward.4} parent=1 // loop_footer_branch
      %27 = sbr.rel target = $region3
    $region8: #{encoder_block_forward.4} parent=1 // loop_exit
      _
    %1194 = vsyncpa [#allocation3], 1
    %s1195 = scalar_lea.sflag [#allocation3], 1
    %1196 = vsyncpa %s1195, 1
    %1197 = vsyncpa [#allocation6], 1
    %s1198 = scalar_lea.sflag [#allocation6], 1
    %1199 = vsyncpa %s1198, 1
    %1200 = vsyncpa [#allocation9], 1
    %s1201 = scalar_lea.sflag [#allocation9], 1
    %1202 = vsyncpa %s1201, 1
    %1203 = vsyncpa [#allocation12], 1
    %1204 = vsyncpa [#allocation15], 1
    %1205 = vsyncpa [#allocation4], 1
    %s1206 = scalar_lea.sflag [#allocation4], 1
    %1207 = vsyncpa %s1206, 1

// kernel: encoder_block_forward.3
$region0: #{encoder_block_forward.3}
  #allocation0 [shape = 'u32[]', space=smem, size = 0x4, offset = 0x4, fixed_abs, tag = 'smem constant byte address 0x4 - core index']
  #allocation1 [shape = 'u32[144,128]{1,0:T(1,128)}', space=vmem, size = 0x12000, scoped, tag = 'internal scratch']
  %s0 = inlined_call_operand.hbm [shape: f32[16,32], index: 0, kind: input, shape index: {}]
  %s1 = inlined_call_operand.hbm [shape: bf16[32,96], index: 1, kind: input, shape index: {}]
  %s2 = inlined_call_operand.hbm [shape: f32[1,96], index: 2, kind: input, shape index: {}]
  %s3 = inlined_call_operand.hbm [shape: bf16[16,32], index: 3, kind: output, shape index: {0}]
  %s4 = inlined_call_operand.hbm [shape: bf16[16,32], index: 4, kind: output, shape index: {1}]
  %s5 = inlined_call_operand.hbm [shape: bf16[16,32], index: 5, kind: output, shape index: {2}]
  %6 = xla_tuple %s3, %s4, %s5
  %s7 = sld [smem:[#allocation0]]
  $region50: #{encoder_block_forward.3} parent=0
    _
  %s9 = ssub.s32 1, %s7
  %s10 = scalar_select 0, %s9, %s7
  $region1: #{encoder_block_forward.3} parent=0
    #allocation2 [shape = 'u8[8192]{0}', space=vmem, size = 0x2000, scoped, tag = 'input window, operand 0, single buffered']
    #allocation3 [shape = 's32[1]{0}', space=sflag, size = 0x4, scoped, tag = 'scoped memory for encoder_block_forward.3']
    #allocation4 [shape = 's32[1]{0}', space=sflag, size = 0x4, scoped, tag = 'scoped memory for encoder_block_forward.3']
    #allocation5 [shape = 'u8[8192]{0}', space=vmem, size = 0x2000, scoped, tag = 'input window, operand 1, single buffered']
    #allocation6 [shape = 's32[1]{0}', space=sflag, size = 0x4, scoped, tag = 'scoped memory for encoder_block_forward.3']
    #allocation7 [shape = 'u8[512]{0}', space=vmem, size = 0x400, scoped, tag = 'input window, operand 2, single buffered']
    #allocation8 [shape = 'u8[4096]{0}', space=vmem, size = 0x1000, scoped, tag = 'output window, operand 0, single buffered']
    #allocation9 [shape = 'u8[4096]{0}', space=vmem, size = 0x1000, scoped, tag = 'output window, operand 1, single buffered']
    #allocation10 [shape = 's32[1]{0}', space=sflag, size = 0x4, scoped, tag = 'scoped memory for encoder_block_forward.3']
    #allocation11 [shape = 'u8[4096]{0}', space=vmem, size = 0x1000, scoped, tag = 'output window, operand 2, single buffered']
    %11 = vsyncpa [#allocation3], 0
    %12 = vsyncpa [#allocation6], 0
    %13 = vsyncpa [#allocation4], 0
    %14 = vsyncpa [#allocation10], 0
    // Predicated region
    $region2: #{encoder_block_forward.3} parent=1 // pred_check
      _
    $region3: #{encoder_block_forward.3} parent=1 // pred_check_branch
      %16 = sbr.rel (0) target = $region5
    $region4: #{encoder_block_forward.3} parent=1 // pred_region
      %s18 = ssub.s32 256, 256
      %19 = vsyncadd [#allocation3], %s18
      %s20 = sshll.u32 [#allocation2], 4
      %s21 = int_to_ptr.vmem [resolvable:$true] %s20
      %26 = dma.hbm_to_vmem [thread:$0]  %s0, 256, %s21, [#allocation3], 128, 128, 8
    $region5: #{encoder_block_forward.3} parent=1 // pred_fallthru
      _
    // Predicated region
    $region6: #{encoder_block_forward.3} parent=1 // pred_check
      _
    $region7: #{encoder_block_forward.3} parent=1 // pred_check_branch
      %28 = sbr.rel (0) target = $region9
    $region8: #{encoder_block_forward.3} parent=1 // pred_region
      %s30 = ssub.s32 256, 256
      %31 = vsyncadd [#allocation6], %s30
      %s32 = sshll.u32 [#allocation5], 4
      %s33 = int_to_ptr.vmem [resolvable:$true] %s32
      %38 = dma.hbm_to_vmem [thread:$0]  %s1, 256, %s33, [#allocation6], 64, 64, 4
    $region9: #{encoder_block_forward.3} parent=1 // pred_fallthru
      _
    // Predicated region
    $region10: #{encoder_block_forward.3} parent=1 // pred_check
      _
    $region11: #{encoder_block_forward.3} parent=1 // pred_check_branch
      %40 = sbr.rel (0) target = $region13
    $region12: #{encoder_block_forward.3} parent=1 // pred_region
      %s42 = ssub.s32 16, 16
      %43 = vsyncadd [#allocation6], %s42
      %s45 = sshll.u32 [#allocation7], 4
      %s46 = int_to_ptr.vmem [resolvable:$true] %s45
      %48 = dma.hbm_to_vmem [thread:$0]  %s2, 16, %s46, [#allocation6]
    $region13: #{encoder_block_forward.3} parent=1 // pred_fallthru
      _
    // Predicated region
    $region14: #{encoder_block_forward.3} parent=1 // pred_check
      _
    $region15: #{encoder_block_forward.3} parent=1 // pred_check_branch
      %50 = sbr.rel (0) target = $region17
    $region16: #{encoder_block_forward.3} parent=1 // pred_region
      %51 = dma.done [#allocation3], 256
    $region17: #{encoder_block_forward.3} parent=1 // pred_fallthru
      _
    // Predicated region
    $region18: #{encoder_block_forward.3} parent=1 // pred_check
      _
    $region19: #{encoder_block_forward.3} parent=1 // pred_check_branch
      %53 = sbr.rel (0) target = $region21
    $region20: #{encoder_block_forward.3} parent=1 // pred_region
      %54 = dma.done [#allocation6], 256
    $region21: #{encoder_block_forward.3} parent=1 // pred_fallthru
      _
    // Predicated region
    $region22: #{encoder_block_forward.3} parent=1 // pred_check
      _
    $region23: #{encoder_block_forward.3} parent=1 // pred_check_branch
      %56 = sbr.rel (0) target = $region25
    $region24: #{encoder_block_forward.3} parent=1 // pred_region
      %57 = dma.done [#allocation6], 16
    $region25: #{encoder_block_forward.3} parent=1 // pred_fallthru
      _
    %v59 = vld [vmem:[#allocation2] sm:$0xff]
    %v60 = vld [vmem:[#allocation2 + $0x8] sm:$0xff]
    %v61 = vpack.c.bf16 %v60, %v59
    %v62 = vld [vmem:[#allocation5] sm:$0xf]
    %v63 = vld [vmem:[#allocation5 + $0x4] sm:$0xf]
    %v64 = vld [vmem:[#allocation5 + $0x8] sm:$0xf]
    %v65 = vld [vmem:[#allocation5 + $0xc] sm:$0xf]
    %v66 = vld [vmem:[#allocation7] sm:$0x1]
    %v68 = vlaneseq
    %v69 = vshrl.u32 %v68, 7
    %v70 = vsub.s32 0, %v69
    %v71 = vrot.slane %v66, %v70
    %v77 = vunpack.c.l.b16 %v62
    %v78 = vunpack.c.l.b16 %v63
    %v79 = vunpack.c.l.b16 %v64
    %v80 = vunpack.c.l.b16 %v65
    %v81 = vpack.c.b16 %v78, %v77
    %v82 = vpack.c.b16 %v80, %v79
    %vm85 = vcmask 261120
    %v87 = vsel %vm85, %v61, 0
    %89 = vmatprep.subr.bf16.mxu0 0
    %90 = vmatpush1.bf16.msra.mxu0 %v81
    %91 = vmatprep.subr.bf16.mxu0 0
    %92 = vmatpush1.bf16.msra.mxu0 %v82
    %93 = vmatprep.subr.bf16.mxu0 0
    %94 = vmatpush1.bf16.msra.mxu0 0
    %95 = vmatprep.subr.bf16.mxu0 0
    %96 = vmatpush1.bf16.msra.mxu0 0
    %97 = vmatprep.subr.bf16.mxu0 0
    %98 = vmatpush1.bf16.msra.mxu0 0
    %99 = vmatprep.subr.bf16.mxu0 0
    %100 = vmatpush1.bf16.msra.mxu0 0
    %101 = vmatprep.subr.bf16.mxu0 0
    %102 = vmatpush1.bf16.msra.mxu0 0
    %103 = vmatprep.subr.bf16.mxu0 0
    %104 = vmatpush1.bf16.msra.mxu0 0
    %105 = vmatprep.subr.bf16.mxu0 0
    %106 = vmatpush1.bf16.msra.mxu0 0
    %107 = vmatprep.subr.bf16.mxu0 0
    %108 = vmatpush1.bf16.msra.mxu0 0
    %109 = vmatprep.subr.bf16.mxu0 0
    %110 = vmatpush1.bf16.msra.mxu0 0
    %111 = vmatprep.subr.bf16.mxu0 0
    %112 = vmatpush1.bf16.msra.mxu0 0
    %113 = vmatprep.subr.bf16.mxu0 0
    %114 = vmatpush1.bf16.msra.mxu0 0
    %115 = vmatprep.subr.bf16.mxu0 0
    %116 = vmatpush1.bf16.msra.mxu0 0
    %117 = vmatprep.subr.bf16.mxu0 0
    %118 = vmatpush1.bf16.msra.mxu0 0
    %119 = vmatprep.subr.bf16.mxu0 0
    %120 = vmatpush1.bf16.msra.mxu0 0
    %121 = vmatprep.mubr.bf16.mxu0 0
    %122 = vmatmul.mubr.bf16.gmra.mrb[0].mxu0 %v87
    %v123 = vpop.f32.mrb[0].mxu0
    %v124 = vadd.f32 %v71, %v123
    %v125 = vpop.f32.mrb[0].mxu0
    %v126 = vpop.f32.mrb[0].mxu0
    %v127 = vadd.f32 %v71, %v126
    %v128 = vpop.f32.mrb[0].mxu0
    %129 = vdwg.mxu0
    %v130 = vmul.f32 %v124, 0.35355338
    %v131 = vmul.f32 %v127, 0.35355338
    %v132 = vpack.c.bf16 %v131, %v130
    %v134 = vunpack.c.l.b16 %v132
    %v135 = vunpack.c.h.b16 %v132
    %v136 = vpack.c.b16 %v134, %v134
    %v137 = vpack.c.b16 %v135, %v135
    %vm140 = vcmask 257024
    %141 = vst.msk [vmem:[#allocation8] sm:$0xf] %vm140, %v136
    %142 = vst.msk [vmem:[#allocation8 + $0x4] sm:$0xf] %vm140, %v137
    %v143 = vpack.c.bf16 %v127, %v124
    %v145 = vunpack.c.l.b16 %v143
    %v146 = vunpack.c.h.b16 %v143
    %v147 = vpack.c.b16 %v145, %v145
    %v148 = vpack.c.b16 %v146, %v146
    %149 = vrot.lane.b32.xlu0 %v147, 96
    %v150 = vpop.permute.xlu0 %149
    %151 = vrot.lane.b32.xlu0 %v148, 96
    %v152 = vpop.permute.xlu0 %151
    %155 = vst.msk [vmem:[#allocation9] sm:$0xf] %vm140, %v150
    %156 = vst.msk [vmem:[#allocation9 + $0x4] sm:$0xf] %vm140, %v152
    %157 = vrot.lane.b32.xlu0 %v147, 64
    %v158 = vpop.permute.xlu0 %157
    %159 = vrot.lane.b32.xlu0 %v148, 64
    %v160 = vpop.permute.xlu0 %159
    %163 = vst.msk [vmem:[#allocation11] sm:$0xf] %vm140, %v158
    %164 = vst.msk [vmem:[#allocation11 + $0x4] sm:$0xf] %vm140, %v160
    // Predicated region
    $region26: #{encoder_block_forward.3} parent=1 // pred_check
      _
    $region27: #{encoder_block_forward.3} parent=1 // pred_check_branch
      %166 = sbr.rel (0) target = $region29
    $region28: #{encoder_block_forward.3} parent=1 // pred_region
      %s168 = ssub.s32 128, 128
      %169 = vsyncadd [#allocation4], %s168
      %s170 = sshll.u32 [#allocation8], 4
      %s171 = int_to_ptr.vmem [resolvable:$true] %s170
      %176 = dma.vmem_to_hbm [thread:$0]  %s171, 128, %s3, [#allocation4], 64, 64, 4
    $region29: #{encoder_block_forward.3} parent=1 // pred_fallthru
      _
    // Predicated region
    $region30: #{encoder_block_forward.3} parent=1 // pred_check
      _
    $region31: #{encoder_block_forward.3} parent=1 // pred_check_branch
      %178 = sbr.rel (0) target = $region33
    $region32: #{encoder_block_forward.3} parent=1 // pred_region
      %s180 = ssub.s32 128, 128
      %181 = vsyncadd [#allocation10], %s180
      %s182 = sshll.u32 [#allocation9], 4
      %s183 = int_to_ptr.vmem [resolvable:$true] %s182
      %188 = dma.vmem_to_hbm [thread:$0]  %s183, 128, %s4, [#allocation10], 64, 64, 4
    $region33: #{encoder_block_forward.3} parent=1 // pred_fallthru
      _
    // Predicated region
    $region34: #{encoder_block_forward.3} parent=1 // pred_check
      _
    $region35: #{encoder_block_forward.3} parent=1 // pred_check_branch
      %190 = sbr.rel (0) target = $region37
    $region36: #{encoder_block_forward.3} parent=1 // pred_region
      %s192 = ssub.s32 128, 128
      %193 = vsyncadd [#allocation10], %s192
      %s194 = sshll.u32 [#allocation11], 4
      %s195 = int_to_ptr.vmem [resolvable:$true] %s194
      %200 = dma.vmem_to_hbm [thread:$0]  %s195, 128, %s5, [#allocation10], 64, 64, 4
    $region37: #{encoder_block_forward.3} parent=1 // pred_fallthru
      _
    // Predicated region
    $region38: #{encoder_block_forward.3} parent=1 // pred_check
      _
    $region39: #{encoder_block_forward.3} parent=1 // pred_check_branch
      %202 = sbr.rel (0) target = $region41
    $region40: #{encoder_block_forward.3} parent=1 // pred_region
      %203 = dma.done [#allocation4], 128
    $region41: #{encoder_block_forward.3} parent=1 // pred_fallthru
      _
    // Predicated region
    $region42: #{encoder_block_forward.3} parent=1 // pred_check
      _
    $region43: #{encoder_block_forward.3} parent=1 // pred_check_branch
      %205 = sbr.rel (0) target = $region45
    $region44: #{encoder_block_forward.3} parent=1 // pred_region
      %206 = dma.done [#allocation10], 128
    $region45: #{encoder_block_forward.3} parent=1 // pred_fallthru
      _
    // Predicated region
    $region46: #{encoder_block_forward.3} parent=1 // pred_check
      _
    $region47: #{encoder_block_forward.3} parent=1 // pred_check_branch
      %208 = sbr.rel (0) target = $region49
    $region48: #{encoder_block_forward.3} parent=1 // pred_region
      %209 = dma.done [#allocation10], 128
    $region49: #{encoder_block_forward.3} parent=1 // pred_fallthru
      _
    %210 = vsyncpa [#allocation3], 1
    %211 = vsyncpa [#allocation6], 1
    %212 = vsyncpa [#allocation4], 1
    %213 = vsyncpa [#allocation10], 1

// kernel: encoder_block_forward.5
$region0: #{encoder_block_forward.5}
  #allocation0 [shape = 'u32[]', space=smem, size = 0x4, offset = 0x4, fixed_abs, tag = 'smem constant byte address 0x4 - core index']
  #allocation1 [shape = 'u32[144,128]{1,0:T(1,128)}', space=vmem, size = 0x12000, scoped, tag = 'internal scratch']
  #allocation2 [shape = 'f32[16,32]{1,0:T(8,128)}', space=vmem, size = 0x2000, scoped, tag = 'scratch operand']
  %s0 = inlined_call_operand.hbm [shape: f32[16,32], index: 0, kind: input, shape index: {}]
  %s1 = inlined_call_operand.hbm [shape: bf16[32,64], index: 1, kind: input, shape index: {}]
  %s2 = inlined_call_operand.hbm [shape: f32[1,64], index: 2, kind: input, shape index: {}]
  %s3 = inlined_call_operand.hbm [shape: bf16[64,32], index: 3, kind: input, shape index: {}]
  %s4 = inlined_call_operand.hbm [shape: f32[1,32], index: 4, kind: input, shape index: {}]
  %s5 = inlined_call_operand.hbm [shape: f32[1,32], index: 5, kind: input, shape index: {}]
  %s6 = inlined_call_operand.hbm [shape: f32[1,32], index: 6, kind: input, shape index: {}]
  %s7 = inlined_call_operand.hbm [shape: f32[16,32], index: 7, kind: output, shape index: {}]
  %s8 = sld [smem:[#allocation0]]
  $region74: #{encoder_block_forward.5} parent=0
    _
  %s10 = ssub.s32 1, %s8
  %s11 = scalar_select 0, %s10, %s8
  $region1: #{encoder_block_forward.5} parent=0
    #allocation3 [shape = 'u8[8192]{0}', space=vmem, size = 0x2000, scoped, tag = 'input window, operand 0, single buffered']
    #allocation4 [shape = 's32[1]{0}', space=sflag, size = 0x4, scoped, tag = 'scoped memory for encoder_block_forward.5']
    #allocation5 [shape = 's32[1]{0}', space=sflag, size = 0x4, scoped, tag = 'scoped memory for encoder_block_forward.5']
    #allocation6 [shape = 'u8[8192]{0}', space=vmem, size = 0x2000, scoped, tag = 'input window, operand 1, single buffered']
    #allocation7 [shape = 's32[1]{0}', space=sflag, size = 0x4, scoped, tag = 'scoped memory for encoder_block_forward.5']
    #allocation8 [shape = 'u8[512]{0}', space=vmem, size = 0x400, scoped, tag = 'input window, operand 2, single buffered']
    #allocation9 [shape = 'u8[16384]{0}', space=vmem, size = 0x4000, scoped, tag = 'input window, operand 3, single buffered']
    #allocation10 [shape = 's32[1]{0}', space=sflag, size = 0x4, scoped, tag = 'scoped memory for encoder_block_forward.5']
    #allocation11 [shape = 'u8[512]{0}', space=vmem, size = 0x400, scoped, tag = 'input window, operand 4, single buffered']
    #allocation12 [shape = 'u8[512]{0}', space=vmem, size = 0x400, scoped, tag = 'input window, operand 5, single buffered']
    #allocation13 [shape = 's32[1]{0}', space=sflag, size = 0x4, scoped, tag = 'scoped memory for encoder_block_forward.5']
    #allocation14 [shape = 'u8[512]{0}', space=vmem, size = 0x400, scoped, tag = 'input window, operand 6, single buffered']
    #allocation15 [shape = 'u8[8192]{0}', space=vmem, size = 0x2000, scoped, tag = 'output window, operand 0, single buffered']
    %12 = vsyncpa [#allocation4], 0
    %13 = vsyncpa [#allocation7], 0
    %14 = vsyncpa [#allocation10], 0
    %15 = vsyncpa [#allocation13], 0
    %16 = vsyncpa [#allocation5], 0
    // Predicated region
    $region2: #{encoder_block_forward.5} parent=1 // pred_check
      _
    $region3: #{encoder_block_forward.5} parent=1 // pred_check_branch
      %18 = sbr.rel (0) target = $region5
    $region4: #{encoder_block_forward.5} parent=1 // pred_region
      %s20 = ssub.s32 256, 256
      %21 = vsyncadd [#allocation4], %s20
      %s22 = sshll.u32 [#allocation3], 4
      %s23 = int_to_ptr.vmem [resolvable:$true] %s22
      %28 = dma.hbm_to_vmem [thread:$0]  %s0, 256, %s23, [#allocation4], 128, 128, 8
    $region5: #{encoder_block_forward.5} parent=1 // pred_fallthru
      _
    // Predicated region
    $region6: #{encoder_block_forward.5} parent=1 // pred_check
      _
    $region7: #{encoder_block_forward.5} parent=1 // pred_check_branch
      %30 = sbr.rel (0) target = $region9
    $region8: #{encoder_block_forward.5} parent=1 // pred_region
      %s32 = ssub.s32 256, 256
      %33 = vsyncadd [#allocation7], %s32
      %s34 = sshll.u32 [#allocation6], 4
      %s35 = int_to_ptr.vmem [resolvable:$true] %s34
      %40 = dma.hbm_to_vmem [thread:$0]  %s1, 256, %s35, [#allocation7], 64, 64, 4
    $region9: #{encoder_block_forward.5} parent=1 // pred_fallthru
      _
    // Predicated region
    $region10: #{encoder_block_forward.5} parent=1 // pred_check
      _
    $region11: #{encoder_block_forward.5} parent=1 // pred_check_branch
      %42 = sbr.rel (0) target = $region13
    $region12: #{encoder_block_forward.5} parent=1 // pred_region
      %s44 = ssub.s32 16, 16
      %45 = vsyncadd [#allocation7], %s44
      %s47 = sshll.u32 [#allocation8], 4
      %s48 = int_to_ptr.vmem [resolvable:$true] %s47
      %50 = dma.hbm_to_vmem [thread:$0]  %s2, 16, %s48, [#allocation7]
    $region13: #{encoder_block_forward.5} parent=1 // pred_fallthru
      _
    // Predicated region
    $region14: #{encoder_block_forward.5} parent=1 // pred_check
      _
    $region15: #{encoder_block_forward.5} parent=1 // pred_check_branch
      %52 = sbr.rel (0) target = $region17
    $region16: #{encoder_block_forward.5} parent=1 // pred_region
      %s54 = ssub.s32 512, 512
      %55 = vsyncadd [#allocation10], %s54
      %s56 = sshll.u32 [#allocation9], 4
      %s57 = int_to_ptr.vmem [resolvable:$true] %s56
      %62 = dma.hbm_to_vmem [thread:$0]  %s3, 512, %s57, [#allocation10], 64, 64, 4
    $region17: #{encoder_block_forward.5} parent=1 // pred_fallthru
      _
    // Predicated region
    $region18: #{encoder_block_forward.5} parent=1 // pred_check
      _
    $region19: #{encoder_block_forward.5} parent=1 // pred_check_branch
      %64 = sbr.rel (0) target = $region21
    $region20: #{encoder_block_forward.5} parent=1 // pred_region
      %s66 = ssub.s32 16, 16
      %67 = vsyncadd [#allocation10], %s66
      %s69 = sshll.u32 [#allocation11], 4
      %s70 = int_to_ptr.vmem [resolvable:$true] %s69
      %72 = dma.hbm_to_vmem [thread:$0]  %s4, 16, %s70, [#allocation10]
    $region21: #{encoder_block_forward.5} parent=1 // pred_fallthru
      _
    // Predicated region
    $region22: #{encoder_block_forward.5} parent=1 // pred_check
      _
    $region23: #{encoder_block_forward.5} parent=1 // pred_check_branch
      %74 = sbr.rel (0) target = $region25
    $region24: #{encoder_block_forward.5} parent=1 // pred_region
      %s76 = ssub.s32 16, 16
      %77 = vsyncadd [#allocation13], %s76
      %s79 = sshll.u32 [#allocation12], 4
      %s80 = int_to_ptr.vmem [resolvable:$true] %s79
      %82 = dma.hbm_to_vmem [thread:$0]  %s5, 16, %s80, [#allocation13]
    $region25: #{encoder_block_forward.5} parent=1 // pred_fallthru
      _
    // Predicated region
    $region26: #{encoder_block_forward.5} parent=1 // pred_check
      _
    $region27: #{encoder_block_forward.5} parent=1 // pred_check_branch
      %84 = sbr.rel (0) target = $region29
    $region28: #{encoder_block_forward.5} parent=1 // pred_region
      %s86 = ssub.s32 16, 16
      %87 = vsyncadd [#allocation13], %s86
      %s89 = sshll.u32 [#allocation14], 4
      %s90 = int_to_ptr.vmem [resolvable:$true] %s89
      %92 = dma.hbm_to_vmem [thread:$0]  %s6, 16, %s90, [#allocation13]
    $region29: #{encoder_block_forward.5} parent=1 // pred_fallthru
      _
    // Predicated region
    $region30: #{encoder_block_forward.5} parent=1 // pred_check
      _
    $region31: #{encoder_block_forward.5} parent=1 // pred_check_branch
      %94 = sbr.rel (0) target = $region33
    $region32: #{encoder_block_forward.5} parent=1 // pred_region
      %95 = dma.done [#allocation4], 256
    $region33: #{encoder_block_forward.5} parent=1 // pred_fallthru
      _
    // Predicated region
    $region34: #{encoder_block_forward.5} parent=1 // pred_check
      _
    $region35: #{encoder_block_forward.5} parent=1 // pred_check_branch
      %97 = sbr.rel (0) target = $region37
    $region36: #{encoder_block_forward.5} parent=1 // pred_region
      %98 = dma.done [#allocation7], 256
    $region37: #{encoder_block_forward.5} parent=1 // pred_fallthru
      _
    // Predicated region
    $region38: #{encoder_block_forward.5} parent=1 // pred_check
      _
    $region39: #{encoder_block_forward.5} parent=1 // pred_check_branch
      %100 = sbr.rel (0) target = $region41
    $region40: #{encoder_block_forward.5} parent=1 // pred_region
      %101 = dma.done [#allocation7], 16
    $region41: #{encoder_block_forward.5} parent=1 // pred_fallthru
      _
    // Predicated region
    $region42: #{encoder_block_forward.5} parent=1 // pred_check
      _
    $region43: #{encoder_block_forward.5} parent=1 // pred_check_branch
      %103 = sbr.rel (0) target = $region45
    $region44: #{encoder_block_forward.5} parent=1 // pred_region
      %104 = dma.done [#allocation10], 512
    $region45: #{encoder_block_forward.5} parent=1 // pred_fallthru
      _
    // Predicated region
    $region46: #{encoder_block_forward.5} parent=1 // pred_check
      _
    $region47: #{encoder_block_forward.5} parent=1 // pred_check_branch
      %106 = sbr.rel (0) target = $region49
    $region48: #{encoder_block_forward.5} parent=1 // pred_region
      %107 = dma.done [#allocation10], 16
    $region49: #{encoder_block_forward.5} parent=1 // pred_fallthru
      _
    // Predicated region
    $region50: #{encoder_block_forward.5} parent=1 // pred_check
      _
    $region51: #{encoder_block_forward.5} parent=1 // pred_check_branch
      %109 = sbr.rel (0) target = $region53
    $region52: #{encoder_block_forward.5} parent=1 // pred_region
      %110 = dma.done [#allocation13], 16
    $region53: #{encoder_block_forward.5} parent=1 // pred_fallthru
      _
    // Predicated region
    $region54: #{encoder_block_forward.5} parent=1 // pred_check
      _
    $region55: #{encoder_block_forward.5} parent=1 // pred_check_branch
      %112 = sbr.rel (0) target = $region57
    $region56: #{encoder_block_forward.5} parent=1 // pred_region
      %113 = dma.done [#allocation13], 16
    $region57: #{encoder_block_forward.5} parent=1 // pred_fallthru
      _
    %p115 = scmp.eq.s32.totalorder 0, 0
    // Predicated region
    $region58: #{encoder_block_forward.5} parent=1 // pred_check
      %p116 = pneg %p115
    $region59: #{encoder_block_forward.5} parent=1 // pred_check_branch
      %118 = sbr.rel (%p116) target = $region61
    $region60: #{encoder_block_forward.5} parent=1 // pred_region
      %vm119 = vcmask 261120
      %120 = vst.msk [vmem:[#allocation2] sm:$0xff] %vm119, 0.0
      %121 = vst.msk [vmem:[#allocation2 + $0x8] sm:$0xff] %vm119, 0.0
    $region61: #{encoder_block_forward.5} parent=1 // pred_fallthru
      _
    %v122 = vld [vmem:[#allocation3] sm:$0xff]
    %v123 = vld [vmem:[#allocation3 + $0x8] sm:$0xff]
    %v124 = vpack.c.bf16 %v123, %v122
    %v125 = vld [vmem:[#allocation6] sm:$0xf]
    %v126 = vld [vmem:[#allocation6 + $0x4] sm:$0xf]
    %v127 = vld [vmem:[#allocation6 + $0x8] sm:$0xf]
    %v128 = vld [vmem:[#allocation6 + $0xc] sm:$0xf]
    %v129 = vld [vmem:[#allocation8] sm:$0x1]
    %v131 = vlaneseq
    %v132 = vshrl.u32 %v131, 7
    %v133 = vsub.s32 0, %v132
    %v134 = vrot.slane %v129, %v133
    %v140 = vunpack.c.l.b16 %v125
    %v141 = vunpack.c.l.b16 %v126
    %v142 = vunpack.c.l.b16 %v127
    %v143 = vunpack.c.l.b16 %v128
    %v144 = vpack.c.b16 %v141, %v140
    %v145 = vpack.c.b16 %v143, %v142
    %vm148 = vcmask 261120
    %v150 = vsel %vm148, %v124, 0
    %152 = vmatprep.subr.bf16.mxu0 0
    %153 = vmatpush1.bf16.msra.mxu0 %v144
    %154 = vmatprep.subr.bf16.mxu0 0
    %155 = vmatpush1.bf16.msra.mxu0 %v145
    %156 = vmatprep.subr.bf16.mxu0 0
    %157 = vmatpush1.bf16.msra.mxu0 0
    %158 = vmatprep.subr.bf16.mxu0 0
    %159 = vmatpush1.bf16.msra.mxu0 0
    %160 = vmatprep.subr.bf16.mxu0 0
    %161 = vmatpush1.bf16.msra.mxu0 0
    %162 = vmatprep.subr.bf16.mxu0 0
    %163 = vmatpush1.bf16.msra.mxu0 0
    %164 = vmatprep.subr.bf16.mxu0 0
    %165 = vmatpush1.bf16.msra.mxu0 0
    %166 = vmatprep.subr.bf16.mxu0 0
    %167 = vmatpush1.bf16.msra.mxu0 0
    %168 = vmatprep.subr.bf16.mxu0 0
    %169 = vmatpush1.bf16.msra.mxu0 0
    %170 = vmatprep.subr.bf16.mxu0 0
    %171 = vmatpush1.bf16.msra.mxu0 0
    %172 = vmatprep.subr.bf16.mxu0 0
    %173 = vmatpush1.bf16.msra.mxu0 0
    %174 = vmatprep.subr.bf16.mxu0 0
    %175 = vmatpush1.bf16.msra.mxu0 0
    %176 = vmatprep.subr.bf16.mxu0 0
    %177 = vmatpush1.bf16.msra.mxu0 0
    %178 = vmatprep.subr.bf16.mxu0 0
    %179 = vmatpush1.bf16.msra.mxu0 0
    %180 = vmatprep.subr.bf16.mxu0 0
    %181 = vmatpush1.bf16.msra.mxu0 0
    %182 = vmatprep.subr.bf16.mxu0 0
    %183 = vmatpush1.bf16.msra.mxu0 0
    %184 = vmatprep.mubr.bf16.mxu0 0
    %185 = vmatmul.mubr.bf16.gmra.mrb[0].mxu0 %v150
    %v186 = vpop.f32.mrb[0].mxu0
    %v187 = vadd.f32 %v134, %v186
    %v188 = vpop.f32.mrb[0].mxu0
    %v189 = vpop.f32.mrb[0].mxu0
    %v190 = vadd.f32 %v134, %v189
    %v191 = vpop.f32.mrb[0].mxu0
    %192 = vdwg.mxu0
    %v193 = vmax.f32 %v187, 0.0
    %v194 = vmax.f32 %v190, 0.0
    %v195 = vld [vmem:[#allocation2] sm:$0xff]
    %v196 = vld [vmem:[#allocation2 + $0x8] sm:$0xff]
    %v197 = vpack.c.bf16 %v194, %v193
    %v198 = vld [vmem:[#allocation9] sm:$0xf]
    %v199 = vld [vmem:[#allocation9 + $0x4] sm:$0xf]
    %v200 = vld [vmem:[#allocation9 + $0x8] sm:$0xf]
    %v201 = vld [vmem:[#allocation9 + $0xc] sm:$0xf]
    %v202 = vld [vmem:[#allocation9 + $0x10] sm:$0xf]
    %v203 = vld [vmem:[#allocation9 + $0x14] sm:$0xf]
    %v204 = vld [vmem:[#allocation9 + $0x18] sm:$0xf]
    %v205 = vld [vmem:[#allocation9 + $0x1c] sm:$0xf]
    %v214 = vunpack.c.l.b16 %v198
    %v215 = vunpack.c.l.b16 %v199
    %v216 = vunpack.c.l.b16 %v200
    %v217 = vunpack.c.l.b16 %v201
    %v218 = vunpack.c.l.b16 %v202
    %v219 = vunpack.c.l.b16 %v203
    %v220 = vunpack.c.l.b16 %v204
    %v221 = vunpack.c.l.b16 %v205
    %v222 = vpack.c.b16 %v215, %v214
    %v223 = vpack.c.b16 %v217, %v216
    %v224 = vpack.c.b16 %v219, %v218
    %v225 = vpack.c.b16 %v221, %v220
    %vm230 = vcmask 523264
    %v232 = vsel %vm230, %v197, 0
    %234 = vmatprep.subr.bf16.mxu0 0
    %235 = vmatpush1.bf16.msra.mxu0 %v222
    %236 = vmatprep.subr.bf16.mxu0 0
    %237 = vmatpush1.bf16.msra.mxu0 %v223
    %238 = vmatprep.subr.bf16.mxu0 0
    %239 = vmatpush1.bf16.msra.mxu0 %v224
    %240 = vmatprep.subr.bf16.mxu0 0
    %241 = vmatpush1.bf16.msra.mxu0 %v225
    %242 = vmatprep.subr.bf16.mxu0 0
    %243 = vmatpush1.bf16.msra.mxu0 0
    %244 = vmatprep.subr.bf16.mxu0 0
    %245 = vmatpush1.bf16.msra.mxu0 0
    %246 = vmatprep.subr.bf16.mxu0 0
    %247 = vmatpush1.bf16.msra.mxu0 0
    %248 = vmatprep.subr.bf16.mxu0 0
    %249 = vmatpush1.bf16.msra.mxu0 0
    %250 = vmatprep.subr.bf16.mxu0 0
    %251 = vmatpush1.bf16.msra.mxu0 0
    %252 = vmatprep.subr.bf16.mxu0 0
    %253 = vmatpush1.bf16.msra.mxu0 0
    %254 = vmatprep.subr.bf16.mxu0 0
    %255 = vmatpush1.bf16.msra.mxu0 0
    %256 = vmatprep.subr.bf16.mxu0 0
    %257 = vmatpush1.bf16.msra.mxu0 0
    %258 = vmatprep.subr.bf16.mxu0 0
    %259 = vmatpush1.bf16.msra.mxu0 0
    %260 = vmatprep.subr.bf16.mxu0 0
    %261 = vmatpush1.bf16.msra.mxu0 0
    %262 = vmatprep.subr.bf16.mxu0 0
    %263 = vmatpush1.bf16.msra.mxu0 0
    %264 = vmatprep.subr.bf16.mxu0 0
    %265 = vmatpush1.bf16.msra.mxu0 0
    %266 = vmatprep.mubr.bf16.mxu0 0
    %267 = vmatmul.mubr.bf16.gmra.mrb[0].mxu0 %v232
    %v268 = vpop.f32.mrb[0].mxu0
    %v269 = vadd.f32 0.0, %v268
    %v270 = vpop.f32.mrb[0].mxu0
    %v271 = vpop.f32.mrb[0].mxu0
    %v272 = vadd.f32 0.0, %v271
    %v273 = vpop.f32.mrb[0].mxu0
    %274 = vdwg.mxu0
    %v275 = vadd.f32 %v195, %v269
    %v276 = vadd.f32 %v196, %v272
    %277 = vst.msk [vmem:[#allocation2] sm:$0xff] %vm148, %v275
    %278 = vst.msk [vmem:[#allocation2 + $0x8] sm:$0xff] %vm148, %v276
    // Predicated region
    $region62: #{encoder_block_forward.5} parent=1 // pred_check
      %p279 = pneg %p115
    $region63: #{encoder_block_forward.5} parent=1 // pred_check_branch
      %281 = sbr.rel (%p279) target = $region65
    $region64: #{encoder_block_forward.5} parent=1 // pred_region
      %v282 = vld [vmem:[#allocation3] sm:$0xff]
      %v283 = vld [vmem:[#allocation3 + $0x8] sm:$0xff]
      %v284 = vld [vmem:[#allocation2] sm:$0xff]
      %v285 = vld [vmem:[#allocation2 + $0x8] sm:$0xff]
      %v286 = vadd.f32 %v282, %v284
      %v287 = vadd.f32 %v283, %v285
      %v288 = vld [vmem:[#allocation11] sm:$0x1]
      %v290 = vlaneseq
      %v291 = vshrl.u32 %v290, 7
      %v292 = vsub.s32 0, %v291
      %v293 = vrot.slane %v288, %v292
      %v295 = vadd.f32 %v286, %v293
      %v296 = vadd.f32 %v287, %v293
      %v297 = vsel %vm148, %v295, 0.0
      %298 = vadd.xlane.f32.xlu0 %v297
      %v299 = vpop.xlane.xlu0 %298
      %v300 = vsel %vm148, %v296, 0.0
      %301 = vadd.xlane.f32.xlu0 %v300
      %v302 = vpop.xlane.xlu0 %301
      %v303 = vrcp.pop 32.0
      %v304 = vmul.f32 %v299, %v303
      %v305 = vmul.f32 %v302, %v303
      %v306 = vsub.f32 %v295, %v304
      %v307 = vsub.f32 %v296, %v305
      %v308 = vmul.f32 %v306, %v306
      %v309 = vmul.f32 %v307, %v307
      %v310 = vsel %vm148, %v308, 0.0
      %311 = vadd.xlane.f32.xlu0 %v310
      %v312 = vpop.xlane.xlu0 %311
      %v313 = vsel %vm148, %v309, 0.0
      %314 = vadd.xlane.f32.xlu0 %v313
      %v315 = vpop.xlane.xlu0 %314
      %v316 = vmul.f32 %v312, %v303
      %v317 = vmul.f32 %v315, %v303
      %v318 = vadd.f32 %v316, 1e-05
      %v319 = vadd.f32 %v317, 1e-05
      %v320 = vrsqrt.pop %v318
      %v321 = vrsqrt.pop %v319
      %v322 = vmul.f32 %v306, %v320
      %v323 = vmul.f32 %v307, %v321
      %v324 = vld [vmem:[#allocation12] sm:$0x1]
      %v326 = vlaneseq
      %v327 = vshrl.u32 %v326, 7
      %v328 = vsub.s32 0, %v327
      %v329 = vrot.slane %v324, %v328
      %v331 = vmul.f32 %v322, %v329
      %v332 = vmul.f32 %v323, %v329
      %v333 = vld [vmem:[#allocation14] sm:$0x1]
      %v335 = vlaneseq
      %v336 = vshrl.u32 %v335, 7
      %v337 = vsub.s32 0, %v336
      %v338 = vrot.slane %v333, %v337
      %v340 = vadd.f32 %v331, %v338
      %v341 = vadd.f32 %v332, %v338
      %342 = vst.msk [vmem:[#allocation15] sm:$0xff] %vm148, %v340
      %343 = vst.msk [vmem:[#allocation15 + $0x8] sm:$0xff] %vm148, %v341
    $region65: #{encoder_block_forward.5} parent=1 // pred_fallthru
      _
    // Predicated region
    $region66: #{encoder_block_forward.5} parent=1 // pred_check
      _
    $region67: #{encoder_block_forward.5} parent=1 // pred_check_branch
      %345 = sbr.rel (0) target = $region69
    $region68: #{encoder_block_forward.5} parent=1 // pred_region
      %s347 = ssub.s32 256, 256
      %348 = vsyncadd [#allocation5], %s347
      %s349 = sshll.u32 [#allocation15], 4
      %s350 = int_to_ptr.vmem [resolvable:$true] %s349
      %355 = dma.vmem_to_hbm [thread:$0]  %s350, 256, %s7, [#allocation5], 128, 128, 8
    $region69: #{encoder_block_forward.5} parent=1 // pred_fallthru
      _
    // Predicated region
    $region70: #{encoder_block_forward.5} parent=1 // pred_check
      _
    $region71: #{encoder_block_forward.5} parent=1 // pred_check_branch
      %357 = sbr.rel (0) target = $region73
    $region72: #{encoder_block_forward.5} parent=1 // pred_region
      %358 = dma.done [#allocation5], 256
    $region73: #{encoder_block_forward.5} parent=1 // pred_fallthru
      _
    %359 = vsyncpa [#allocation4], 1
    %360 = vsyncpa [#allocation7], 1
    %361 = vsyncpa [#allocation10], 1
    %362 = vsyncpa [#allocation13], 1
    %363 = vsyncpa [#allocation5], 1

// kernel: encoder_block_forward.4
$region0: #{encoder_block_forward.4}
  #allocation0 [shape = 'u32[]', space=smem, size = 0x4, offset = 0x4, fixed_abs, tag = 'smem constant byte address 0x4 - core index']
  #allocation1 [shape = 'u32[144,128]{1,0:T(1,128)}', space=vmem, size = 0x12000, scoped, tag = 'internal scratch']
  %s0 = inlined_call_operand.hbm [shape: f32[16,32], index: 0, kind: input, shape index: {}]
  %s1 = inlined_call_operand.hbm [shape: bf16[2,4,8,8], index: 1, kind: input, shape index: {}]
  %s2 = inlined_call_operand.hbm [shape: bf16[2,4,8,8], index: 2, kind: input, shape index: {}]
  %s3 = inlined_call_operand.hbm [shape: bf16[2,4,8,8], index: 3, kind: input, shape index: {}]
  %s4 = inlined_call_operand.hbm [shape: bf16[4,8,32], index: 4, kind: input, shape index: {}]
  %s5 = inlined_call_operand.hbm [shape: f32[1,32], index: 5, kind: input, shape index: {}]
  %s6 = inlined_call_operand.hbm [shape: f32[1,32], index: 6, kind: input, shape index: {}]
  %s7 = inlined_call_operand.hbm [shape: f32[1,32], index: 7, kind: input, shape index: {}]
  %s8 = inlined_call_operand.hbm [shape: f32[16,32], index: 8, kind: output, shape index: {}]
  %s9 = sld [smem:[#allocation0]]
  $region97: #{encoder_block_forward.4} parent=0
    _
  %s11 = ssub.s32 1, %s9
  %s12 = scalar_select 0, %s11, %s9
  $region1: #{encoder_block_forward.4} parent=0
    #allocation2 [shape = 'u8[8192]{0}', space=vmem, size = 0x2000, scoped, tag = 'input window, operand 0']
    #allocation3 [shape = 's32[2]{0}', space=sflag, size = 0x8, scoped, tag = 'scoped memory for encoder_block_forward.4']
    #allocation4 [shape = 's32[2]{0}', space=sflag, size = 0x8, scoped, tag = 'scoped memory for encoder_block_forward.4']
    #allocation5 [shape = 'u8[16384]{0}', space=vmem, size = 0x4000, scoped, tag = 'input window, operand 1']
    #allocation6 [shape = 's32[2]{0}', space=sflag, size = 0x8, scoped, tag = 'scoped memory for encoder_block_forward.4']
    #allocation7 [shape = 'u8[16384]{0}', space=vmem, size = 0x4000, scoped, tag = 'input window, operand 2']
    #allocation8 [shape = 'u8[16384]{0}', space=vmem, size = 0x4000, scoped, tag = 'input window, operand 3']
    #allocation9 [shape = 's32[2]{0}', space=sflag, size = 0x8, scoped, tag = 'scoped memory for encoder_block_forward.4']
    #allocation10 [shape = 'u8[8192]{0}', space=vmem, size = 0x2000, scoped, tag = 'input window, operand 4, single buffered']
    #allocation11 [shape = 'u8[512]{0}', space=vmem, size = 0x400, scoped, tag = 'input window, operand 5, single buffered']
    #allocation12 [shape = 's32[1]{0}', space=sflag, size = 0x4, scoped, tag = 'scoped memory for encoder_block_forward.4']
    #allocation13 [shape = 'u8[512]{0}', space=vmem, size = 0x400, scoped, tag = 'input window, operand 6, single buffered']
    #allocation14 [shape = 'u8[512]{0}', space=vmem, size = 0x400, scoped, tag = 'input window, operand 7, single buffered']
    #allocation15 [shape = 's32[1]{0}', space=sflag, size = 0x4, scoped, tag = 'scoped memory for encoder_block_forward.4']
    #allocation16 [shape = 'u8[8192]{0}', space=vmem, size = 0x2000, scoped, tag = 'output window, operand 0']
    %13 = vsyncpa [#allocation3], 0
    %s14 = scalar_lea.sflag [#allocation3], 1
    %15 = vsyncpa %s14, 0
    %16 = vsyncpa [#allocation6], 0
    %s17 = scalar_lea.sflag [#allocation6], 1
    %18 = vsyncpa %s17, 0
    %19 = vsyncpa [#allocation9], 0
    %s20 = scalar_lea.sflag [#allocation9], 1
    %21 = vsyncpa %s20, 0
    %22 = vsyncpa [#allocation12], 0
    %23 = vsyncpa [#allocation15], 0
    %24 = vsyncpa [#allocation4], 0
    %s25 = scalar_lea.sflag [#allocation4], 1
    %26 = vsyncpa %s25, 0
    loop: start=0, step=1, limit=4
    $region2: #{encoder_block_forward.4} parent=1 // loop_pre_header
      _
    $region3: #{encoder_block_forward.4} parent=1 // loop_header
      %s28 = sphi 0, %s32
      %p29 = scmp.ge.s32.totalorder %s28, 4
      %s38 = sphi 0, %s40
      %s41 = sphi 0, %s38
      %s42 = sphi 0, %s41
      %s58 = sphi 0, %s42
      %s64 = sphi 0, %s66
      %s67 = sphi 0, %s64
      %s68 = sphi 0, %s67
      %s84 = sphi 0, %s68
      %s90 = sphi 0, %s92
      %s93 = sphi 0, %s90
      %s94 = sphi 0, %s93
      %s110 = sphi 0, %s94
      %s116 = sphi 0, %s118
      %s119 = sphi 0, %s116
      %s120 = sphi 0, %s119
      %s136 = sphi 0, %s120
      %s140 = sphi 0, %s140
      %s142 = sphi 0, %s140
      %s143 = sphi 0, %s142
      %s157 = sphi 0, %s143
      %s161 = sphi 0, %s161
      %s163 = sphi 0, %s161
      %s164 = sphi 0, %s163
      %s178 = sphi 0, %s164
      %s182 = sphi 0, %s182
      %s184 = sphi 0, %s182
      %s185 = sphi 0, %s184
      %s199 = sphi 0, %s185
      %s203 = sphi 0, %s203
      %s205 = sphi 0, %s203
      %s206 = sphi 0, %s205
      %s220 = sphi 0, %s206
      %s226 = sphi 0, %s228
      %s229 = sphi 0, %s226
      %s230 = sphi 0, %s229
      %s246 = sphi 0, %s230
    $region4: #{encoder_block_forward.4} parent=1 // loop_header_branch
      %31 = sbr.rel (%p29) target = $region8
    $region5: #{encoder_block_forward.4} parent=1 // loop_body
      %s33 = ssub.s32 %s28, 1
      %s34 = ssub.s32 %s28, 2
      %s35 = sadd.s32 %s28, 1
      %s36 = ssub.s32 %s28, %s35
      %p37 = scmp.eq.s32.totalorder %s36, 0
      %s39 = sadd.s32 %s38, 1
      %s40 = scalar_select %p37, %s38, %s39
      %p43 = pneg %p37
      %p44 = scmp.eq.s32.totalorder %s28, 1
      %p45 = por %p43, %p44
      %p46 = scmp.ne.s32.totalorder %s38, %s41
      %p47 = scmp.eq.s32.totalorder %s28, 0
      %p48 = por %p46, %p47
      %p49 = scmp.ne.s32.totalorder %s38, %s41
      %p50 = scmp.eq.s32.totalorder %s33, 1
      %p51 = por %p49, %p50
      %p52 = scmp.ne.s32.totalorder %s41, %s42
      %p53 = scmp.eq.s32.totalorder %s33, 0
      %p54 = por %p52, %p53
      %p55 = scmp.ne.s32.totalorder %s41, %s42
      %p56 = scmp.eq.s32.totalorder %s34, 1
      %p57 = por %p55, %p56
      %p59 = scmp.ne.s32.totalorder %s42, %s58
      %p60 = scmp.eq.s32.totalorder %s34, 0
      %p61 = por %p59, %p60
      %s62 = ssub.s32 %s28, %s35
      %p63 = scmp.eq.s32.totalorder %s62, 0
      %s65 = sadd.s32 %s64, 1
      %s66 = scalar_select %p63, %s64, %s65
      %p69 = pneg %p63
      %p70 = scmp.eq.s32.totalorder %s28, 1
      %p71 = por %p69, %p70
      %p72 = scmp.ne.s32.totalorder %s64, %s67
      %p73 = scmp.eq.s32.totalorder %s28, 0
      %p74 = por %p72, %p73
      %p75 = scmp.ne.s32.totalorder %s64, %s67
      %p76 = scmp.eq.s32.totalorder %s33, 1
      %p77 = por %p75, %p76
      %p78 = scmp.ne.s32.totalorder %s67, %s68
      %p79 = scmp.eq.s32.totalorder %s33, 0
      %p80 = por %p78, %p79
      %p81 = scmp.ne.s32.totalorder %s67, %s68
      %p82 = scmp.eq.s32.totalorder %s34, 1
      %p83 = por %p81, %p82
      %p85 = scmp.ne.s32.totalorder %s68, %s84
      %p86 = scmp.eq.s32.totalorder %s34, 0
      %p87 = por %p85, %p86
      %s88 = ssub.s32 %s28, %s35
      %p89 = scmp.eq.s32.totalorder %s88, 0
      %s91 = sadd.s32 %s90, 1
      %s92 = scalar_select %p89, %s90, %s91
      %p95 = pneg %p89
      %p96 = scmp.eq.s32.totalorder %s28, 1
      %p97 = por %p95, %p96
      %p98 = scmp.ne.s32.totalorder %s90, %s93
      %p99 = scmp.eq.s32.totalorder %s28, 0
      %p100 = por %p98, %p99
      %p101 = scmp.ne.s32.totalorder %s90, %s93
      %p102 = scmp.eq.s32.totalorder %s33, 1
      %p103 = por %p101, %p102
      %p104 = scmp.ne.s32.totalorder %s93, %s94
      %p105 = scmp.eq.s32.totalorder %s33, 0
      %p106 = por %p104, %p105
      %p107 = scmp.ne.s32.totalorder %s93, %s94
      %p108 = scmp.eq.s32.totalorder %s34, 1
      %p109 = por %p107, %p108
      %p111 = scmp.ne.s32.totalorder %s94, %s110
      %p112 = scmp.eq.s32.totalorder %s34, 0
      %p113 = por %p111, %p112
      %s114 = ssub.s32 %s28, %s35
      %p115 = scmp.eq.s32.totalorder %s114, 0
      %s117 = sadd.s32 %s116, 1
      %s118 = scalar_select %p115, %s116, %s117
      %p121 = pneg %p115
      %p122 = scmp.eq.s32.totalorder %s28, 1
      %p123 = por %p121, %p122
      %p124 = scmp.ne.s32.totalorder %s116, %s119
      %p125 = scmp.eq.s32.totalorder %s28, 0
      %p126 = por %p124, %p125
      %p127 = scmp.ne.s32.totalorder %s116, %s119
      %p128 = scmp.eq.s32.totalorder %s33, 1
      %p129 = por %p127, %p128
      %p130 = scmp.ne.s32.totalorder %s119, %s120
      %p131 = scmp.eq.s32.totalorder %s33, 0
      %p132 = por %p130, %p131
      %p133 = scmp.ne.s32.totalorder %s119, %s120
      %p134 = scmp.eq.s32.totalorder %s34, 1
      %p135 = por %p133, %p134
      %p137 = scmp.ne.s32.totalorder %s120, %s136
      %p138 = scmp.eq.s32.totalorder %s34, 0
      %p139 = por %p137, %p138
      %s141 = sadd.s32 %s140, 1
      %p144 = scmp.eq.s32.totalorder %s28, 1
      %p145 = scmp.ne.s32.totalorder %s140, %s142
      %p146 = scmp.eq.s32.totalorder %s28, 0
      %p147 = por %p145, %p146
      %p148 = scmp.ne.s32.totalorder %s140, %s142
      %p149 = scmp.eq.s32.totalorder %s33, 1
      %p150 = por %p148, %p149
      %p151 = scmp.ne.s32.totalorder %s142, %s143
      %p152 = scmp.eq.s32.totalorder %s33, 0
      %p153 = por %p151, %p152
      %p154 = scmp.ne.s32.totalorder %s142, %s143
      %p155 = scmp.eq.s32.totalorder %s34, 1
      %p156 = por %p154, %p155
      %p158 = scmp.ne.s32.totalorder %s143, %s157
      %p159 = scmp.eq.s32.totalorder %s34, 0
      %p160 = por %p158, %p159
      %s162 = sadd.s32 %s161, 1
      %p165 = scmp.eq.s32.totalorder %s28, 1
      %p166 = scmp.ne.s32.totalorder %s161, %s163
      %p167 = scmp.eq.s32.totalorder %s28, 0
      %p168 = por %p166, %p167
      %p169 = scmp.ne.s32.totalorder %s161, %s163
      %p170 = scmp.eq.s32.totalorder %s33, 1
      %p171 = por %p169, %p170
      %p172 = scmp.ne.s32.totalorder %s163, %s164
      %p173 = scmp.eq.s32.totalorder %s33, 0
      %p174 = por %p172, %p173
      %p175 = scmp.ne.s32.totalorder %s163, %s164
      %p176 = scmp.eq.s32.totalorder %s34, 1
      %p177 = por %p175, %p176
      %p179 = scmp.ne.s32.totalorder %s164, %s178
      %p180 = scmp.eq.s32.totalorder %s34, 0
      %p181 = por %p179, %p180
      %s183 = sadd.s32 %s182, 1
      %p186 = scmp.eq.s32.totalorder %s28, 1
      %p187 = scmp.ne.s32.totalorder %s182, %s184
      %p188 = scmp.eq.s32.totalorder %s28, 0
      %p189 = por %p187, %p188
      %p190 = scmp.ne.s32.totalorder %s182, %s184
      %p191 = scmp.eq.s32.totalorder %s33, 1
      %p192 = por %p190, %p191
      %p193 = scmp.ne.s32.totalorder %s184, %s185
      %p194 = scmp.eq.s32.totalorder %s33, 0
      %p195 = por %p193, %p194
      %p196 = scmp.ne.s32.totalorder %s184, %s185
      %p197 = scmp.eq.s32.totalorder %s34, 1
      %p198 = por %p196, %p197
      %p200 = scmp.ne.s32.totalorder %s185, %s199
      %p201 = scmp.eq.s32.totalorder %s34, 0
      %p202 = por %p200, %p201
      %s204 = sadd.s32 %s203, 1
      %p207 = scmp.eq.s32.totalorder %s28, 1
      %p208 = scmp.ne.s32.totalorder %s203, %s205
      %p209 = scmp.eq.s32.totalorder %s28, 0
      %p210 = por %p208, %p209
      %p211 = scmp.ne.s32.totalorder %s203, %s205
      %p212 = scmp.eq.s32.totalorder %s33, 1
      %p213 = por %p211, %p212
      %p214 = scmp.ne.s32.totalorder %s205, %s206
      %p215 = scmp.eq.s32.totalorder %s33, 0
      %p216 = por %p214, %p215
      %p217 = scmp.ne.s32.totalorder %s205, %s206
      %p218 = scmp.eq.s32.totalorder %s34, 1
      %p219 = por %p217, %p218
      %p221 = scmp.ne.s32.totalorder %s206, %s220
      %p222 = scmp.eq.s32.totalorder %s34, 0
      %p223 = por %p221, %p222
      %s224 = ssub.s32 %s28, %s35
      %p225 = scmp.eq.s32.totalorder %s224, 0
      %s227 = sadd.s32 %s226, 1
      %s228 = scalar_select %p225, %s226, %s227
      %p231 = pneg %p225
      %p232 = scmp.eq.s32.totalorder %s28, 1
      %p233 = por %p231, %p232
      %p234 = scmp.ne.s32.totalorder %s226, %s229
      %p235 = scmp.eq.s32.totalorder %s28, 0
      %p236 = por %p234, %p235
      %p237 = scmp.ne.s32.totalorder %s226, %s229
      %p238 = scmp.eq.s32.totalorder %s33, 1
      %p239 = por %p237, %p238
      %p240 = scmp.ne.s32.totalorder %s229, %s230
      %p241 = scmp.eq.s32.totalorder %s33, 0
      %p242 = por %p240, %p241
      %p243 = scmp.ne.s32.totalorder %s229, %s230
      %p244 = scmp.eq.s32.totalorder %s34, 1
      %p245 = por %p243, %p244
      %p247 = scmp.ne.s32.totalorder %s230, %s246
      %p248 = scmp.eq.s32.totalorder %s34, 0
      %p249 = por %p247, %p248
      %p250 = scmp.le.s32.totalorder 1, %s28
      %p251 = scmp.lt.s32.totalorder %s28, 3
      %p252 = pnand %p250, %p251
      %p253 = pneg %p252
      // Predicated region
      $region9: #{encoder_block_forward.4} parent=5 // pred_check
        _
      $region10: #{encoder_block_forward.4} parent=5 // pred_check_branch
        %255 = sbr.rel (%p252) target = $region12
      $region11: #{encoder_block_forward.4} parent=5 // pred_region
        %s256 = ssub.s32 %s28, 1
        // Predicated region
        $region13: #{encoder_block_forward.4} parent=11 // pred_check
          %p257 = pneg %p153
        $region14: #{encoder_block_forward.4} parent=11 // pred_check_branch
          %259 = sbr.rel (%p257) target = $region16
        $region15: #{encoder_block_forward.4} parent=11 // pred_region
          %s261 = ssub.s32 256, 256
          %262 = vsyncadd [#allocation9], %s261
          %s263 = sshll.u32 [#allocation10], 4
          %s264 = int_to_ptr.vmem [resolvable:$true] %s263
          %269 = dma.hbm_to_vmem [thread:$0]  %s4, 256, %s264, [#allocation9], 64, 64, 4
        $region16: #{encoder_block_forward.4} parent=11 // pred_fallthru
          _
        // Predicated region
        $region17: #{encoder_block_forward.4} parent=11 // pred_check
          %p270 = pneg %p174
        $region18: #{encoder_block_forward.4} parent=11 // pred_check_branch
          %272 = sbr.rel (%p270) target = $region20
        $region19: #{encoder_block_forward.4} parent=11 // pred_region
          %s274 = ssub.s32 16, 16
          %275 = vsyncadd [#allocation12], %s274
          %s277 = sshll.u32 [#allocation11], 4
          %s278 = int_to_ptr.vmem [resolvable:$true] %s277
          %280 = dma.hbm_to_vmem [thread:$0]  %s5, 16, %s278, [#allocation12]
        $region20: #{encoder_block_forward.4} parent=11 // pred_fallthru
          _
        // Predicated region
        $region21: #{encoder_block_forward.4} parent=11 // pred_check
          %p281 = pneg %p195
        $region22: #{encoder_block_forward.4} parent=11 // pred_check_branch
          %283 = sbr.rel (%p281) target = $region24
        $region23: #{encoder_block_forward.4} parent=11 // pred_region
          %s285 = ssub.s32 16, 16
          %286 = vsyncadd [#allocation12], %s285
          %s288 = sshll.u32 [#allocation13], 4
          %s289 = int_to_ptr.vmem [resolvable:$true] %s288
          %291 = dma.hbm_to_vmem [thread:$0]  %s6, 16, %s289, [#allocation12]
        $region24: #{encoder_block_forward.4} parent=11 // pred_fallthru
          _
        // Predicated region
        $region25: #{encoder_block_forward.4} parent=11 // pred_check
          %p292 = pneg %p216
        $region26: #{encoder_block_forward.4} parent=11 // pred_check_branch
          %294 = sbr.rel (%p292) target = $region28
        $region27: #{encoder_block_forward.4} parent=11 // pred_region
          %s296 = ssub.s32 16, 16
          %297 = vsyncadd [#allocation15], %s296
          %s299 = sshll.u32 [#allocation14], 4
          %s300 = int_to_ptr.vmem [resolvable:$true] %s299
          %302 = dma.hbm_to_vmem [thread:$0]  %s7, 16, %s300, [#allocation15]
        $region28: #{encoder_block_forward.4} parent=11 // pred_fallthru
          _
      $region12: #{encoder_block_forward.4} parent=5 // pred_fallthru
        _
      %p303 = scmp.lt.s32.totalorder %s28, 2
      // Predicated region
      $region29: #{encoder_block_forward.4} parent=5 // pred_check
        %p304 = pneg %p303
      $region30: #{encoder_block_forward.4} parent=5 // pred_check_branch
        %306 = sbr.rel (%p304) target = $region32
      $region31: #{encoder_block_forward.4} parent=5 // pred_region
        // Predicated region
        $region33: #{encoder_block_forward.4} parent=31 // pred_check
          %p307 = pneg %p48
        $region34: #{encoder_block_forward.4} parent=31 // pred_check_branch
          %309 = sbr.rel (%p307) target = $region36
        $region35: #{encoder_block_forward.4} parent=31 // pred_region
          %s310 = sand.u32 %s38, 1
          %s311 = scalar_lea.sflag [#allocation3], %s310
          %s312 = sand.u32 %s38, 1
          %s313 = smul.addr %s312, 8
          %s314 = scalar_lea.vmem [#allocation2], %s313
          %s316 = ssub.s32 128, 128
          %317 = vsyncadd %s311, %s316
          %s318 = smul.addr %s28, 128
          %s319 = scalar_lea.hbm %s0, %s318
          %s321 = sshll.u32 %s314, 4
          %s322 = int_to_ptr.vmem [resolvable:$true] %s321
          %324 = dma.hbm_to_vmem [thread:$0]  %s319, 128, %s322, %s311
        $region36: #{encoder_block_forward.4} parent=31 // pred_fallthru
          _
        // Predicated region
        $region37: #{encoder_block_forward.4} parent=31 // pred_check
          %p325 = pneg %p74
        $region38: #{encoder_block_forward.4} parent=31 // pred_check_branch
          %327 = sbr.rel (%p325) target = $region40
        $region39: #{encoder_block_forward.4} parent=31 // pred_region
          %s328 = sand.u32 %s28, 1
          %s329 = scalar_lea.sflag [#allocation6], %s328
          %s330 = sand.u32 %s64, 1
          %s331 = smul.addr %s330, 16
          %s332 = scalar_lea.vmem [#allocation5], %s331
          %s334 = ssub.s32 256, 256
          %335 = vsyncadd %s329, %s334
          %s336 = smul.addr %s28, 4
          %s337 = smul.addr %s336, 64
          %s338 = scalar_lea.hbm %s1, %s337
          %s339 = sshll.u32 %s332, 4
          %s340 = int_to_ptr.vmem [resolvable:$true] %s339
          %345 = dma.hbm_to_vmem [thread:$0]  %s338, 256, %s340, %s329, 64, 64, 4
        $region40: #{encoder_block_forward.4} parent=31 // pred_fallthru
          _
        // Predicated region
        $region41: #{encoder_block_forward.4} parent=31 // pred_check
          %p346 = pneg %p100
        $region42: #{encoder_block_forward.4} parent=31 // pred_check_branch
          %348 = sbr.rel (%p346) target = $region44
        $region43: #{encoder_block_forward.4} parent=31 // pred_region
          %s349 = sand.u32 %s28, 1
          %s350 = scalar_lea.sflag [#allocation6], %s349
          %s351 = sand.u32 %s90, 1
          %s352 = smul.addr %s351, 16
          %s353 = scalar_lea.vmem [#allocation7], %s352
          %s355 = ssub.s32 256, 256
          %356 = vsyncadd %s350, %s355
          %s357 = smul.addr %s28, 4
          %s358 = smul.addr %s357, 64
          %s359 = scalar_lea.hbm %s2, %s358
          %s360 = sshll.u32 %s353, 4
          %s361 = int_to_ptr.vmem [resolvable:$true] %s360
          %366 = dma.hbm_to_vmem [thread:$0]  %s359, 256, %s361, %s350, 64, 64, 4
        $region44: #{encoder_block_forward.4} parent=31 // pred_fallthru
          _
        // Predicated region
        $region45: #{encoder_block_forward.4} parent=31 // pred_check
          %p367 = pneg %p126
        $region46: #{encoder_block_forward.4} parent=31 // pred_check_branch
          %369 = sbr.rel (%p367) target = $region48
        $region47: #{encoder_block_forward.4} parent=31 // pred_region
          %s370 = sand.u32 %s28, 1
          %s371 = scalar_lea.sflag [#allocation9], %s370
          %s372 = sand.u32 %s116, 1
          %s373 = smul.addr %s372, 16
          %s374 = scalar_lea.vmem [#allocation8], %s373
          %s376 = ssub.s32 256, 256
          %377 = vsyncadd %s371, %s376
          %s378 = smul.addr %s28, 4
          %s379 = smul.addr %s378, 64
          %s380 = scalar_lea.hbm %s3, %s379
          %s381 = sshll.u32 %s374, 4
          %s382 = int_to_ptr.vmem [resolvable:$true] %s381
          %387 = dma.hbm_to_vmem [thread:$0]  %s380, 256, %s382, %s371, 64, 64, 4
        $region48: #{encoder_block_forward.4} parent=31 // pred_fallthru
          _
      $region32: #{encoder_block_forward.4} parent=5 // pred_fallthru
        _
      %p388 = scmp.le.s32.totalorder 1, %s28
      %p389 = scmp.lt.s32.totalorder %s28, 3
      %p390 = pnand %p388, %p389
      %p391 = pneg %p390
      // Predicated region
      $region49: #{encoder_block_forward.4} parent=5 // pred_check
        _
      $region50: #{encoder_block_forward.4} parent=5 // pred_check_branch
        %393 = sbr.rel (%p390) target = $region52
      $region51: #{encoder_block_forward.4} parent=5 // pred_region
        %s394 = ssub.s32 %s28, 1
        %s395 = sand.u32 %s41, 1
        %s396 = scalar_lea.sflag [#allocation3], %s395
        %s397 = sand.u32 %s41, 1
        %s398 = smul.addr %s397, 8
        %s399 = scalar_lea.vmem [#allocation2], %s398
        // Predicated region
        $region53: #{encoder_block_forward.4} parent=51 // pred_check
          %p400 = pneg %p54
        $region54: #{encoder_block_forward.4} parent=51 // pred_check_branch
          %402 = sbr.rel (%p400) target = $region56
        $region55: #{encoder_block_forward.4} parent=51 // pred_region
          %403 = dma.done %s396, 128
        $region56: #{encoder_block_forward.4} parent=51 // pred_fallthru
          _
        %s404 = sand.u32 %s33, 1
        %s405 = scalar_lea.sflag [#allocation6], %s404
        %s406 = sand.u32 %s67, 1
        %s407 = smul.addr %s406, 16
        %s408 = scalar_lea.vmem [#allocation5], %s407
        // Predicated region
        $region57: #{encoder_block_forward.4} parent=51 // pred_check
          %p409 = pneg %p80
        $region58: #{encoder_block_forward.4} parent=51 // pred_check_branch
          %411 = sbr.rel (%p409) target = $region60
        $region59: #{encoder_block_forward.4} parent=51 // pred_region
          %412 = dma.done %s405, 256
        $region60: #{encoder_block_forward.4} parent=51 // pred_fallthru
          _
        %s413 = sand.u32 %s33, 1
        %s414 = scalar_lea.sflag [#allocation6], %s413
        %s415 = sand.u32 %s93, 1
        %s416 = smul.addr %s415, 16
        %s417 = scalar_lea.vmem [#allocation7], %s416
        // Predicated region
        $region61: #{encoder_block_forward.4} parent=51 // pred_check
          %p418 = pneg %p106
        $region62: #{encoder_block_forward.4} parent=51 // pred_check_branch
          %420 = sbr.rel (%p418) target = $region64
        $region63: #{encoder_block_forward.4} parent=51 // pred_region
          %421 = dma.done %s414, 256
        $region64: #{encoder_block_forward.4} parent=51 // pred_fallthru
          _
        %s422 = sand.u32 %s33, 1
        %s423 = scalar_lea.sflag [#allocation9], %s422
        %s424 = sand.u32 %s119, 1
        %s425 = smul.addr %s424, 16
        %s426 = scalar_lea.vmem [#allocation8], %s425
        // Predicated region
        $region65: #{encoder_block_forward.4} parent=51 // pred_check
          %p427 = pneg %p132
        $region66: #{encoder_block_forward.4} parent=51 // pred_check_branch
          %429 = sbr.rel (%p427) target = $region68
        $region67: #{encoder_block_forward.4} parent=51 // pred_region
          %430 = dma.done %s423, 256
        $region68: #{encoder_block_forward.4} parent=51 // pred_fallthru
          _
        // Predicated region
        $region69: #{encoder_block_forward.4} parent=51 // pred_check
          %p431 = pneg %p153
        $region70: #{encoder_block_forward.4} parent=51 // pred_check_branch
          %433 = sbr.rel (%p431) target = $region72
        $region71: #{encoder_block_forward.4} parent=51 // pred_region
          %434 = dma.done [#allocation9], 256
        $region72: #{encoder_block_forward.4} parent=51 // pred_fallthru
          _
        // Predicated region
        $region73: #{encoder_block_forward.4} parent=51 // pred_check
          %p435 = pneg %p174
        $region74: #{encoder_block_forward.4} parent=51 // pred_check_branch
          %437 = sbr.rel (%p435) target = $region76
        $region75: #{encoder_block_forward.4} parent=51 // pred_region
          %438 = dma.done [#allocation12], 16
        $region76: #{encoder_block_forward.4} parent=51 // pred_fallthru
          _
        // Predicated region
        $region77: #{encoder_block_forward.4} parent=51 // pred_check
          %p439 = pneg %p195
        $region78: #{encoder_block_forward.4} parent=51 // pred_check_branch
          %441 = sbr.rel (%p439) target = $region80
        $region79: #{encoder_block_forward.4} parent=51 // pred_region
          %442 = dma.done [#allocation12], 16
        $region80: #{encoder_block_forward.4} parent=51 // pred_fallthru
          _
        // Predicated region
        $region81: #{encoder_block_forward.4} parent=51 // pred_check
          %p443 = pneg %p216
        $region82: #{encoder_block_forward.4} parent=51 // pred_check_branch
          %445 = sbr.rel (%p443) target = $region84
        $region83: #{encoder_block_forward.4} parent=51 // pred_region
          %446 = dma.done [#allocation15], 16
        $region84: #{encoder_block_forward.4} parent=51 // pred_fallthru
          _
        %s447 = sand.u32 %s41, 1
        %s448 = scalar_lea.sflag [#allocation3], %s447
        %s449 = sand.u32 %s41, 1
        %s450 = smul.addr %s449, 8
        %s451 = scalar_lea.vmem [#allocation2], %s450
        %p452 = pneg %p54
        %p453 = pneg %p51
        %s454 = sand.u32 %s33, 1
        %s455 = scalar_lea.sflag [#allocation6], %s454
        %s456 = sand.u32 %s67, 1
        %s457 = smul.addr %s456, 16
        %s458 = scalar_lea.vmem [#allocation5], %s457
        %p459 = pneg %p80
        %p460 = pneg %p77
        %s461 = sand.u32 %s33, 1
        %s462 = scalar_lea.sflag [#allocation6], %s461
        %s463 = sand.u32 %s93, 1
        %s464 = smul.addr %s463, 16
        %s465 = scalar_lea.vmem [#allocation7], %s464
        %p466 = pneg %p106
        %p467 = pneg %p103
        %s468 = sand.u32 %s33, 1
        %s469 = scalar_lea.sflag [#allocation9], %s468
        %s470 = sand.u32 %s119, 1
        %s471 = smul.addr %s470, 16
        %s472 = scalar_lea.vmem [#allocation8], %s471
        %p473 = pneg %p132
        %p474 = pneg %p129
        %p475 = pneg %p153
        %p476 = pneg %p150
        %p477 = pneg %p174
        %p478 = pneg %p171
        %p479 = pneg %p195
        %p480 = pneg %p192
        %p481 = pneg %p216
        %p482 = pneg %p213
        %p483 = pneg %p242
        %p484 = pneg %p239
        %s485 = sand.u32 %s229, 1
        %s486 = scalar_lea.sflag [#allocation4], %s485
        %s487 = sand.u32 %s229, 1
        %s488 = smul.addr %s487, 8
        %s489 = scalar_lea.vmem [#allocation16], %s488
        %v491 = vld [vmem:[%s408] sm:$0xf]
        %v492 = vld [vmem:[%s408 + $0x4] sm:$0xf]
        %v493 = vld [vmem:[%s408 + $0x8] sm:$0xf]
        %v494 = vld [vmem:[%s408 + $0xc] sm:$0xf]
        %v495 = vld [vmem:[%s417] sm:$0xf]
        %v496 = vld [vmem:[%s417 + $0x4] sm:$0xf]
        %v497 = vld [vmem:[%s417 + $0x8] sm:$0xf]
        %v498 = vld [vmem:[%s417 + $0xc] sm:$0xf]
        %v499 = vld [vmem:[%s426] sm:$0xf]
        %v500 = vld [vmem:[%s426 + $0x4] sm:$0xf]
        %v501 = vld [vmem:[%s426 + $0x8] sm:$0xf]
        %v502 = vld [vmem:[%s426 + $0xc] sm:$0xf]
        %vm503 = vcmask 64512
        %v505 = vsel %vm503, %v491, 0
        %v508 = vsel %vm503, %v495, 0
        %510 = vmatprep.subr.bf16.mxu0 0
        %511 = vmatpush1.bf16.xpose.msra.mxu0 %v508
        %512 = vmatprep.subr.bf16.mxu0 0
        %513 = vmatpush1.bf16.xpose.msra.mxu0 0
        %514 = vmatprep.subr.bf16.mxu0 0
        %515 = vmatpush1.bf16.xpose.msra.mxu0 0
        %516 = vmatprep.subr.bf16.mxu0 0
        %517 = vmatpush1.bf16.xpose.msra.mxu0 0
        %518 = vmatprep.subr.bf16.mxu0 0
        %519 = vmatpush1.bf16.xpose.msra.mxu0 0
        %520 = vmatprep.subr.bf16.mxu0 0
        %521 = vmatpush1.bf16.xpose.msra.mxu0 0
        %522 = vmatprep.subr.bf16.mxu0 0
        %523 = vmatpush1.bf16.xpose.msra.mxu0 0
        %524 = vmatprep.subr.bf16.mxu0 0
        %525 = vmatpush1.bf16.xpose.msra.mxu0 0
        %526 = vmatprep.subr.bf16.mxu0 0
        %527 = vmatpush1.bf16.xpose.msra.mxu0 0
        %528 = vmatprep.subr.bf16.mxu0 0
        %529 = vmatpush1.bf16.xpose.msra.mxu0 0
        %530 = vmatprep.subr.bf16.mxu0 0
        %531 = vmatpush1.bf16.xpose.msra.mxu0 0
        %532 = vmatprep.subr.bf16.mxu0 0
        %533 = vmatpush1.bf16.xpose.msra.mxu0 0
        %534 = vmatprep.subr.bf16.mxu0 0
        %535 = vmatpush1.bf16.xpose.msra.mxu0 0
        %536 = vmatprep.subr.bf16.mxu0 0
        %537 = vmatpush1.bf16.xpose.msra.mxu0 0
        %538 = vmatprep.subr.bf16.mxu0 0
        %539 = vmatpush1.bf16.xpose.msra.mxu0 0
        %540 = vmatprep.subr.bf16.mxu0 0
        %541 = vmatpush1.bf16.xpose.msra.mxu0 0
        %542 = vmatprep.mubr.bf16.mxu0 0
        %543 = vmatmul.mubr.bf16.gmra.mrb[0].mxu0 %v505
        %v544 = vpop.f32.mrb[0].mxu0
        %v545 = vadd.f32 0.0, %v544
        %v546 = vpop.f32.mrb[0].mxu0
        %v547 = vpop.f32.mrb[0].mxu0
        %v548 = vpop.f32.mrb[0].mxu0
        %549 = vdwg.mxu0
        %v551 = vsel %vm503, %v492, 0
        %v554 = vsel %vm503, %v496, 0
        %556 = vmatprep.subr.bf16.mxu0 0
        %557 = vmatpush1.bf16.xpose.msra.mxu0 %v554
        %558 = vmatprep.subr.bf16.mxu0 0
        %559 = vmatpush1.bf16.xpose.msra.mxu0 0
        %560 = vmatprep.subr.bf16.mxu0 0
        %561 = vmatpush1.bf16.xpose.msra.mxu0 0
        %562 = vmatprep.subr.bf16.mxu0 0
        %563 = vmatpush1.bf16.xpose.msra.mxu0 0
        %564 = vmatprep.subr.bf16.mxu0 0
        %565 = vmatpush1.bf16.xpose.msra.mxu0 0
        %566 = vmatprep.subr.bf16.mxu0 0
        %567 = vmatpush1.bf16.xpose.msra.mxu0 0
        %568 = vmatprep.subr.bf16.mxu0 0
        %569 = vmatpush1.bf16.xpose.msra.mxu0 0
        %570 = vmatprep.subr.bf16.mxu0 0
        %571 = vmatpush1.bf16.xpose.msra.mxu0 0
        %572 = vmatprep.subr.bf16.mxu0 0
        %573 = vmatpush1.bf16.xpose.msra.mxu0 0
        %574 = vmatprep.subr.bf16.mxu0 0
        %575 = vmatpush1.bf16.xpose.msra.mxu0 0
        %576 = vmatprep.subr.bf16.mxu0 0
        %577 = vmatpush1.bf16.xpose.msra.mxu0 0
        %578 = vmatprep.subr.bf16.mxu0 0
        %579 = vmatpush1.bf16.xpose.msra.mxu0 0
        %580 = vmatprep.subr.bf16.mxu0 0
        %581 = vmatpush1.bf16.xpose.msra.mxu0 0
        %582 = vmatprep.subr.bf16.mxu0 0
        %583 = vmatpush1.bf16.xpose.msra.mxu0 0
        %584 = vmatprep.subr.bf16.mxu0 0
        %585 = vmatpush1.bf16.xpose.msra.mxu0 0
        %586 = vmatprep.subr.bf16.mxu0 0
        %587 = vmatpush1.bf16.xpose.msra.mxu0 0
        %588 = vmatprep.mubr.bf16.mxu0 0
        %589 = vmatmul.mubr.bf16.gmra.mrb[0].mxu0 %v551
        %v590 = vpop.f32.mrb[0].mxu0
        %v591 = vadd.f32 0.0, %v590
        %v592 = vpop.f32.mrb[0].mxu0
        %v593 = vpop.f32.mrb[0].mxu0
        %v594 = vpop.f32.mrb[0].mxu0
        %595 = vdwg.mxu0
        %v597 = vsel %vm503, %v493, 0
        %v600 = vsel %vm503, %v497, 0
        %602 = vmatprep.subr.bf16.mxu0 0
        %603 = vmatpush1.bf16.xpose.msra.mxu0 %v600
        %604 = vmatprep.subr.bf16.mxu0 0
        %605 = vmatpush1.bf16.xpose.msra.mxu0 0
        %606 = vmatprep.subr.bf16.mxu0 0
        %607 = vmatpush1.bf16.xpose.msra.mxu0 0
        %608 = vmatprep.subr.bf16.mxu0 0
        %609 = vmatpush1.bf16.xpose.msra.mxu0 0
        %610 = vmatprep.subr.bf16.mxu0 0
        %611 = vmatpush1.bf16.xpose.msra.mxu0 0
        %612 = vmatprep.subr.bf16.mxu0 0
        %613 = vmatpush1.bf16.xpose.msra.mxu0 0
        %614 = vmatprep.subr.bf16.mxu0 0
        %615 = vmatpush1.bf16.xpose.msra.mxu0 0
        %616 = vmatprep.subr.bf16.mxu0 0
        %617 = vmatpush1.bf16.xpose.msra.mxu0 0
        %618 = vmatprep.subr.bf16.mxu0 0
        %619 = vmatpush1.bf16.xpose.msra.mxu0 0
        %620 = vmatprep.subr.bf16.mxu0 0
        %621 = vmatpush1.bf16.xpose.msra.mxu0 0
        %622 = vmatprep.subr.bf16.mxu0 0
        %623 = vmatpush1.bf16.xpose.msra.mxu0 0
        %624 = vmatprep.subr.bf16.mxu0 0
        %625 = vmatpush1.bf16.xpose.msra.mxu0 0
        %626 = vmatprep.subr.bf16.mxu0 0
        %627 = vmatpush1.bf16.xpose.msra.mxu0 0
        %628 = vmatprep.subr.bf16.mxu0 0
        %629 = vmatpush1.bf16.xpose.msra.mxu0 0
        %630 = vmatprep.subr.bf16.mxu0 0
        %631 = vmatpush1.bf16.xpose.msra.mxu0 0
        %632 = vmatprep.subr.bf16.mxu0 0
        %633 = vmatpush1.bf16.xpose.msra.mxu0 0
        %634 = vmatprep.mubr.bf16.mxu0 0
        %635 = vmatmul.mubr.bf16.gmra.mrb[0].mxu0 %v597
        %v636 = vpop.f32.mrb[0].mxu0
        %v637 = vadd.f32 0.0, %v636
        %v638 = vpop.f32.mrb[0].mxu0
        %v639 = vpop.f32.mrb[0].mxu0
        %v640 = vpop.f32.mrb[0].mxu0
        %641 = vdwg.mxu0
        %v643 = vsel %vm503, %v494, 0
        %v646 = vsel %vm503, %v498, 0
        %648 = vmatprep.subr.bf16.mxu0 0
        %649 = vmatpush1.bf16.xpose.msra.mxu0 %v646
        %650 = vmatprep.subr.bf16.mxu0 0
        %651 = vmatpush1.bf16.xpose.msra.mxu0 0
        %652 = vmatprep.subr.bf16.mxu0 0
        %653 = vmatpush1.bf16.xpose.msra.mxu0 0
        %654 = vmatprep.subr.bf16.mxu0 0
        %655 = vmatpush1.bf16.xpose.msra.mxu0 0
        %656 = vmatprep.subr.bf16.mxu0 0
        %657 = vmatpush1.bf16.xpose.msra.mxu0 0
        %658 = vmatprep.subr.bf16.mxu0 0
        %659 = vmatpush1.bf16.xpose.msra.mxu0 0
        %660 = vmatprep.subr.bf16.mxu0 0
        %661 = vmatpush1.bf16.xpose.msra.mxu0 0
        %662 = vmatprep.subr.bf16.mxu0 0
        %663 = vmatpush1.bf16.xpose.msra.mxu0 0
        %664 = vmatprep.subr.bf16.mxu0 0
        %665 = vmatpush1.bf16.xpose.msra.mxu0 0
        %666 = vmatprep.subr.bf16.mxu0 0
        %667 = vmatpush1.bf16.xpose.msra.mxu0 0
        %668 = vmatprep.subr.bf16.mxu0 0
        %669 = vmatpush1.bf16.xpose.msra.mxu0 0
        %670 = vmatprep.subr.bf16.mxu0 0
        %671 = vmatpush1.bf16.xpose.msra.mxu0 0
        %672 = vmatprep.subr.bf16.mxu0 0
        %673 = vmatpush1.bf16.xpose.msra.mxu0 0
        %674 = vmatprep.subr.bf16.mxu0 0
        %675 = vmatpush1.bf16.xpose.msra.mxu0 0
        %676 = vmatprep.subr.bf16.mxu0 0
        %677 = vmatpush1.bf16.xpose.msra.mxu0 0
        %678 = vmatprep.subr.bf16.mxu0 0
        %679 = vmatpush1.bf16.xpose.msra.mxu0 0
        %680 = vmatprep.mubr.bf16.mxu0 0
        %681 = vmatmul.mubr.bf16.gmra.mrb[0].mxu0 %v643
        %v682 = vpop.f32.mrb[0].mxu0
        %v683 = vadd.f32 0.0, %v682
        %v684 = vpop.f32.mrb[0].mxu0
        %v685 = vpop.f32.mrb[0].mxu0
        %v686 = vpop.f32.mrb[0].mxu0
        %687 = vdwg.mxu0
        %v688 = vsel %vm503, %v545, -inf
        %689 = vmax.xlane.f32.xlu0 %v688
        %v690 = vpop.xlane.xlu0 %689
        %v691 = vsel %vm503, %v591, -inf
        %692 = vmax.xlane.f32.xlu0 %v691
        %v693 = vpop.xlane.xlu0 %692
        %v694 = vsel %vm503, %v637, -inf
        %695 = vmax.xlane.f32.xlu0 %v694
        %v696 = vpop.xlane.xlu0 %695
        %v697 = vsel %vm503, %v683, -inf
        %698 = vmax.xlane.f32.xlu0 %v697
        %v699 = vpop.xlane.xlu0 %698
        %v700 = vsub.f32 %v545, %v690
        %v701 = vsub.f32 %v591, %v693
        %v702 = vsub.f32 %v637, %v696
        %v703 = vsub.f32 %v683, %v699
        %v704 = vmul.f32 %v700, 1.442695
        %v705 = vpow.pop %v704
        %v706 = vmul.f32 %v701, 1.442695
        %v707 = vpow.pop %v706
        %v708 = vmul.f32 %v702, 1.442695
        %v709 = vpow.pop %v708
        %v710 = vmul.f32 %v703, 1.442695
        %v711 = vpow.pop %v710
        %v712 = vsel %vm503, %v705, 0.0
        %713 = vadd.xlane.f32.xlu0 %v712
        %v714 = vpop.xlane.xlu0 %713
        %v715 = vsel %vm503, %v707, 0.0
        %716 = vadd.xlane.f32.xlu0 %v715
        %v717 = vpop.xlane.xlu0 %716
        %v718 = vsel %vm503, %v709, 0.0
        %719 = vadd.xlane.f32.xlu0 %v718
        %v720 = vpop.xlane.xlu0 %719
        %v721 = vsel %vm503, %v711, 0.0
        %722 = vadd.xlane.f32.xlu0 %v721
        %v723 = vpop.xlane.xlu0 %722
        %v724 = vrcp.pop %v714
        %v725 = vrcp.pop %v717
        %v726 = vrcp.pop %v720
        %v727 = vrcp.pop %v723
        %v728 = vmul.f32 %v705, %v724
        %v729 = vmul.f32 %v707, %v725
        %v730 = vmul.f32 %v709, %v726
        %v731 = vmul.f32 %v711, %v727
        %v732 = vpack.c.bf16 %v728, %v728
        %v733 = vpack.c.bf16 %v729, %v729
        %v734 = vpack.c.bf16 %v730, %v730
        %v735 = vpack.c.bf16 %v731, %v731
        %v737 = vsel %vm503, %v732, 0
        %vm739 = vcmask 1043456
        %v741 = vsel %vm739, %v499, 0
        %743 = vmatprep.subr.bf16.mxu0 0
        %744 = vmatpush1.bf16.msra.mxu0 %v741
        %745 = vmatprep.subr.bf16.mxu0 0
        %746 = vmatpush1.bf16.msra.mxu0 0
        %747 = vmatprep.subr.bf16.mxu0 0
        %748 = vmatpush1.bf16.msra.mxu0 0
        %749 = vmatprep.subr.bf16.mxu0 0
        %750 = vmatpush1.bf16.msra.mxu0 0
        %751 = vmatprep.subr.bf16.mxu0 0
        %752 = vmatpush1.bf16.msra.mxu0 0
        %753 = vmatprep.subr.bf16.mxu0 0
        %754 = vmatpush1.bf16.msra.mxu0 0
        %755 = vmatprep.subr.bf16.mxu0 0
        %756 = vmatpush1.bf16.msra.mxu0 0
        %757 = vmatprep.subr.bf16.mxu0 0
        %758 = vmatpush1.bf16.msra.mxu0 0
        %759 = vmatprep.subr.bf16.mxu0 0
        %760 = vmatpush1.bf16.msra.mxu0 0
        %761 = vmatprep.subr.bf16.mxu0 0
        %762 = vmatpush1.bf16.msra.mxu0 0
        %763 = vmatprep.subr.bf16.mxu0 0
        %764 = vmatpush1.bf16.msra.mxu0 0
        %765 = vmatprep.subr.bf16.mxu0 0
        %766 = vmatpush1.bf16.msra.mxu0 0
        %767 = vmatprep.subr.bf16.mxu0 0
        %768 = vmatpush1.bf16.msra.mxu0 0
        %769 = vmatprep.subr.bf16.mxu0 0
        %770 = vmatpush1.bf16.msra.mxu0 0
        %771 = vmatprep.subr.bf16.mxu0 0
        %772 = vmatpush1.bf16.msra.mxu0 0
        %773 = vmatprep.subr.bf16.mxu0 0
        %774 = vmatpush1.bf16.msra.mxu0 0
        %775 = vmatprep.mubr.bf16.mxu0 0
        %776 = vmatmul.mubr.bf16.gmra.mrb[0].mxu0 %v737
        %v777 = vpop.f32.mrb[0].mxu0
        %v778 = vadd.f32 0.0, %v777
        %v779 = vpop.f32.mrb[0].mxu0
        %v780 = vpop.f32.mrb[0].mxu0
        %v781 = vpop.f32.mrb[0].mxu0
        %782 = vdwg.mxu0
        %v784 = vsel %vm503, %v733, 0
        %v787 = vsel %vm739, %v500, 0
        %789 = vmatprep.subr.bf16.mxu0 0
        %790 = vmatpush1.bf16.msra.mxu0 %v787
        %791 = vmatprep.subr.bf16.mxu0 0
        %792 = vmatpush1.bf16.msra.mxu0 0
        %793 = vmatprep.subr.bf16.mxu0 0
        %794 = vmatpush1.bf16.msra.mxu0 0
        %795 = vmatprep.subr.bf16.mxu0 0
        %796 = vmatpush1.bf16.msra.mxu0 0
        %797 = vmatprep.subr.bf16.mxu0 0
        %798 = vmatpush1.bf16.msra.mxu0 0
        %799 = vmatprep.subr.bf16.mxu0 0
        %800 = vmatpush1.bf16.msra.mxu0 0
        %801 = vmatprep.subr.bf16.mxu0 0
        %802 = vmatpush1.bf16.msra.mxu0 0
        %803 = vmatprep.subr.bf16.mxu0 0
        %804 = vmatpush1.bf16.msra.mxu0 0
        %805 = vmatprep.subr.bf16.mxu0 0
        %806 = vmatpush1.bf16.msra.mxu0 0
        %807 = vmatprep.subr.bf16.mxu0 0
        %808 = vmatpush1.bf16.msra.mxu0 0
        %809 = vmatprep.subr.bf16.mxu0 0
        %810 = vmatpush1.bf16.msra.mxu0 0
        %811 = vmatprep.subr.bf16.mxu0 0
        %812 = vmatpush1.bf16.msra.mxu0 0
        %813 = vmatprep.subr.bf16.mxu0 0
        %814 = vmatpush1.bf16.msra.mxu0 0
        %815 = vmatprep.subr.bf16.mxu0 0
        %816 = vmatpush1.bf16.msra.mxu0 0
        %817 = vmatprep.subr.bf16.mxu0 0
        %818 = vmatpush1.bf16.msra.mxu0 0
        %819 = vmatprep.subr.bf16.mxu0 0
        %820 = vmatpush1.bf16.msra.mxu0 0
        %821 = vmatprep.mubr.bf16.mxu0 0
        %822 = vmatmul.mubr.bf16.gmra.mrb[0].mxu0 %v784
        %v823 = vpop.f32.mrb[0].mxu0
        %v824 = vadd.f32 0.0, %v823
        %v825 = vpop.f32.mrb[0].mxu0
        %v826 = vpop.f32.mrb[0].mxu0
        %v827 = vpop.f32.mrb[0].mxu0
        %828 = vdwg.mxu0
        %v830 = vsel %vm503, %v734, 0
        %v833 = vsel %vm739, %v501, 0
        %835 = vmatprep.subr.bf16.mxu0 0
        %836 = vmatpush1.bf16.msra.mxu0 %v833
        %837 = vmatprep.subr.bf16.mxu0 0
        %838 = vmatpush1.bf16.msra.mxu0 0
        %839 = vmatprep.subr.bf16.mxu0 0
        %840 = vmatpush1.bf16.msra.mxu0 0
        %841 = vmatprep.subr.bf16.mxu0 0
        %842 = vmatpush1.bf16.msra.mxu0 0
        %843 = vmatprep.subr.bf16.mxu0 0
        %844 = vmatpush1.bf16.msra.mxu0 0
        %845 = vmatprep.subr.bf16.mxu0 0
        %846 = vmatpush1.bf16.msra.mxu0 0
        %847 = vmatprep.subr.bf16.mxu0 0
        %848 = vmatpush1.bf16.msra.mxu0 0
        %849 = vmatprep.subr.bf16.mxu0 0
        %850 = vmatpush1.bf16.msra.mxu0 0
        %851 = vmatprep.subr.bf16.mxu0 0
        %852 = vmatpush1.bf16.msra.mxu0 0
        %853 = vmatprep.subr.bf16.mxu0 0
        %854 = vmatpush1.bf16.msra.mxu0 0
        %855 = vmatprep.subr.bf16.mxu0 0
        %856 = vmatpush1.bf16.msra.mxu0 0
        %857 = vmatprep.subr.bf16.mxu0 0
        %858 = vmatpush1.bf16.msra.mxu0 0
        %859 = vmatprep.subr.bf16.mxu0 0
        %860 = vmatpush1.bf16.msra.mxu0 0
        %861 = vmatprep.subr.bf16.mxu0 0
        %862 = vmatpush1.bf16.msra.mxu0 0
        %863 = vmatprep.subr.bf16.mxu0 0
        %864 = vmatpush1.bf16.msra.mxu0 0
        %865 = vmatprep.subr.bf16.mxu0 0
        %866 = vmatpush1.bf16.msra.mxu0 0
        %867 = vmatprep.mubr.bf16.mxu0 0
        %868 = vmatmul.mubr.bf16.gmra.mrb[0].mxu0 %v830
        %v869 = vpop.f32.mrb[0].mxu0
        %v870 = vadd.f32 0.0, %v869
        %v871 = vpop.f32.mrb[0].mxu0
        %v872 = vpop.f32.mrb[0].mxu0
        %v873 = vpop.f32.mrb[0].mxu0
        %874 = vdwg.mxu0
        %v876 = vsel %vm503, %v735, 0
        %v879 = vsel %vm739, %v502, 0
        %881 = vmatprep.subr.bf16.mxu0 0
        %882 = vmatpush1.bf16.msra.mxu0 %v879
        %883 = vmatprep.subr.bf16.mxu0 0
        %884 = vmatpush1.bf16.msra.mxu0 0
        %885 = vmatprep.subr.bf16.mxu0 0
        %886 = vmatpush1.bf16.msra.mxu0 0
        %887 = vmatprep.subr.bf16.mxu0 0
        %888 = vmatpush1.bf16.msra.mxu0 0
        %889 = vmatprep.subr.bf16.mxu0 0
        %890 = vmatpush1.bf16.msra.mxu0 0
        %891 = vmatprep.subr.bf16.mxu0 0
        %892 = vmatpush1.bf16.msra.mxu0 0
        %893 = vmatprep.subr.bf16.mxu0 0
        %894 = vmatpush1.bf16.msra.mxu0 0
        %895 = vmatprep.subr.bf16.mxu0 0
        %896 = vmatpush1.bf16.msra.mxu0 0
        %897 = vmatprep.subr.bf16.mxu0 0
        %898 = vmatpush1.bf16.msra.mxu0 0
        %899 = vmatprep.subr.bf16.mxu0 0
        %900 = vmatpush1.bf16.msra.mxu0 0
        %901 = vmatprep.subr.bf16.mxu0 0
        %902 = vmatpush1.bf16.msra.mxu0 0
        %903 = vmatprep.subr.bf16.mxu0 0
        %904 = vmatpush1.bf16.msra.mxu0 0
        %905 = vmatprep.subr.bf16.mxu0 0
        %906 = vmatpush1.bf16.msra.mxu0 0
        %907 = vmatprep.subr.bf16.mxu0 0
        %908 = vmatpush1.bf16.msra.mxu0 0
        %909 = vmatprep.subr.bf16.mxu0 0
        %910 = vmatpush1.bf16.msra.mxu0 0
        %911 = vmatprep.subr.bf16.mxu0 0
        %912 = vmatpush1.bf16.msra.mxu0 0
        %913 = vmatprep.mubr.bf16.mxu0 0
        %914 = vmatmul.mubr.bf16.gmra.mrb[0].mxu0 %v876
        %v915 = vpop.f32.mrb[0].mxu0
        %v916 = vadd.f32 0.0, %v915
        %v917 = vpop.f32.mrb[0].mxu0
        %v918 = vpop.f32.mrb[0].mxu0
        %v919 = vpop.f32.mrb[0].mxu0
        %920 = vdwg.mxu0
        %v921 = vpack.c.bf16 %v778, %v778
        %v922 = vpack.c.bf16 %v824, %v824
        %v923 = vpack.c.bf16 %v870, %v870
        %v924 = vpack.c.bf16 %v916, %v916
        %v925 = vld [vmem:[#allocation10] sm:$0xf]
        %v926 = vld [vmem:[#allocation10 + $0x4] sm:$0xf]
        %v927 = vld [vmem:[#allocation10 + $0x8] sm:$0xf]
        %v928 = vld [vmem:[#allocation10 + $0xc] sm:$0xf]
        %v930 = vsel %vm503, %v921, 0
        %v933 = vsel %vm739, %v925, 0
        %935 = vmatprep.subr.bf16.mxu0 0
        %936 = vmatpush1.bf16.msra.mxu0 %v933
        %937 = vmatprep.subr.bf16.mxu0 0
        %938 = vmatpush1.bf16.msra.mxu0 0
        %939 = vmatprep.subr.bf16.mxu0 0
        %940 = vmatpush1.bf16.msra.mxu0 0
        %941 = vmatprep.subr.bf16.mxu0 0
        %942 = vmatpush1.bf16.msra.mxu0 0
        %943 = vmatprep.subr.bf16.mxu0 0
        %944 = vmatpush1.bf16.msra.mxu0 0
        %945 = vmatprep.subr.bf16.mxu0 0
        %946 = vmatpush1.bf16.msra.mxu0 0
        %947 = vmatprep.subr.bf16.mxu0 0
        %948 = vmatpush1.bf16.msra.mxu0 0
        %949 = vmatprep.subr.bf16.mxu0 0
        %950 = vmatpush1.bf16.msra.mxu0 0
        %951 = vmatprep.subr.bf16.mxu0 0
        %952 = vmatpush1.bf16.msra.mxu0 0
        %953 = vmatprep.subr.bf16.mxu0 0
        %954 = vmatpush1.bf16.msra.mxu0 0
        %955 = vmatprep.subr.bf16.mxu0 0
        %956 = vmatpush1.bf16.msra.mxu0 0
        %957 = vmatprep.subr.bf16.mxu0 0
        %958 = vmatpush1.bf16.msra.mxu0 0
        %959 = vmatprep.subr.bf16.mxu0 0
        %960 = vmatpush1.bf16.msra.mxu0 0
        %961 = vmatprep.subr.bf16.mxu0 0
        %962 = vmatpush1.bf16.msra.mxu0 0
        %963 = vmatprep.subr.bf16.mxu0 0
        %964 = vmatpush1.bf16.msra.mxu0 0
        %965 = vmatprep.subr.bf16.mxu0 0
        %966 = vmatpush1.bf16.msra.mxu0 0
        %967 = vmatprep.mubr.bf16.mxu0 0
        %968 = vmatmul.mubr.bf16.gmra.mrb[0].mxu0 %v930
        %v969 = vpop.f32.mrb[0].mxu0
        %v970 = vadd.f32 0.0, %v969
        %v971 = vpop.f32.mrb[0].mxu0
        %v972 = vpop.f32.mrb[0].mxu0
        %v973 = vpop.f32.mrb[0].mxu0
        %974 = vdwg.mxu0
        %v976 = vsel %vm503, %v922, 0
        %v979 = vsel %vm739, %v926, 0
        %981 = vmatprep.subr.bf16.mxu0 0
        %982 = vmatpush1.bf16.msra.mxu0 %v979
        %983 = vmatprep.subr.bf16.mxu0 0
        %984 = vmatpush1.bf16.msra.mxu0 0
        %985 = vmatprep.subr.bf16.mxu0 0
        %986 = vmatpush1.bf16.msra.mxu0 0
        %987 = vmatprep.subr.bf16.mxu0 0
        %988 = vmatpush1.bf16.msra.mxu0 0
        %989 = vmatprep.subr.bf16.mxu0 0
        %990 = vmatpush1.bf16.msra.mxu0 0
        %991 = vmatprep.subr.bf16.mxu0 0
        %992 = vmatpush1.bf16.msra.mxu0 0
        %993 = vmatprep.subr.bf16.mxu0 0
        %994 = vmatpush1.bf16.msra.mxu0 0
        %995 = vmatprep.subr.bf16.mxu0 0
        %996 = vmatpush1.bf16.msra.mxu0 0
        %997 = vmatprep.subr.bf16.mxu0 0
        %998 = vmatpush1.bf16.msra.mxu0 0
        %999 = vmatprep.subr.bf16.mxu0 0
        %1000 = vmatpush1.bf16.msra.mxu0 0
        %1001 = vmatprep.subr.bf16.mxu0 0
        %1002 = vmatpush1.bf16.msra.mxu0 0
        %1003 = vmatprep.subr.bf16.mxu0 0
        %1004 = vmatpush1.bf16.msra.mxu0 0
        %1005 = vmatprep.subr.bf16.mxu0 0
        %1006 = vmatpush1.bf16.msra.mxu0 0
        %1007 = vmatprep.subr.bf16.mxu0 0
        %1008 = vmatpush1.bf16.msra.mxu0 0
        %1009 = vmatprep.subr.bf16.mxu0 0
        %1010 = vmatpush1.bf16.msra.mxu0 0
        %1011 = vmatprep.subr.bf16.mxu0 0
        %1012 = vmatpush1.bf16.msra.mxu0 0
        %1013 = vmatprep.mubr.bf16.mxu0 0
        %1014 = vmatmul.mubr.bf16.gmra.mrb[0].mxu0 %v976
        %v1015 = vpop.f32.mrb[0].mxu0
        %v1016 = vadd.f32 0.0, %v1015
        %v1017 = vpop.f32.mrb[0].mxu0
        %v1018 = vpop.f32.mrb[0].mxu0
        %v1019 = vpop.f32.mrb[0].mxu0
        %1020 = vdwg.mxu0
        %v1022 = vsel %vm503, %v923, 0
        %v1025 = vsel %vm739, %v927, 0
        %1027 = vmatprep.subr.bf16.mxu0 0
        %1028 = vmatpush1.bf16.msra.mxu0 %v1025
        %1029 = vmatprep.subr.bf16.mxu0 0
        %1030 = vmatpush1.bf16.msra.mxu0 0
        %1031 = vmatprep.subr.bf16.mxu0 0
        %1032 = vmatpush1.bf16.msra.mxu0 0
        %1033 = vmatprep.subr.bf16.mxu0 0
        %1034 = vmatpush1.bf16.msra.mxu0 0
        %1035 = vmatprep.subr.bf16.mxu0 0
        %1036 = vmatpush1.bf16.msra.mxu0 0
        %1037 = vmatprep.subr.bf16.mxu0 0
        %1038 = vmatpush1.bf16.msra.mxu0 0
        %1039 = vmatprep.subr.bf16.mxu0 0
        %1040 = vmatpush1.bf16.msra.mxu0 0
        %1041 = vmatprep.subr.bf16.mxu0 0
        %1042 = vmatpush1.bf16.msra.mxu0 0
        %1043 = vmatprep.subr.bf16.mxu0 0
        %1044 = vmatpush1.bf16.msra.mxu0 0
        %1045 = vmatprep.subr.bf16.mxu0 0
        %1046 = vmatpush1.bf16.msra.mxu0 0
        %1047 = vmatprep.subr.bf16.mxu0 0
        %1048 = vmatpush1.bf16.msra.mxu0 0
        %1049 = vmatprep.subr.bf16.mxu0 0
        %1050 = vmatpush1.bf16.msra.mxu0 0
        %1051 = vmatprep.subr.bf16.mxu0 0
        %1052 = vmatpush1.bf16.msra.mxu0 0
        %1053 = vmatprep.subr.bf16.mxu0 0
        %1054 = vmatpush1.bf16.msra.mxu0 0
        %1055 = vmatprep.subr.bf16.mxu0 0
        %1056 = vmatpush1.bf16.msra.mxu0 0
        %1057 = vmatprep.subr.bf16.mxu0 0
        %1058 = vmatpush1.bf16.msra.mxu0 0
        %1059 = vmatprep.mubr.bf16.mxu0 0
        %1060 = vmatmul.mubr.bf16.gmra.mrb[0].mxu0 %v1022
        %v1061 = vpop.f32.mrb[0].mxu0
        %v1062 = vadd.f32 0.0, %v1061
        %v1063 = vpop.f32.mrb[0].mxu0
        %v1064 = vpop.f32.mrb[0].mxu0
        %v1065 = vpop.f32.mrb[0].mxu0
        %1066 = vdwg.mxu0
        %v1068 = vsel %vm503, %v924, 0
        %v1071 = vsel %vm739, %v928, 0
        %1073 = vmatprep.subr.bf16.mxu0 0
        %1074 = vmatpush1.bf16.msra.mxu0 %v1071
        %1075 = vmatprep.subr.bf16.mxu0 0
        %1076 = vmatpush1.bf16.msra.mxu0 0
        %1077 = vmatprep.subr.bf16.mxu0 0
        %1078 = vmatpush1.bf16.msra.mxu0 0
        %1079 = vmatprep.subr.bf16.mxu0 0
        %1080 = vmatpush1.bf16.msra.mxu0 0
        %1081 = vmatprep.subr.bf16.mxu0 0
        %1082 = vmatpush1.bf16.msra.mxu0 0
        %1083 = vmatprep.subr.bf16.mxu0 0
        %1084 = vmatpush1.bf16.msra.mxu0 0
        %1085 = vmatprep.subr.bf16.mxu0 0
        %1086 = vmatpush1.bf16.msra.mxu0 0
        %1087 = vmatprep.subr.bf16.mxu0 0
        %1088 = vmatpush1.bf16.msra.mxu0 0
        %1089 = vmatprep.subr.bf16.mxu0 0
        %1090 = vmatpush1.bf16.msra.mxu0 0
        %1091 = vmatprep.subr.bf16.mxu0 0
        %1092 = vmatpush1.bf16.msra.mxu0 0
        %1093 = vmatprep.subr.bf16.mxu0 0
        %1094 = vmatpush1.bf16.msra.mxu0 0
        %1095 = vmatprep.subr.bf16.mxu0 0
        %1096 = vmatpush1.bf16.msra.mxu0 0
        %1097 = vmatprep.subr.bf16.mxu0 0
        %1098 = vmatpush1.bf16.msra.mxu0 0
        %1099 = vmatprep.subr.bf16.mxu0 0
        %1100 = vmatpush1.bf16.msra.mxu0 0
        %1101 = vmatprep.subr.bf16.mxu0 0
        %1102 = vmatpush1.bf16.msra.mxu0 0
        %1103 = vmatprep.subr.bf16.mxu0 0
        %1104 = vmatpush1.bf16.msra.mxu0 0
        %1105 = vmatprep.mubr.bf16.mxu0 0
        %1106 = vmatmul.mubr.bf16.gmra.mrb[0].mxu0 %v1068
        %v1107 = vpop.f32.mrb[0].mxu0
        %v1108 = vadd.f32 0.0, %v1107
        %v1109 = vpop.f32.mrb[0].mxu0
        %v1110 = vpop.f32.mrb[0].mxu0
        %v1111 = vpop.f32.mrb[0].mxu0
        %1112 = vdwg.mxu0
        %vm1113 = vcmask 261120
        %v1114 = vsel %vm1113, %v970, 0.0
        %v1115 = vsel %vm1113, %v1016, 0.0
        %v1116 = vadd.f32 %v1114, %v1115
        %v1117 = vsel %vm1113, %v1062, 0.0
        %v1118 = vadd.f32 %v1116, %v1117
        %v1119 = vsel %vm1113, %v1108, 0.0
        %v1120 = vadd.f32 %v1118, %v1119
        %v1121 = vld [vmem:[#allocation11] sm:$0x1]
        %v1123 = vlaneseq
        %v1124 = vshrl.u32 %v1123, 7
        %v1125 = vsub.s32 0, %v1124
        %v1126 = vrot.slane %v1121, %v1125
        %v1128 = vadd.f32 %v1120, %v1126
        %v1129 = vld [vmem:[%s399] sm:$0xff]
        %v1130 = vadd.f32 %v1129, %v1128
        %v1131 = vsel %vm1113, %v1130, 0.0
        %1132 = vadd.xlane.f32.xlu0 %v1131
        %v1133 = vpop.xlane.xlu0 %1132
        %v1134 = vrcp.pop 32.0
        %v1135 = vmul.f32 %v1133, %v1134
        %v1136 = vsub.f32 %v1130, %v1135
        %v1137 = vmul.f32 %v1136, %v1136
        %v1138 = vsel %vm1113, %v1137, 0.0
        %1139 = vadd.xlane.f32.xlu0 %v1138
        %v1140 = vpop.xlane.xlu0 %1139
        %v1141 = vmul.f32 %v1140, %v1134
        %v1142 = vadd.f32 %v1141, 1e-05
        %v1143 = vrsqrt.pop %v1142
        %v1144 = vmul.f32 %v1136, %v1143
        %v1145 = vld [vmem:[#allocation13] sm:$0x1]
        %v1147 = vlaneseq
        %v1148 = vshrl.u32 %v1147, 7
        %v1149 = vsub.s32 0, %v1148
        %v1150 = vrot.slane %v1145, %v1149
        %v1152 = vmul.f32 %v1144, %v1150
        %v1153 = vld [vmem:[#allocation14] sm:$0x1]
        %v1155 = vlaneseq
        %v1156 = vshrl.u32 %v1155, 7
        %v1157 = vsub.s32 0, %v1156
        %v1158 = vrot.slane %v1153, %v1157
        %v1160 = vadd.f32 %v1152, %v1158
        %1161 = vst.msk [vmem:[%s489] sm:$0xff] %vm1113, %v1160
        %s1162 = sand.u32 %s229, 1
        %s1163 = scalar_lea.sflag [#allocation4], %s1162
        %s1164 = sand.u32 %s229, 1
        %s1165 = smul.addr %s1164, 8
        %s1166 = scalar_lea.vmem [#allocation16], %s1165
        // Predicated region
        $region85: #{encoder_block_forward.4} parent=51 // pred_check
          %p1167 = pneg %p239
        $region86: #{encoder_block_forward.4} parent=51 // pred_check_branch
          %1169 = sbr.rel (%p1167) target = $region88
        $region87: #{encoder_block_forward.4} parent=51 // pred_region
          %s1171 = ssub.s32 128, 128
          %1172 = vsyncadd %s1163, %s1171
          %s1173 = smul.addr %s33, 128
          %s1174 = scalar_lea.hbm %s8, %s1173
          %s1176 = sshll.u32 %s1166, 4
          %s1177 = int_to_ptr.vmem [resolvable:$true] %s1176
          %1179 = dma.vmem_to_hbm [thread:$0]  %s1177, 128, %s1174, %s1163
        $region88: #{encoder_block_forward.4} parent=51 // pred_fallthru
          _
      $region52: #{encoder_block_forward.4} parent=5 // pred_fallthru
        _
      %p1180 = scmp.le.s32.totalorder 2, %s28
      // Predicated region
      $region89: #{encoder_block_forward.4} parent=5 // pred_check
        %p1181 = pneg %p1180
      $region90: #{encoder_block_forward.4} parent=5 // pred_check_branch
        %1183 = sbr.rel (%p1181) target = $region92
      $region91: #{encoder_block_forward.4} parent=5 // pred_region
        %s1184 = ssub.s32 %s28, 2
        // Predicated region
        $region93: #{encoder_block_forward.4} parent=91 // pred_check
          %p1185 = pneg %p245
        $region94: #{encoder_block_forward.4} parent=91 // pred_check_branch
          %1187 = sbr.rel (%p1185) target = $region96
        $region95: #{encoder_block_forward.4} parent=91 // pred_region
          %s1188 = sand.u32 %s230, 1
          %s1189 = scalar_lea.sflag [#allocation4], %s1188
          %s1190 = sand.u32 %s230, 1
          %s1191 = smul.addr %s1190, 8
          %s1192 = scalar_lea.vmem [#allocation16], %s1191
          %1193 = dma.done %s1189, 128
        $region96: #{encoder_block_forward.4} parent=91 // pred_fallthru
          _
      $region92: #{encoder_block_forward.4} parent=5 // pred_fallthru
        _
    $region6: #{encoder_block_forward.4} parent=1 // loop_footer
      %s32 = sadd.s32 1, %s28
    $region7: #{encoder_block_forward.4} parent=1 // loop_footer_branch
      %27 = sbr.rel target = $region3
    $region8: #{encoder_block_forward.4} parent=1 // loop_exit
      _
    %1194 = vsyncpa [#allocation3], 1
    %s1195 = scalar_lea.sflag [#allocation3], 1
    %1196 = vsyncpa %s1195, 1
    %1197 = vsyncpa [#allocation6], 1
    %s1198 = scalar_lea.sflag [#allocation6], 1
    %1199 = vsyncpa %s1198, 1
    %1200 = vsyncpa [#allocation9], 1
    %s1201 = scalar_lea.sflag [#allocation9], 1
    %1202 = vsyncpa %s1201, 1
    %1203 = vsyncpa [#allocation12], 1
    %1204 = vsyncpa [#allocation15], 1
    %1205 = vsyncpa [#allocation4], 1
    %s1206 = scalar_lea.sflag [#allocation4], 1
    %1207 = vsyncpa %s1206, 1

</llo_original>
